<compile_context>
chip_gen: v7x
topology: tpu7x:2x2x1
jax: 0.10.0
libtpu: 0.0.40
codegen_flags: <defaults>
</compile_context>

<pallas_src>
import functools
import numpy as np
import jax
import jax.numpy as jnp
from jax import lax
from jax.experimental import pallas as pl
from jax.experimental.pallas import tpu as pltpu


# --------------------------- in-kernel helpers -------------------------------

def _pointwise_1x1(v, w, b, relu):
    """1x1 conv out[o,p] = sum_i w[o,i]*v[i,p] + b[o] as VPU broadcast FMAs."""
    cin = v.shape[0]
    out = None
    for ci in range(cin):
        term = w[:, ci:ci + 1] * v[ci:ci + 1, :]
        out = term if out is None else out + term
    out = out + b
    if relu:
        out = jnp.maximum(out, 0.0)
    return out


def _dwconv3x3(v, wt, b, mask_ref, width):
    """Depthwise 3x3 conv (zero pad 1) on flattened (C, H*W) via lane rolls."""
    p = v.shape[1]
    out = None
    t = 0
    for dy in (-1, 0, 1):
        for dx in (-1, 0, 1):
            d = dy * width + dx
            shifted = v if d == 0 else pltpu.roll(v, shift=(-d) % p, axis=1)
            term = wt[:, t:t + 1] * (shifted * mask_ref[t])
            out = term if out is None else out + term
            t += 1
    return out + b


# --------------------------- fused Pallas kernel -----------------------------

def _fused_kernel(width, n_members,
                  xw_ref, x_ref, k_ref, ub_ref, pw1_ref, pb1_ref,
                  dw0_ref, db0_ref, sw0_ref, sb0_ref,
                  dw1_ref, db1_ref, sw1_ref, sb1_ref, mask_ref, out_ref):
    x = x_ref[0]                                        # (C, P) lane-dense
    ps = xw_ref.shape[4]

    # ---- PixelUnshuffledDownsampling -----------------------------------
    # MaxPool2d(2) of the pixel-unshuffled input = elementwise max of the 4
    # pooling-window slabs; grouped 3x3 conv + 4x bilinear upsample applied
    # as the pre-folded linear operator K via broadcast FMAs.
    ups = ub_ref[...]                                   # upsampled conv bias (C, P)
    for j in range(n_members):                          # pixel-unshuffle sub-position
        mj = jnp.maximum(
            jnp.maximum(xw_ref[0, 0, j], xw_ref[0, 1, j]),
            jnp.maximum(xw_ref[0, 2, j], xw_ref[0, 3, j]))      # (C, Ps)
        for s in range(ps):                             # downsampled spatial pos
            ups = ups + mj[:, s:s + 1] * k_ref[j, s]            # (C, P) FMA
    y0 = _pointwise_1x1(ups + x, pw1_ref[...], pb1_ref[...], relu=True)

    # ---- SelfResidualDSCResBlock (depth=2) ------------------------------
    d0 = _dwconv3x3(y0, dw0_ref[...], db0_ref[...], mask_ref, width)
    x1 = _pointwise_1x1(y0 + d0, sw0_ref[...], sb0_ref[...], relu=True)
    d1 = _dwconv3x3(x1, dw1_ref[...], db1_ref[...], mask_ref, width)
    y2 = _pointwise_1x1(x1 + d1, sw1_ref[...], sb1_ref[...], relu=False)

    # DSC block residual (y0) + outer PixelUnshuffledBlock residual (x)
    out_ref[0] = y0 + y2 + x


# --------------------------- host-side constants -----------------------------

def _bilinear_matrix(in_size, out_size):
    """PyTorch Upsample(mode='bilinear', align_corners=False) 1-D weights."""
    scale = in_size / out_size
    m = np.zeros((out_size, in_size), dtype=np.float32)
    for o in range(out_size):
        src = max((o + 0.5) * scale - 0.5, 0.0)
        i0 = min(int(np.floor(src)), in_size - 1)
        i1 = min(i0 + 1, in_size - 1)
        frac = src - i0
        m[o, i0] += 1.0 - frac
        m[o, i1] += frac
    return m


def make_upsample_matrix(hq, wq, h, w):
    """(Ps, P): U[q, p] = bilinear weight of small-grid pixel q for output pixel p."""
    uh = _bilinear_matrix(hq, h)   # (h, hq)
    uw = _bilinear_matrix(wq, w)   # (w, wq)
    return np.einsum("mh,kw->hwmk", uh, uw).reshape(hq * wq, h * w).astype(np.float32)


def make_shift_mask_matrices(hd, wd):
    """S[t, s, q] = 1 iff 3x3 tap t at output pixel q reads input pixel s (zero-pad)."""
    pd = hd * wd
    S = np.zeros((9, pd, pd), np.float32)
    t = 0
    for dy in (-1, 0, 1):
        for dx in (-1, 0, 1):
            for hh in range(hd):
                for ww in range(wd):
                    hs, ws = hh + dy, ww + dx
                    if 0 <= hs < hd and 0 <= ws < wd:
                        S[t, hs * wd + ws, hh * wd + ww] = 1.0
            t += 1
    return S


def make_tap_masks(h, w):
    """(9, 1, P) validity masks for the 3x3 taps on the flattened full-res grid."""
    p = h * w
    hh, ww = np.divmod(np.arange(p), w)
    masks = np.zeros((9, 1, p), np.float32)
    t = 0
    for dy in (-1, 0, 1):
        for dx in (-1, 0, 1):
            ok = (hh + dy >= 0) & (hh + dy < h) & (ww + dx >= 0) & (ww + dx < w)
            masks[t, 0] = ok.astype(np.float32)
            t += 1
    return masks


def make_consts(h, w):
    hq, wq = h // 4, w // 4
    U = make_upsample_matrix(hq, wq, h, w)                 # (Ps, P)
    S = make_shift_mask_matrices(hq, wq)                   # (9, Ps, Ps)
    SU = np.einsum("tsq,qp->tsp", S, U)                    # (9, Ps, P)
    return {
        "SU": jnp.asarray(SU),
        "usum": jnp.asarray(U.sum(axis=0)),                # (P,)
        "masks": jnp.asarray(make_tap_masks(h, w)),        # (9, 1, P)
        "U": jnp.asarray(U),                               # for the pure-JAX reference
    }


# ------------------------------ full forward ---------------------------------

def pixel_unshuffled_block_forward(x, params, consts):
    N, C, H, W = x.shape
    Hq, Wq = H // 4, W // 4
    P, Ps = H * W, Hq * Wq

    # Layout-only prep (no compute amplification): pixel-unshuffle + 2x2 pool
    # windows laid out as (N, window, sub-position, C, Ps).
    xw = (x.reshape(N, C, Hq, 2, 2, Wq, 2, 2)
            .transpose(0, 3, 6, 4, 7, 1, 2, 5)
            .reshape(N, 4, 4, C, Ps))
    x_flat = x.reshape(N, C, P)

    # Fold grouped-3x3-conv + bilinear-upsample weights into one operator.
    gw3 = params["g_w"].reshape(C, 4, 9)
    K = jnp.einsum("cjt,tsp->jscp", gw3, consts["SU"])      # (4, Ps, C, P)
    ub = params["g_b"][:, None] * consts["usum"][None, :]   # (C, P)

    kern = functools.partial(_fused_kernel, W, 4)

    flops = int(N * (2 * 4 * Ps * C * P + 3 * 2 * C * C * P + 2 * 9 * 3 * C * P))
    bytes_accessed = int(4 * (3 * N * C * P + 4 * Ps * C * P + 9 * P + 8 * C * P))

    out = pl.pallas_call(
        kern,
        grid=(N,),
        in_specs=[
            pl.BlockSpec((1, 4, 4, C, Ps), lambda n: (n, 0, 0, 0, 0)),
            pl.BlockSpec((1, C, P), lambda n: (n, 0, 0)),
            pl.BlockSpec((4, Ps, C, P), lambda n: (0, 0, 0, 0)),
            pl.BlockSpec((C, P), lambda n: (0, 0)),
            pl.BlockSpec((C, C), lambda n: (0, 0)),
            pl.BlockSpec((C, 1), lambda n: (0, 0)),
            pl.BlockSpec((C, 9), lambda n: (0, 0)),
            pl.BlockSpec((C, 1), lambda n: (0, 0)),
            pl.BlockSpec((C, C), lambda n: (0, 0)),
            pl.BlockSpec((C, 1), lambda n: (0, 0)),
            pl.BlockSpec((C, 9), lambda n: (0, 0)),
            pl.BlockSpec((C, 1), lambda n: (0, 0)),
            pl.BlockSpec((C, C), lambda n: (0, 0)),
            pl.BlockSpec((C, 1), lambda n: (0, 0)),
            pl.BlockSpec((9, 1, P), lambda n: (0, 0, 0)),
        ],
        out_specs=pl.BlockSpec((1, C, P), lambda n: (n, 0, 0)),
        out_shape=jax.ShapeDtypeStruct((N, C, P), jnp.float32),
        compiler_params=pltpu.CompilerParams(dimension_semantics=("parallel",)),
        cost_estimate=pl.CostEstimate(flops=flops, transcendentals=0,
                                      bytes_accessed=bytes_accessed),
    )(
        xw, x_flat, K, ub,
        params["pw1_w"], params["pw1_b"][:, None],
        params["dw0"].reshape(C, 9), params["db0"][:, None],
        params["spw0"], params["spb0"][:, None],
        params["dw1"].reshape(C, 9), params["db1"][:, None],
        params["spw1"], params["spb1"][:, None],
        consts["masks"],
    )
    return out.reshape(N, C, H, W)


# --------------------------- pure-JAX reference -------------------------------

def _pixel_unshuffle(x, r):
    N, C, H, W = x.shape
    x = x.reshape(N, C, H // r, r, W // r, r).transpose(0, 1, 3, 5, 2, 4)
    return x.reshape(N, C * r * r, H // r, W // r)


def _conv(x, w, b, groups=1, padding=0):
    out = lax.conv_general_dilated(
        x, w, (1, 1), [(padding, padding), (padding, padding)],
        dimension_numbers=("NCHW", "OIHW", "NCHW"), feature_group_count=groups)
    return out + b[None, :, None, None]


def reference_forward(x, params, consts):
    N, C, H, W = x.shape
    r = 2
    xu = _pixel_unshuffle(x, r)
    m = lax.reduce_window(xu, -jnp.inf, lax.max, (1, 1, r, r), (1, 1, r, r), "VALID")
    g = _conv(m, params["g_w"], params["g_b"], groups=C, padding=1)
    ups = (g.reshape(N, C, -1) @ consts["U"]).reshape(N, C, H, W)
    y = _conv(ups + x, params["pw1_w"][:, :, None, None], params["pw1_b"])
    y = jnp.maximum(y, 0.0)
    inp = y
    t = y
    for i in range(2):
        d = _conv(t, params[f"dw{i}"][:, None, :, :], params[f"db{i}"], groups=C, padding=1)
        t = _conv(t + d, params[f"spw{i}"][:, :, None, None], params[f"spb{i}"])
        if i == 0:
            t = jnp.maximum(t, 0.0)
    return inp + t + x


# ---------------------------------- main --------------------------------------

def init_params(key, C):
    ks = jax.random.split(key, 12)
    rnd = lambda i, shape, s: s * jax.random.normal(ks[i], shape, jnp.float32)
    return {
        "g_w": rnd(0, (C, 4, 3, 3), 0.2),   "g_b": rnd(1, (C,), 0.1),
        "pw1_w": rnd(2, (C, C), 0.3),       "pw1_b": rnd(3, (C,), 0.1),
        "dw0": rnd(4, (C, 3, 3), 0.2),      "db0": rnd(5, (C,), 0.1),
        "spw0": rnd(6, (C, C), 0.3),        "spb0": rnd(7, (C,), 0.1),
        "dw1": rnd(8, (C, 3, 3), 0.2),      "db1": rnd(9, (C,), 0.1),
        "spw1": rnd(10, (C, C), 0.3),       "spb1": rnd(11, (C,), 0.1),
    }


if __name__ == "__main__":
    N, C, H, W = 2, 4, 16, 16      # in_channels == out_channels == 4, scale_factor=2
    key = jax.random.PRNGKey(0)
    kx, kp = jax.random.split(key)
    x = jax.random.normal(kx, (N, C, H, W), jnp.float32)
    params = init_params(kp, C)
    consts = make_consts(H, W)

    fwd = jax.jit(pixel_unshuffled_block_forward)
    out = jax.block_until_ready(fwd(x, params, consts))

    ref = reference_forward(x, params, consts)
    assert out.shape == (N, C, H, W)
    max_err = float(jnp.max(jnp.abs(out - ref)))
    assert bool(jnp.allclose(out, ref, atol=1e-3, rtol=1e-3)), f"max_err={max_err}"
    print("KERNEL_OK")
</pallas_src>

<mosaic_0001>
module attributes {stable_mosaic.version = 11 : i64} {
  func.func @_fused_kernel(%arg0: i32, %arg1: memref<1x4x4x4x16xf32, #tpu.memory_space<vmem>>, %arg2: memref<1x4x256xf32, #tpu.memory_space<vmem>>, %arg3: memref<4x16x4x256xf32, #tpu.memory_space<vmem>>, %arg4: memref<4x256xf32, #tpu.memory_space<vmem>>, %arg5: memref<4x4xf32, #tpu.memory_space<vmem>>, %arg6: memref<4x1xf32, #tpu.memory_space<vmem>>, %arg7: memref<4x9xf32, #tpu.memory_space<vmem>>, %arg8: memref<4x1xf32, #tpu.memory_space<vmem>>, %arg9: memref<4x4xf32, #tpu.memory_space<vmem>>, %arg10: memref<4x1xf32, #tpu.memory_space<vmem>>, %arg11: memref<4x9xf32, #tpu.memory_space<vmem>>, %arg12: memref<4x1xf32, #tpu.memory_space<vmem>>, %arg13: memref<4x4xf32, #tpu.memory_space<vmem>>, %arg14: memref<4x1xf32, #tpu.memory_space<vmem>>, %arg15: memref<9x1x256xf32, #tpu.memory_space<vmem>>, %arg16: memref<1x4x256xf32, #tpu.memory_space<vmem>>) attributes {dimension_semantics = [#tpu.dimension_semantics<parallel>], iteration_bounds = array<i64: 2>, scalar_prefetch = 0 : i64, scratch_operands = 0 : i64, tpu.core_type = #tpu.core_type<tc>, window_params = [{transform_indices = @transform_0, window_bounds = array<i64: 1, 4, 4, 4, 16>}, {transform_indices = @transform_1, window_bounds = array<i64: 1, 4, 256>}, {pipeline_mode = #tpu.pipeline_mode<synchronous>, transform_indices = @transform_2, window_bounds = array<i64: 4, 16, 4, 256>}, {pipeline_mode = #tpu.pipeline_mode<synchronous>, transform_indices = @transform_3, window_bounds = array<i64: 4, 256>}, {pipeline_mode = #tpu.pipeline_mode<synchronous>, transform_indices = @transform_4, window_bounds = array<i64: 4, 4>}, {pipeline_mode = #tpu.pipeline_mode<synchronous>, transform_indices = @transform_5, window_bounds = array<i64: 4, 1>}, {pipeline_mode = #tpu.pipeline_mode<synchronous>, transform_indices = @transform_6, window_bounds = array<i64: 4, 9>}, {pipeline_mode = #tpu.pipeline_mode<synchronous>, transform_indices = @transform_7, window_bounds = array<i64: 4, 1>}, {pipeline_mode = #tpu.pipeline_mode<synchronous>, transform_indices = @transform_8, window_bounds = array<i64: 4, 4>}, {pipeline_mode = #tpu.pipeline_mode<synchronous>, transform_indices = @transform_9, window_bounds = array<i64: 4, 1>}, {pipeline_mode = #tpu.pipeline_mode<synchronous>, transform_indices = @transform_10, window_bounds = array<i64: 4, 9>}, {pipeline_mode = #tpu.pipeline_mode<synchronous>, transform_indices = @transform_11, window_bounds = array<i64: 4, 1>}, {pipeline_mode = #tpu.pipeline_mode<synchronous>, transform_indices = @transform_12, window_bounds = array<i64: 4, 4>}, {pipeline_mode = #tpu.pipeline_mode<synchronous>, transform_indices = @transform_13, window_bounds = array<i64: 4, 1>}, {pipeline_mode = #tpu.pipeline_mode<synchronous>, transform_indices = @transform_14, window_bounds = array<i64: 9, 1, 256>}, {transform_indices = @transform_15, window_bounds = array<i64: 1, 4, 256>}]} {
    %c0 = arith.constant 0 : index
    %c0_0 = arith.constant 0 : index
    %c0_1 = arith.constant 0 : index
    %0 = vector.load %arg2[%c0, %c0_0, %c0_1] : memref<1x4x256xf32, #tpu.memory_space<vmem>>, vector<1x4x256xf32>
    %1 = vector.shape_cast %0 : vector<1x4x256xf32> to vector<4x256xf32>
    %c0_2 = arith.constant 0 : index
    %c0_3 = arith.constant 0 : index
    %2 = vector.load %arg4[%c0_2, %c0_3] : memref<4x256xf32, #tpu.memory_space<vmem>>, vector<4x256xf32>
    %c0_4 = arith.constant 0 : index
    %c0_5 = arith.constant 0 : index
    %c0_6 = arith.constant 0 : index
    %c0_7 = arith.constant 0 : index
    %c0_8 = arith.constant 0 : index
    %3 = vector.load %arg1[%c0_4, %c0_5, %c0_6, %c0_7, %c0_8] : memref<1x4x4x4x16xf32, #tpu.memory_space<vmem>>, vector<1x1x1x4x16xf32>
    %4 = vector.shape_cast %3 : vector<1x1x1x4x16xf32> to vector<4x16xf32>
    %c0_9 = arith.constant 0 : index
    %c1 = arith.constant 1 : index
    %c0_10 = arith.constant 0 : index
    %c0_11 = arith.constant 0 : index
    %c0_12 = arith.constant 0 : index
    %5 = vector.load %arg1[%c0_9, %c1, %c0_10, %c0_11, %c0_12] : memref<1x4x4x4x16xf32, #tpu.memory_space<vmem>>, vector<1x1x1x4x16xf32>
    %6 = vector.shape_cast %5 : vector<1x1x1x4x16xf32> to vector<4x16xf32>
    %7 = arith.maximumf %4, %6 : vector<4x16xf32>
    %c0_13 = arith.constant 0 : index
    %c2 = arith.constant 2 : index
    %c0_14 = arith.constant 0 : index
    %c0_15 = arith.constant 0 : index
    %c0_16 = arith.constant 0 : index
    %8 = vector.load %arg1[%c0_13, %c2, %c0_14, %c0_15, %c0_16] : memref<1x4x4x4x16xf32, #tpu.memory_space<vmem>>, vector<1x1x1x4x16xf32>
    %9 = vector.shape_cast %8 : vector<1x1x1x4x16xf32> to vector<4x16xf32>
    %c0_17 = arith.constant 0 : index
    %c3 = arith.constant 3 : index
    %c0_18 = arith.constant 0 : index
    %c0_19 = arith.constant 0 : index
    %c0_20 = arith.constant 0 : index
    %10 = vector.load %arg1[%c0_17, %c3, %c0_18, %c0_19, %c0_20] : memref<1x4x4x4x16xf32, #tpu.memory_space<vmem>>, vector<1x1x1x4x16xf32>
    %11 = vector.shape_cast %10 : vector<1x1x1x4x16xf32> to vector<4x16xf32>
    %12 = arith.maximumf %9, %11 : vector<4x16xf32>
    %13 = arith.maximumf %7, %12 : vector<4x16xf32>
    %14 = vector.extract_strided_slice %13 {offsets = [0, 0], sizes = [4, 1], strides = [1, 1]} : vector<4x16xf32> to vector<4x1xf32>
    %c0_21 = arith.constant 0 : index
    %c0_22 = arith.constant 0 : index
    %c0_23 = arith.constant 0 : index
    %c0_24 = arith.constant 0 : index
    %15 = vector.load %arg3[%c0_21, %c0_22, %c0_23, %c0_24] : memref<4x16x4x256xf32, #tpu.memory_space<vmem>>, vector<1x1x4x256xf32>
    %16 = vector.shape_cast %15 : vector<1x1x4x256xf32> to vector<4x256xf32>
    %17 = vector.broadcast %14 : vector<4x1xf32> to vector<4x256xf32>
    %18 = arith.mulf %17, %16 : vector<4x256xf32>
    %19 = arith.addf %2, %18 : vector<4x256xf32>
    %20 = vector.extract_strided_slice %13 {offsets = [0, 1], sizes = [4, 1], strides = [1, 1]} : vector<4x16xf32> to vector<4x1xf32>
    %c0_25 = arith.constant 0 : index
    %c1_26 = arith.constant 1 : index
    %c0_27 = arith.constant 0 : index
    %c0_28 = arith.constant 0 : index
    %21 = vector.load %arg3[%c0_25, %c1_26, %c0_27, %c0_28] : memref<4x16x4x256xf32, #tpu.memory_space<vmem>>, vector<1x1x4x256xf32>
    %22 = vector.shape_cast %21 : vector<1x1x4x256xf32> to vector<4x256xf32>
    %23 = vector.broadcast %20 : vector<4x1xf32> to vector<4x256xf32>
    %24 = arith.mulf %23, %22 : vector<4x256xf32>
    %25 = arith.addf %19, %24 : vector<4x256xf32>
    %26 = vector.extract_strided_slice %13 {offsets = [0, 2], sizes = [4, 1], strides = [1, 1]} : vector<4x16xf32> to vector<4x1xf32>
    %c0_29 = arith.constant 0 : index
    %c2_30 = arith.constant 2 : index
    %c0_31 = arith.constant 0 : index
    %c0_32 = arith.constant 0 : index
    %27 = vector.load %arg3[%c0_29, %c2_30, %c0_31, %c0_32] : memref<4x16x4x256xf32, #tpu.memory_space<vmem>>, vector<1x1x4x256xf32>
    %28 = vector.shape_cast %27 : vector<1x1x4x256xf32> to vector<4x256xf32>
    %29 = vector.broadcast %26 : vector<4x1xf32> to vector<4x256xf32>
    %30 = arith.mulf %29, %28 : vector<4x256xf32>
    %31 = arith.addf %25, %30 : vector<4x256xf32>
    %32 = vector.extract_strided_slice %13 {offsets = [0, 3], sizes = [4, 1], strides = [1, 1]} : vector<4x16xf32> to vector<4x1xf32>
    %c0_33 = arith.constant 0 : index
    %c3_34 = arith.constant 3 : index
    %c0_35 = arith.constant 0 : index
    %c0_36 = arith.constant 0 : index
    %33 = vector.load %arg3[%c0_33, %c3_34, %c0_35, %c0_36] : memref<4x16x4x256xf32, #tpu.memory_space<vmem>>, vector<1x1x4x256xf32>
    %34 = vector.shape_cast %33 : vector<1x1x4x256xf32> to vector<4x256xf32>
    %35 = vector.broadcast %32 : vector<4x1xf32> to vector<4x256xf32>
    %36 = arith.mulf %35, %34 : vector<4x256xf32>
    %37 = arith.addf %31, %36 : vector<4x256xf32>
    %38 = vector.extract_strided_slice %13 {offsets = [0, 4], sizes = [4, 1], strides = [1, 1]} : vector<4x16xf32> to vector<4x1xf32>
    %c0_37 = arith.constant 0 : index
    %c4 = arith.constant 4 : index
    %c0_38 = arith.constant 0 : index
    %c0_39 = arith.constant 0 : index
    %39 = vector.load %arg3[%c0_37, %c4, %c0_38, %c0_39] : memref<4x16x4x256xf32, #tpu.memory_space<vmem>>, vector<1x1x4x256xf32>
    %40 = vector.shape_cast %39 : vector<1x1x4x256xf32> to vector<4x256xf32>
    %41 = vector.broadcast %38 : vector<4x1xf32> to vector<4x256xf32>
    %42 = arith.mulf %41, %40 : vector<4x256xf32>
    %43 = arith.addf %37, %42 : vector<4x256xf32>
    %44 = vector.extract_strided_slice %13 {offsets = [0, 5], sizes = [4, 1], strides = [1, 1]} : vector<4x16xf32> to vector<4x1xf32>
    %c0_40 = arith.constant 0 : index
    %c5 = arith.constant 5 : index
    %c0_41 = arith.constant 0 : index
    %c0_42 = arith.constant 0 : index
    %45 = vector.load %arg3[%c0_40, %c5, %c0_41, %c0_42] : memref<4x16x4x256xf32, #tpu.memory_space<vmem>>, vector<1x1x4x256xf32>
    %46 = vector.shape_cast %45 : vector<1x1x4x256xf32> to vector<4x256xf32>
    %47 = vector.broadcast %44 : vector<4x1xf32> to vector<4x256xf32>
    %48 = arith.mulf %47, %46 : vector<4x256xf32>
    %49 = arith.addf %43, %48 : vector<4x256xf32>
    %50 = vector.extract_strided_slice %13 {offsets = [0, 6], sizes = [4, 1], strides = [1, 1]} : vector<4x16xf32> to vector<4x1xf32>
    %c0_43 = arith.constant 0 : index
    %c6 = arith.constant 6 : index
    %c0_44 = arith.constant 0 : index
    %c0_45 = arith.constant 0 : index
    %51 = vector.load %arg3[%c0_43, %c6, %c0_44, %c0_45] : memref<4x16x4x256xf32, #tpu.memory_space<vmem>>, vector<1x1x4x256xf32>
    %52 = vector.shape_cast %51 : vector<1x1x4x256xf32> to vector<4x256xf32>
    %53 = vector.broadcast %50 : vector<4x1xf32> to vector<4x256xf32>
    %54 = arith.mulf %53, %52 : vector<4x256xf32>
    %55 = arith.addf %49, %54 : vector<4x256xf32>
    %56 = vector.extract_strided_slice %13 {offsets = [0, 7], sizes = [4, 1], strides = [1, 1]} : vector<4x16xf32> to vector<4x1xf32>
    %c0_46 = arith.constant 0 : index
    %c7 = arith.constant 7 : index
    %c0_47 = arith.constant 0 : index
    %c0_48 = arith.constant 0 : index
    %57 = vector.load %arg3[%c0_46, %c7, %c0_47, %c0_48] : memref<4x16x4x256xf32, #tpu.memory_space<vmem>>, vector<1x1x4x256xf32>
    %58 = vector.shape_cast %57 : vector<1x1x4x256xf32> to vector<4x256xf32>
    %59 = vector.broadcast %56 : vector<4x1xf32> to vector<4x256xf32>
    %60 = arith.mulf %59, %58 : vector<4x256xf32>
    %61 = arith.addf %55, %60 : vector<4x256xf32>
    %62 = vector.extract_strided_slice %13 {offsets = [0, 8], sizes = [4, 1], strides = [1, 1]} : vector<4x16xf32> to vector<4x1xf32>
    %c0_49 = arith.constant 0 : index
    %c8 = arith.constant 8 : index
    %c0_50 = arith.constant 0 : index
    %c0_51 = arith.constant 0 : index
    %63 = vector.load %arg3[%c0_49, %c8, %c0_50, %c0_51] : memref<4x16x4x256xf32, #tpu.memory_space<vmem>>, vector<1x1x4x256xf32>
    %64 = vector.shape_cast %63 : vector<1x1x4x256xf32> to vector<4x256xf32>
    %65 = vector.broadcast %62 : vector<4x1xf32> to vector<4x256xf32>
    %66 = arith.mulf %65, %64 : vector<4x256xf32>
    %67 = arith.addf %61, %66 : vector<4x256xf32>
    %68 = vector.extract_strided_slice %13 {offsets = [0, 9], sizes = [4, 1], strides = [1, 1]} : vector<4x16xf32> to vector<4x1xf32>
    %c0_52 = arith.constant 0 : index
    %c9 = arith.constant 9 : index
    %c0_53 = arith.constant 0 : index
    %c0_54 = arith.constant 0 : index
    %69 = vector.load %arg3[%c0_52, %c9, %c0_53, %c0_54] : memref<4x16x4x256xf32, #tpu.memory_space<vmem>>, vector<1x1x4x256xf32>
    %70 = vector.shape_cast %69 : vector<1x1x4x256xf32> to vector<4x256xf32>
    %71 = vector.broadcast %68 : vector<4x1xf32> to vector<4x256xf32>
    %72 = arith.mulf %71, %70 : vector<4x256xf32>
    %73 = arith.addf %67, %72 : vector<4x256xf32>
    %74 = vector.extract_strided_slice %13 {offsets = [0, 10], sizes = [4, 1], strides = [1, 1]} : vector<4x16xf32> to vector<4x1xf32>
    %c0_55 = arith.constant 0 : index
    %c10 = arith.constant 10 : index
    %c0_56 = arith.constant 0 : index
    %c0_57 = arith.constant 0 : index
    %75 = vector.load %arg3[%c0_55, %c10, %c0_56, %c0_57] : memref<4x16x4x256xf32, #tpu.memory_space<vmem>>, vector<1x1x4x256xf32>
    %76 = vector.shape_cast %75 : vector<1x1x4x256xf32> to vector<4x256xf32>
    %77 = vector.broadcast %74 : vector<4x1xf32> to vector<4x256xf32>
    %78 = arith.mulf %77, %76 : vector<4x256xf32>
    %79 = arith.addf %73, %78 : vector<4x256xf32>
    %80 = vector.extract_strided_slice %13 {offsets = [0, 11], sizes = [4, 1], strides = [1, 1]} : vector<4x16xf32> to vector<4x1xf32>
    %c0_58 = arith.constant 0 : index
    %c11 = arith.constant 11 : index
    %c0_59 = arith.constant 0 : index
    %c0_60 = arith.constant 0 : index
    %81 = vector.load %arg3[%c0_58, %c11, %c0_59, %c0_60] : memref<4x16x4x256xf32, #tpu.memory_space<vmem>>, vector<1x1x4x256xf32>
    %82 = vector.shape_cast %81 : vector<1x1x4x256xf32> to vector<4x256xf32>
    %83 = vector.broadcast %80 : vector<4x1xf32> to vector<4x256xf32>
    %84 = arith.mulf %83, %82 : vector<4x256xf32>
    %85 = arith.addf %79, %84 : vector<4x256xf32>
    %86 = vector.extract_strided_slice %13 {offsets = [0, 12], sizes = [4, 1], strides = [1, 1]} : vector<4x16xf32> to vector<4x1xf32>
    %c0_61 = arith.constant 0 : index
    %c12 = arith.constant 12 : index
    %c0_62 = arith.constant 0 : index
    %c0_63 = arith.constant 0 : index
    %87 = vector.load %arg3[%c0_61, %c12, %c0_62, %c0_63] : memref<4x16x4x256xf32, #tpu.memory_space<vmem>>, vector<1x1x4x256xf32>
    %88 = vector.shape_cast %87 : vector<1x1x4x256xf32> to vector<4x256xf32>
    %89 = vector.broadcast %86 : vector<4x1xf32> to vector<4x256xf32>
    %90 = arith.mulf %89, %88 : vector<4x256xf32>
    %91 = arith.addf %85, %90 : vector<4x256xf32>
    %92 = vector.extract_strided_slice %13 {offsets = [0, 13], sizes = [4, 1], strides = [1, 1]} : vector<4x16xf32> to vector<4x1xf32>
    %c0_64 = arith.constant 0 : index
    %c13 = arith.constant 13 : index
    %c0_65 = arith.constant 0 : index
    %c0_66 = arith.constant 0 : index
    %93 = vector.load %arg3[%c0_64, %c13, %c0_65, %c0_66] : memref<4x16x4x256xf32, #tpu.memory_space<vmem>>, vector<1x1x4x256xf32>
    %94 = vector.shape_cast %93 : vector<1x1x4x256xf32> to vector<4x256xf32>
    %95 = vector.broadcast %92 : vector<4x1xf32> to vector<4x256xf32>
    %96 = arith.mulf %95, %94 : vector<4x256xf32>
    %97 = arith.addf %91, %96 : vector<4x256xf32>
    %98 = vector.extract_strided_slice %13 {offsets = [0, 14], sizes = [4, 1], strides = [1, 1]} : vector<4x16xf32> to vector<4x1xf32>
    %c0_67 = arith.constant 0 : index
    %c14 = arith.constant 14 : index
    %c0_68 = arith.constant 0 : index
    %c0_69 = arith.constant 0 : index
    %99 = vector.load %arg3[%c0_67, %c14, %c0_68, %c0_69] : memref<4x16x4x256xf32, #tpu.memory_space<vmem>>, vector<1x1x4x256xf32>
    %100 = vector.shape_cast %99 : vector<1x1x4x256xf32> to vector<4x256xf32>
    %101 = vector.broadcast %98 : vector<4x1xf32> to vector<4x256xf32>
    %102 = arith.mulf %101, %100 : vector<4x256xf32>
    %103 = arith.addf %97, %102 : vector<4x256xf32>
    %104 = vector.extract_strided_slice %13 {offsets = [0, 15], sizes = [4, 1], strides = [1, 1]} : vector<4x16xf32> to vector<4x1xf32>
    %c0_70 = arith.constant 0 : index
    %c15 = arith.constant 15 : index
    %c0_71 = arith.constant 0 : index
    %c0_72 = arith.constant 0 : index
    %105 = vector.load %arg3[%c0_70, %c15, %c0_71, %c0_72] : memref<4x16x4x256xf32, #tpu.memory_space<vmem>>, vector<1x1x4x256xf32>
    %106 = vector.shape_cast %105 : vector<1x1x4x256xf32> to vector<4x256xf32>
    %107 = vector.broadcast %104 : vector<4x1xf32> to vector<4x256xf32>
    %108 = arith.mulf %107, %106 : vector<4x256xf32>
    %109 = arith.addf %103, %108 : vector<4x256xf32>
    %c0_73 = arith.constant 0 : index
    %c0_74 = arith.constant 0 : index
    %c1_75 = arith.constant 1 : index
    %c0_76 = arith.constant 0 : index
    %c0_77 = arith.constant 0 : index
    %110 = vector.load %arg1[%c0_73, %c0_74, %c1_75, %c0_76, %c0_77] : memref<1x4x4x4x16xf32, #tpu.memory_space<vmem>>, vector<1x1x1x4x16xf32>
    %111 = vector.shape_cast %110 : vector<1x1x1x4x16xf32> to vector<4x16xf32>
    %c0_78 = arith.constant 0 : index
    %c1_79 = arith.constant 1 : index
    %c1_80 = arith.constant 1 : index
    %c0_81 = arith.constant 0 : index
    %c0_82 = arith.constant 0 : index
    %112 = vector.load %arg1[%c0_78, %c1_79, %c1_80, %c0_81, %c0_82] : memref<1x4x4x4x16xf32, #tpu.memory_space<vmem>>, vector<1x1x1x4x16xf32>
    %113 = vector.shape_cast %112 : vector<1x1x1x4x16xf32> to vector<4x16xf32>
    %114 = arith.maximumf %111, %113 : vector<4x16xf32>
    %c0_83 = arith.constant 0 : index
    %c2_84 = arith.constant 2 : index
    %c1_85 = arith.constant 1 : index
    %c0_86 = arith.constant 0 : index
    %c0_87 = arith.constant 0 : index
    %115 = vector.load %arg1[%c0_83, %c2_84, %c1_85, %c0_86, %c0_87] : memref<1x4x4x4x16xf32, #tpu.memory_space<vmem>>, vector<1x1x1x4x16xf32>
    %116 = vector.shape_cast %115 : vector<1x1x1x4x16xf32> to vector<4x16xf32>
    %c0_88 = arith.constant 0 : index
    %c3_89 = arith.constant 3 : index
    %c1_90 = arith.constant 1 : index
    %c0_91 = arith.constant 0 : index
    %c0_92 = arith.constant 0 : index
    %117 = vector.load %arg1[%c0_88, %c3_89, %c1_90, %c0_91, %c0_92] : memref<1x4x4x4x16xf32, #tpu.memory_space<vmem>>, vector<1x1x1x4x16xf32>
    %118 = vector.shape_cast %117 : vector<1x1x1x4x16xf32> to vector<4x16xf32>
    %119 = arith.maximumf %116, %118 : vector<4x16xf32>
    %120 = arith.maximumf %114, %119 : vector<4x16xf32>
    %121 = vector.extract_strided_slice %120 {offsets = [0, 0], sizes = [4, 1], strides = [1, 1]} : vector<4x16xf32> to vector<4x1xf32>
    %c1_93 = arith.constant 1 : index
    %c0_94 = arith.constant 0 : index
    %c0_95 = arith.constant 0 : index
    %c0_96 = arith.constant 0 : index
    %122 = vector.load %arg3[%c1_93, %c0_94, %c0_95, %c0_96] : memref<4x16x4x256xf32, #tpu.memory_space<vmem>>, vector<1x1x4x256xf32>
    %123 = vector.shape_cast %122 : vector<1x1x4x256xf32> to vector<4x256xf32>
    %124 = vector.broadcast %121 : vector<4x1xf32> to vector<4x256xf32>
    %125 = arith.mulf %124, %123 : vector<4x256xf32>
    %126 = arith.addf %109, %125 : vector<4x256xf32>
    %127 = vector.extract_strided_slice %120 {offsets = [0, 1], sizes = [4, 1], strides = [1, 1]} : vector<4x16xf32> to vector<4x1xf32>
    %c1_97 = arith.constant 1 : index
    %c1_98 = arith.constant 1 : index
    %c0_99 = arith.constant 0 : index
    %c0_100 = arith.constant 0 : index
    %128 = vector.load %arg3[%c1_97, %c1_98, %c0_99, %c0_100] : memref<4x16x4x256xf32, #tpu.memory_space<vmem>>, vector<1x1x4x256xf32>
    %129 = vector.shape_cast %128 : vector<1x1x4x256xf32> to vector<4x256xf32>
    %130 = vector.broadcast %127 : vector<4x1xf32> to vector<4x256xf32>
    %131 = arith.mulf %130, %129 : vector<4x256xf32>
    %132 = arith.addf %126, %131 : vector<4x256xf32>
    %133 = vector.extract_strided_slice %120 {offsets = [0, 2], sizes = [4, 1], strides = [1, 1]} : vector<4x16xf32> to vector<4x1xf32>
    %c1_101 = arith.constant 1 : index
    %c2_102 = arith.constant 2 : index
    %c0_103 = arith.constant 0 : index
    %c0_104 = arith.constant 0 : index
    %134 = vector.load %arg3[%c1_101, %c2_102, %c0_103, %c0_104] : memref<4x16x4x256xf32, #tpu.memory_space<vmem>>, vector<1x1x4x256xf32>
    %135 = vector.shape_cast %134 : vector<1x1x4x256xf32> to vector<4x256xf32>
    %136 = vector.broadcast %133 : vector<4x1xf32> to vector<4x256xf32>
    %137 = arith.mulf %136, %135 : vector<4x256xf32>
    %138 = arith.addf %132, %137 : vector<4x256xf32>
    %139 = vector.extract_strided_slice %120 {offsets = [0, 3], sizes = [4, 1], strides = [1, 1]} : vector<4x16xf32> to vector<4x1xf32>
    %c1_105 = arith.constant 1 : index
    %c3_106 = arith.constant 3 : index
    %c0_107 = arith.constant 0 : index
    %c0_108 = arith.constant 0 : index
    %140 = vector.load %arg3[%c1_105, %c3_106, %c0_107, %c0_108] : memref<4x16x4x256xf32, #tpu.memory_space<vmem>>, vector<1x1x4x256xf32>
    %141 = vector.shape_cast %140 : vector<1x1x4x256xf32> to vector<4x256xf32>
    %142 = vector.broadcast %139 : vector<4x1xf32> to vector<4x256xf32>
    %143 = arith.mulf %142, %141 : vector<4x256xf32>
    %144 = arith.addf %138, %143 : vector<4x256xf32>
    %145 = vector.extract_strided_slice %120 {offsets = [0, 4], sizes = [4, 1], strides = [1, 1]} : vector<4x16xf32> to vector<4x1xf32>
    %c1_109 = arith.constant 1 : index
    %c4_110 = arith.constant 4 : index
    %c0_111 = arith.constant 0 : index
    %c0_112 = arith.constant 0 : index
    %146 = vector.load %arg3[%c1_109, %c4_110, %c0_111, %c0_112] : memref<4x16x4x256xf32, #tpu.memory_space<vmem>>, vector<1x1x4x256xf32>
    %147 = vector.shape_cast %146 : vector<1x1x4x256xf32> to vector<4x256xf32>
    %148 = vector.broadcast %145 : vector<4x1xf32> to vector<4x256xf32>
    %149 = arith.mulf %148, %147 : vector<4x256xf32>
    %150 = arith.addf %144, %149 : vector<4x256xf32>
    %151 = vector.extract_strided_slice %120 {offsets = [0, 5], sizes = [4, 1], strides = [1, 1]} : vector<4x16xf32> to vector<4x1xf32>
    %c1_113 = arith.constant 1 : index
    %c5_114 = arith.constant 5 : index
    %c0_115 = arith.constant 0 : index
    %c0_116 = arith.constant 0 : index
    %152 = vector.load %arg3[%c1_113, %c5_114, %c0_115, %c0_116] : memref<4x16x4x256xf32, #tpu.memory_space<vmem>>, vector<1x1x4x256xf32>
    %153 = vector.shape_cast %152 : vector<1x1x4x256xf32> to vector<4x256xf32>
    %154 = vector.broadcast %151 : vector<4x1xf32> to vector<4x256xf32>
    %155 = arith.mulf %154, %153 : vector<4x256xf32>
    %156 = arith.addf %150, %155 : vector<4x256xf32>
    %157 = vector.extract_strided_slice %120 {offsets = [0, 6], sizes = [4, 1], strides = [1, 1]} : vector<4x16xf32> to vector<4x1xf32>
    %c1_117 = arith.constant 1 : index
    %c6_118 = arith.constant 6 : index
    %c0_119 = arith.constant 0 : index
    %c0_120 = arith.constant 0 : index
    %158 = vector.load %arg3[%c1_117, %c6_118, %c0_119, %c0_120] : memref<4x16x4x256xf32, #tpu.memory_space<vmem>>, vector<1x1x4x256xf32>
    %159 = vector.shape_cast %158 : vector<1x1x4x256xf32> to vector<4x256xf32>
    %160 = vector.broadcast %157 : vector<4x1xf32> to vector<4x256xf32>
    %161 = arith.mulf %160, %159 : vector<4x256xf32>
    %162 = arith.addf %156, %161 : vector<4x256xf32>
    %163 = vector.extract_strided_slice %120 {offsets = [0, 7], sizes = [4, 1], strides = [1, 1]} : vector<4x16xf32> to vector<4x1xf32>
    %c1_121 = arith.constant 1 : index
    %c7_122 = arith.constant 7 : index
    %c0_123 = arith.constant 0 : index
    %c0_124 = arith.constant 0 : index
    %164 = vector.load %arg3[%c1_121, %c7_122, %c0_123, %c0_124] : memref<4x16x4x256xf32, #tpu.memory_space<vmem>>, vector<1x1x4x256xf32>
    %165 = vector.shape_cast %164 : vector<1x1x4x256xf32> to vector<4x256xf32>
    %166 = vector.broadcast %163 : vector<4x1xf32> to vector<4x256xf32>
    %167 = arith.mulf %166, %165 : vector<4x256xf32>
    %168 = arith.addf %162, %167 : vector<4x256xf32>
    %169 = vector.extract_strided_slice %120 {offsets = [0, 8], sizes = [4, 1], strides = [1, 1]} : vector<4x16xf32> to vector<4x1xf32>
    %c1_125 = arith.constant 1 : index
    %c8_126 = arith.constant 8 : index
    %c0_127 = arith.constant 0 : index
    %c0_128 = arith.constant 0 : index
    %170 = vector.load %arg3[%c1_125, %c8_126, %c0_127, %c0_128] : memref<4x16x4x256xf32, #tpu.memory_space<vmem>>, vector<1x1x4x256xf32>
    %171 = vector.shape_cast %170 : vector<1x1x4x256xf32> to vector<4x256xf32>
    %172 = vector.broadcast %169 : vector<4x1xf32> to vector<4x256xf32>
    %173 = arith.mulf %172, %171 : vector<4x256xf32>
    %174 = arith.addf %168, %173 : vector<4x256xf32>
    %175 = vector.extract_strided_slice %120 {offsets = [0, 9], sizes = [4, 1], strides = [1, 1]} : vector<4x16xf32> to vector<4x1xf32>
    %c1_129 = arith.constant 1 : index
    %c9_130 = arith.constant 9 : index
    %c0_131 = arith.constant 0 : index
    %c0_132 = arith.constant 0 : index
    %176 = vector.load %arg3[%c1_129, %c9_130, %c0_131, %c0_132] : memref<4x16x4x256xf32, #tpu.memory_space<vmem>>, vector<1x1x4x256xf32>
    %177 = vector.shape_cast %176 : vector<1x1x4x256xf32> to vector<4x256xf32>
    %178 = vector.broadcast %175 : vector<4x1xf32> to vector<4x256xf32>
    %179 = arith.mulf %178, %177 : vector<4x256xf32>
    %180 = arith.addf %174, %179 : vector<4x256xf32>
    %181 = vector.extract_strided_slice %120 {offsets = [0, 10], sizes = [4, 1], strides = [1, 1]} : vector<4x16xf32> to vector<4x1xf32>
    %c1_133 = arith.constant 1 : index
    %c10_134 = arith.constant 10 : index
    %c0_135 = arith.constant 0 : index
    %c0_136 = arith.constant 0 : index
    %182 = vector.load %arg3[%c1_133, %c10_134, %c0_135, %c0_136] : memref<4x16x4x256xf32, #tpu.memory_space<vmem>>, vector<1x1x4x256xf32>
    %183 = vector.shape_cast %182 : vector<1x1x4x256xf32> to vector<4x256xf32>
    %184 = vector.broadcast %181 : vector<4x1xf32> to vector<4x256xf32>
    %185 = arith.mulf %184, %183 : vector<4x256xf32>
    %186 = arith.addf %180, %185 : vector<4x256xf32>
    %187 = vector.extract_strided_slice %120 {offsets = [0, 11], sizes = [4, 1], strides = [1, 1]} : vector<4x16xf32> to vector<4x1xf32>
    %c1_137 = arith.constant 1 : index
    %c11_138 = arith.constant 11 : index
    %c0_139 = arith.constant 0 : index
    %c0_140 = arith.constant 0 : index
    %188 = vector.load %arg3[%c1_137, %c11_138, %c0_139, %c0_140] : memref<4x16x4x256xf32, #tpu.memory_space<vmem>>, vector<1x1x4x256xf32>
    %189 = vector.shape_cast %188 : vector<1x1x4x256xf32> to vector<4x256xf32>
    %190 = vector.broadcast %187 : vector<4x1xf32> to vector<4x256xf32>
    %191 = arith.mulf %190, %189 : vector<4x256xf32>
    %192 = arith.addf %186, %191 : vector<4x256xf32>
    %193 = vector.extract_strided_slice %120 {offsets = [0, 12], sizes = [4, 1], strides = [1, 1]} : vector<4x16xf32> to vector<4x1xf32>
    %c1_141 = arith.constant 1 : index
    %c12_142 = arith.constant 12 : index
    %c0_143 = arith.constant 0 : index
    %c0_144 = arith.constant 0 : index
    %194 = vector.load %arg3[%c1_141, %c12_142, %c0_143, %c0_144] : memref<4x16x4x256xf32, #tpu.memory_space<vmem>>, vector<1x1x4x256xf32>
    %195 = vector.shape_cast %194 : vector<1x1x4x256xf32> to vector<4x256xf32>
    %196 = vector.broadcast %193 : vector<4x1xf32> to vector<4x256xf32>
    %197 = arith.mulf %196, %195 : vector<4x256xf32>
    %198 = arith.addf %192, %197 : vector<4x256xf32>
    %199 = vector.extract_strided_slice %120 {offsets = [0, 13], sizes = [4, 1], strides = [1, 1]} : vector<4x16xf32> to vector<4x1xf32>
    %c1_145 = arith.constant 1 : index
    %c13_146 = arith.constant 13 : index
    %c0_147 = arith.constant 0 : index
    %c0_148 = arith.constant 0 : index
    %200 = vector.load %arg3[%c1_145, %c13_146, %c0_147, %c0_148] : memref<4x16x4x256xf32, #tpu.memory_space<vmem>>, vector<1x1x4x256xf32>
    %201 = vector.shape_cast %200 : vector<1x1x4x256xf32> to vector<4x256xf32>
    %202 = vector.broadcast %199 : vector<4x1xf32> to vector<4x256xf32>
    %203 = arith.mulf %202, %201 : vector<4x256xf32>
    %204 = arith.addf %198, %203 : vector<4x256xf32>
    %205 = vector.extract_strided_slice %120 {offsets = [0, 14], sizes = [4, 1], strides = [1, 1]} : vector<4x16xf32> to vector<4x1xf32>
    %c1_149 = arith.constant 1 : index
    %c14_150 = arith.constant 14 : index
    %c0_151 = arith.constant 0 : index
    %c0_152 = arith.constant 0 : index
    %206 = vector.load %arg3[%c1_149, %c14_150, %c0_151, %c0_152] : memref<4x16x4x256xf32, #tpu.memory_space<vmem>>, vector<1x1x4x256xf32>
    %207 = vector.shape_cast %206 : vector<1x1x4x256xf32> to vector<4x256xf32>
    %208 = vector.broadcast %205 : vector<4x1xf32> to vector<4x256xf32>
    %209 = arith.mulf %208, %207 : vector<4x256xf32>
    %210 = arith.addf %204, %209 : vector<4x256xf32>
    %211 = vector.extract_strided_slice %120 {offsets = [0, 15], sizes = [4, 1], strides = [1, 1]} : vector<4x16xf32> to vector<4x1xf32>
    %c1_153 = arith.constant 1 : index
    %c15_154 = arith.constant 15 : index
    %c0_155 = arith.constant 0 : index
    %c0_156 = arith.constant 0 : index
    %212 = vector.load %arg3[%c1_153, %c15_154, %c0_155, %c0_156] : memref<4x16x4x256xf32, #tpu.memory_space<vmem>>, vector<1x1x4x256xf32>
    %213 = vector.shape_cast %212 : vector<1x1x4x256xf32> to vector<4x256xf32>
    %214 = vector.broadcast %211 : vector<4x1xf32> to vector<4x256xf32>
    %215 = arith.mulf %214, %213 : vector<4x256xf32>
    %216 = arith.addf %210, %215 : vector<4x256xf32>
    %c0_157 = arith.constant 0 : index
    %c0_158 = arith.constant 0 : index
    %c2_159 = arith.constant 2 : index
    %c0_160 = arith.constant 0 : index
    %c0_161 = arith.constant 0 : index
    %217 = vector.load %arg1[%c0_157, %c0_158, %c2_159, %c0_160, %c0_161] : memref<1x4x4x4x16xf32, #tpu.memory_space<vmem>>, vector<1x1x1x4x16xf32>
    %218 = vector.shape_cast %217 : vector<1x1x1x4x16xf32> to vector<4x16xf32>
    %c0_162 = arith.constant 0 : index
    %c1_163 = arith.constant 1 : index
    %c2_164 = arith.constant 2 : index
    %c0_165 = arith.constant 0 : index
    %c0_166 = arith.constant 0 : index
    %219 = vector.load %arg1[%c0_162, %c1_163, %c2_164, %c0_165, %c0_166] : memref<1x4x4x4x16xf32, #tpu.memory_space<vmem>>, vector<1x1x1x4x16xf32>
    %220 = vector.shape_cast %219 : vector<1x1x1x4x16xf32> to vector<4x16xf32>
    %221 = arith.maximumf %218, %220 : vector<4x16xf32>
    %c0_167 = arith.constant 0 : index
    %c2_168 = arith.constant 2 : index
    %c2_169 = arith.constant 2 : index
    %c0_170 = arith.constant 0 : index
    %c0_171 = arith.constant 0 : index
    %222 = vector.load %arg1[%c0_167, %c2_168, %c2_169, %c0_170, %c0_171] : memref<1x4x4x4x16xf32, #tpu.memory_space<vmem>>, vector<1x1x1x4x16xf32>
    %223 = vector.shape_cast %222 : vector<1x1x1x4x16xf32> to vector<4x16xf32>
    %c0_172 = arith.constant 0 : index
    %c3_173 = arith.constant 3 : index
    %c2_174 = arith.constant 2 : index
    %c0_175 = arith.constant 0 : index
    %c0_176 = arith.constant 0 : index
    %224 = vector.load %arg1[%c0_172, %c3_173, %c2_174, %c0_175, %c0_176] : memref<1x4x4x4x16xf32, #tpu.memory_space<vmem>>, vector<1x1x1x4x16xf32>
    %225 = vector.shape_cast %224 : vector<1x1x1x4x16xf32> to vector<4x16xf32>
    %226 = arith.maximumf %223, %225 : vector<4x16xf32>
    %227 = arith.maximumf %221, %226 : vector<4x16xf32>
    %228 = vector.extract_strided_slice %227 {offsets = [0, 0], sizes = [4, 1], strides = [1, 1]} : vector<4x16xf32> to vector<4x1xf32>
    %c2_177 = arith.constant 2 : index
    %c0_178 = arith.constant 0 : index
    %c0_179 = arith.constant 0 : index
    %c0_180 = arith.constant 0 : index
    %229 = vector.load %arg3[%c2_177, %c0_178, %c0_179, %c0_180] : memref<4x16x4x256xf32, #tpu.memory_space<vmem>>, vector<1x1x4x256xf32>
    %230 = vector.shape_cast %229 : vector<1x1x4x256xf32> to vector<4x256xf32>
    %231 = vector.broadcast %228 : vector<4x1xf32> to vector<4x256xf32>
    %232 = arith.mulf %231, %230 : vector<4x256xf32>
    %233 = arith.addf %216, %232 : vector<4x256xf32>
    %234 = vector.extract_strided_slice %227 {offsets = [0, 1], sizes = [4, 1], strides = [1, 1]} : vector<4x16xf32> to vector<4x1xf32>
    %c2_181 = arith.constant 2 : index
    %c1_182 = arith.constant 1 : index
    %c0_183 = arith.constant 0 : index
    %c0_184 = arith.constant 0 : index
    %235 = vector.load %arg3[%c2_181, %c1_182, %c0_183, %c0_184] : memref<4x16x4x256xf32, #tpu.memory_space<vmem>>, vector<1x1x4x256xf32>
    %236 = vector.shape_cast %235 : vector<1x1x4x256xf32> to vector<4x256xf32>
    %237 = vector.broadcast %234 : vector<4x1xf32> to vector<4x256xf32>
    %238 = arith.mulf %237, %236 : vector<4x256xf32>
    %239 = arith.addf %233, %238 : vector<4x256xf32>
    %240 = vector.extract_strided_slice %227 {offsets = [0, 2], sizes = [4, 1], strides = [1, 1]} : vector<4x16xf32> to vector<4x1xf32>
    %c2_185 = arith.constant 2 : index
    %c2_186 = arith.constant 2 : index
    %c0_187 = arith.constant 0 : index
    %c0_188 = arith.constant 0 : index
    %241 = vector.load %arg3[%c2_185, %c2_186, %c0_187, %c0_188] : memref<4x16x4x256xf32, #tpu.memory_space<vmem>>, vector<1x1x4x256xf32>
    %242 = vector.shape_cast %241 : vector<1x1x4x256xf32> to vector<4x256xf32>
    %243 = vector.broadcast %240 : vector<4x1xf32> to vector<4x256xf32>
    %244 = arith.mulf %243, %242 : vector<4x256xf32>
    %245 = arith.addf %239, %244 : vector<4x256xf32>
    %246 = vector.extract_strided_slice %227 {offsets = [0, 3], sizes = [4, 1], strides = [1, 1]} : vector<4x16xf32> to vector<4x1xf32>
    %c2_189 = arith.constant 2 : index
    %c3_190 = arith.constant 3 : index
    %c0_191 = arith.constant 0 : index
    %c0_192 = arith.constant 0 : index
    %247 = vector.load %arg3[%c2_189, %c3_190, %c0_191, %c0_192] : memref<4x16x4x256xf32, #tpu.memory_space<vmem>>, vector<1x1x4x256xf32>
    %248 = vector.shape_cast %247 : vector<1x1x4x256xf32> to vector<4x256xf32>
    %249 = vector.broadcast %246 : vector<4x1xf32> to vector<4x256xf32>
    %250 = arith.mulf %249, %248 : vector<4x256xf32>
    %251 = arith.addf %245, %250 : vector<4x256xf32>
    %252 = vector.extract_strided_slice %227 {offsets = [0, 4], sizes = [4, 1], strides = [1, 1]} : vector<4x16xf32> to vector<4x1xf32>
    %c2_193 = arith.constant 2 : index
    %c4_194 = arith.constant 4 : index
    %c0_195 = arith.constant 0 : index
    %c0_196 = arith.constant 0 : index
    %253 = vector.load %arg3[%c2_193, %c4_194, %c0_195, %c0_196] : memref<4x16x4x256xf32, #tpu.memory_space<vmem>>, vector<1x1x4x256xf32>
    %254 = vector.shape_cast %253 : vector<1x1x4x256xf32> to vector<4x256xf32>
    %255 = vector.broadcast %252 : vector<4x1xf32> to vector<4x256xf32>
    %256 = arith.mulf %255, %254 : vector<4x256xf32>
    %257 = arith.addf %251, %256 : vector<4x256xf32>
    %258 = vector.extract_strided_slice %227 {offsets = [0, 5], sizes = [4, 1], strides = [1, 1]} : vector<4x16xf32> to vector<4x1xf32>
    %c2_197 = arith.constant 2 : index
    %c5_198 = arith.constant 5 : index
    %c0_199 = arith.constant 0 : index
    %c0_200 = arith.constant 0 : index
    %259 = vector.load %arg3[%c2_197, %c5_198, %c0_199, %c0_200] : memref<4x16x4x256xf32, #tpu.memory_space<vmem>>, vector<1x1x4x256xf32>
    %260 = vector.shape_cast %259 : vector<1x1x4x256xf32> to vector<4x256xf32>
    %261 = vector.broadcast %258 : vector<4x1xf32> to vector<4x256xf32>
    %262 = arith.mulf %261, %260 : vector<4x256xf32>
    %263 = arith.addf %257, %262 : vector<4x256xf32>
    %264 = vector.extract_strided_slice %227 {offsets = [0, 6], sizes = [4, 1], strides = [1, 1]} : vector<4x16xf32> to vector<4x1xf32>
    %c2_201 = arith.constant 2 : index
    %c6_202 = arith.constant 6 : index
    %c0_203 = arith.constant 0 : index
    %c0_204 = arith.constant 0 : index
    %265 = vector.load %arg3[%c2_201, %c6_202, %c0_203, %c0_204] : memref<4x16x4x256xf32, #tpu.memory_space<vmem>>, vector<1x1x4x256xf32>
    %266 = vector.shape_cast %265 : vector<1x1x4x256xf32> to vector<4x256xf32>
    %267 = vector.broadcast %264 : vector<4x1xf32> to vector<4x256xf32>
    %268 = arith.mulf %267, %266 : vector<4x256xf32>
    %269 = arith.addf %263, %268 : vector<4x256xf32>
    %270 = vector.extract_strided_slice %227 {offsets = [0, 7], sizes = [4, 1], strides = [1, 1]} : vector<4x16xf32> to vector<4x1xf32>
    %c2_205 = arith.constant 2 : index
    %c7_206 = arith.constant 7 : index
    %c0_207 = arith.constant 0 : index
    %c0_208 = arith.constant 0 : index
    %271 = vector.load %arg3[%c2_205, %c7_206, %c0_207, %c0_208] : memref<4x16x4x256xf32, #tpu.memory_space<vmem>>, vector<1x1x4x256xf32>
    %272 = vector.shape_cast %271 : vector<1x1x4x256xf32> to vector<4x256xf32>
    %273 = vector.broadcast %270 : vector<4x1xf32> to vector<4x256xf32>
    %274 = arith.mulf %273, %272 : vector<4x256xf32>
    %275 = arith.addf %269, %274 : vector<4x256xf32>
    %276 = vector.extract_strided_slice %227 {offsets = [0, 8], sizes = [4, 1], strides = [1, 1]} : vector<4x16xf32> to vector<4x1xf32>
    %c2_209 = arith.constant 2 : index
    %c8_210 = arith.constant 8 : index
    %c0_211 = arith.constant 0 : index
    %c0_212 = arith.constant 0 : index
    %277 = vector.load %arg3[%c2_209, %c8_210, %c0_211, %c0_212] : memref<4x16x4x256xf32, #tpu.memory_space<vmem>>, vector<1x1x4x256xf32>
    %278 = vector.shape_cast %277 : vector<1x1x4x256xf32> to vector<4x256xf32>
    %279 = vector.broadcast %276 : vector<4x1xf32> to vector<4x256xf32>
    %280 = arith.mulf %279, %278 : vector<4x256xf32>
    %281 = arith.addf %275, %280 : vector<4x256xf32>
    %282 = vector.extract_strided_slice %227 {offsets = [0, 9], sizes = [4, 1], strides = [1, 1]} : vector<4x16xf32> to vector<4x1xf32>
    %c2_213 = arith.constant 2 : index
    %c9_214 = arith.constant 9 : index
    %c0_215 = arith.constant 0 : index
    %c0_216 = arith.constant 0 : index
    %283 = vector.load %arg3[%c2_213, %c9_214, %c0_215, %c0_216] : memref<4x16x4x256xf32, #tpu.memory_space<vmem>>, vector<1x1x4x256xf32>
    %284 = vector.shape_cast %283 : vector<1x1x4x256xf32> to vector<4x256xf32>
    %285 = vector.broadcast %282 : vector<4x1xf32> to vector<4x256xf32>
    %286 = arith.mulf %285, %284 : vector<4x256xf32>
    %287 = arith.addf %281, %286 : vector<4x256xf32>
    %288 = vector.extract_strided_slice %227 {offsets = [0, 10], sizes = [4, 1], strides = [1, 1]} : vector<4x16xf32> to vector<4x1xf32>
    %c2_217 = arith.constant 2 : index
    %c10_218 = arith.constant 10 : index
    %c0_219 = arith.constant 0 : index
    %c0_220 = arith.constant 0 : index
    %289 = vector.load %arg3[%c2_217, %c10_218, %c0_219, %c0_220] : memref<4x16x4x256xf32, #tpu.memory_space<vmem>>, vector<1x1x4x256xf32>
    %290 = vector.shape_cast %289 : vector<1x1x4x256xf32> to vector<4x256xf32>
    %291 = vector.broadcast %288 : vector<4x1xf32> to vector<4x256xf32>
    %292 = arith.mulf %291, %290 : vector<4x256xf32>
    %293 = arith.addf %287, %292 : vector<4x256xf32>
    %294 = vector.extract_strided_slice %227 {offsets = [0, 11], sizes = [4, 1], strides = [1, 1]} : vector<4x16xf32> to vector<4x1xf32>
    %c2_221 = arith.constant 2 : index
    %c11_222 = arith.constant 11 : index
    %c0_223 = arith.constant 0 : index
    %c0_224 = arith.constant 0 : index
    %295 = vector.load %arg3[%c2_221, %c11_222, %c0_223, %c0_224] : memref<4x16x4x256xf32, #tpu.memory_space<vmem>>, vector<1x1x4x256xf32>
    %296 = vector.shape_cast %295 : vector<1x1x4x256xf32> to vector<4x256xf32>
    %297 = vector.broadcast %294 : vector<4x1xf32> to vector<4x256xf32>
    %298 = arith.mulf %297, %296 : vector<4x256xf32>
    %299 = arith.addf %293, %298 : vector<4x256xf32>
    %300 = vector.extract_strided_slice %227 {offsets = [0, 12], sizes = [4, 1], strides = [1, 1]} : vector<4x16xf32> to vector<4x1xf32>
    %c2_225 = arith.constant 2 : index
    %c12_226 = arith.constant 12 : index
    %c0_227 = arith.constant 0 : index
    %c0_228 = arith.constant 0 : index
    %301 = vector.load %arg3[%c2_225, %c12_226, %c0_227, %c0_228] : memref<4x16x4x256xf32, #tpu.memory_space<vmem>>, vector<1x1x4x256xf32>
    %302 = vector.shape_cast %301 : vector<1x1x4x256xf32> to vector<4x256xf32>
    %303 = vector.broadcast %300 : vector<4x1xf32> to vector<4x256xf32>
    %304 = arith.mulf %303, %302 : vector<4x256xf32>
    %305 = arith.addf %299, %304 : vector<4x256xf32>
    %306 = vector.extract_strided_slice %227 {offsets = [0, 13], sizes = [4, 1], strides = [1, 1]} : vector<4x16xf32> to vector<4x1xf32>
    %c2_229 = arith.constant 2 : index
    %c13_230 = arith.constant 13 : index
    %c0_231 = arith.constant 0 : index
    %c0_232 = arith.constant 0 : index
    %307 = vector.load %arg3[%c2_229, %c13_230, %c0_231, %c0_232] : memref<4x16x4x256xf32, #tpu.memory_space<vmem>>, vector<1x1x4x256xf32>
    %308 = vector.shape_cast %307 : vector<1x1x4x256xf32> to vector<4x256xf32>
    %309 = vector.broadcast %306 : vector<4x1xf32> to vector<4x256xf32>
    %310 = arith.mulf %309, %308 : vector<4x256xf32>
    %311 = arith.addf %305, %310 : vector<4x256xf32>
    %312 = vector.extract_strided_slice %227 {offsets = [0, 14], sizes = [4, 1], strides = [1, 1]} : vector<4x16xf32> to vector<4x1xf32>
    %c2_233 = arith.constant 2 : index
    %c14_234 = arith.constant 14 : index
    %c0_235 = arith.constant 0 : index
    %c0_236 = arith.constant 0 : index
    %313 = vector.load %arg3[%c2_233, %c14_234, %c0_235, %c0_236] : memref<4x16x4x256xf32, #tpu.memory_space<vmem>>, vector<1x1x4x256xf32>
    %314 = vector.shape_cast %313 : vector<1x1x4x256xf32> to vector<4x256xf32>
    %315 = vector.broadcast %312 : vector<4x1xf32> to vector<4x256xf32>
    %316 = arith.mulf %315, %314 : vector<4x256xf32>
    %317 = arith.addf %311, %316 : vector<4x256xf32>
    %318 = vector.extract_strided_slice %227 {offsets = [0, 15], sizes = [4, 1], strides = [1, 1]} : vector<4x16xf32> to vector<4x1xf32>
    %c2_237 = arith.constant 2 : index
    %c15_238 = arith.constant 15 : index
    %c0_239 = arith.constant 0 : index
    %c0_240 = arith.constant 0 : index
    %319 = vector.load %arg3[%c2_237, %c15_238, %c0_239, %c0_240] : memref<4x16x4x256xf32, #tpu.memory_space<vmem>>, vector<1x1x4x256xf32>
    %320 = vector.shape_cast %319 : vector<1x1x4x256xf32> to vector<4x256xf32>
    %321 = vector.broadcast %318 : vector<4x1xf32> to vector<4x256xf32>
    %322 = arith.mulf %321, %320 : vector<4x256xf32>
    %323 = arith.addf %317, %322 : vector<4x256xf32>
    %c0_241 = arith.constant 0 : index
    %c0_242 = arith.constant 0 : index
    %c3_243 = arith.constant 3 : index
    %c0_244 = arith.constant 0 : index
    %c0_245 = arith.constant 0 : index
    %324 = vector.load %arg1[%c0_241, %c0_242, %c3_243, %c0_244, %c0_245] : memref<1x4x4x4x16xf32, #tpu.memory_space<vmem>>, vector<1x1x1x4x16xf32>
    %325 = vector.shape_cast %324 : vector<1x1x1x4x16xf32> to vector<4x16xf32>
    %c0_246 = arith.constant 0 : index
    %c1_247 = arith.constant 1 : index
    %c3_248 = arith.constant 3 : index
    %c0_249 = arith.constant 0 : index
    %c0_250 = arith.constant 0 : index
    %326 = vector.load %arg1[%c0_246, %c1_247, %c3_248, %c0_249, %c0_250] : memref<1x4x4x4x16xf32, #tpu.memory_space<vmem>>, vector<1x1x1x4x16xf32>
    %327 = vector.shape_cast %326 : vector<1x1x1x4x16xf32> to vector<4x16xf32>
    %328 = arith.maximumf %325, %327 : vector<4x16xf32>
    %c0_251 = arith.constant 0 : index
    %c2_252 = arith.constant 2 : index
    %c3_253 = arith.constant 3 : index
    %c0_254 = arith.constant 0 : index
    %c0_255 = arith.constant 0 : index
    %329 = vector.load %arg1[%c0_251, %c2_252, %c3_253, %c0_254, %c0_255] : memref<1x4x4x4x16xf32, #tpu.memory_space<vmem>>, vector<1x1x1x4x16xf32>
    %330 = vector.shape_cast %329 : vector<1x1x1x4x16xf32> to vector<4x16xf32>
    %c0_256 = arith.constant 0 : index
    %c3_257 = arith.constant 3 : index
    %c3_258 = arith.constant 3 : index
    %c0_259 = arith.constant 0 : index
    %c0_260 = arith.constant 0 : index
    %331 = vector.load %arg1[%c0_256, %c3_257, %c3_258, %c0_259, %c0_260] : memref<1x4x4x4x16xf32, #tpu.memory_space<vmem>>, vector<1x1x1x4x16xf32>
    %332 = vector.shape_cast %331 : vector<1x1x1x4x16xf32> to vector<4x16xf32>
    %333 = arith.maximumf %330, %332 : vector<4x16xf32>
    %334 = arith.maximumf %328, %333 : vector<4x16xf32>
    %335 = vector.extract_strided_slice %334 {offsets = [0, 0], sizes = [4, 1], strides = [1, 1]} : vector<4x16xf32> to vector<4x1xf32>
    %c3_261 = arith.constant 3 : index
    %c0_262 = arith.constant 0 : index
    %c0_263 = arith.constant 0 : index
    %c0_264 = arith.constant 0 : index
    %336 = vector.load %arg3[%c3_261, %c0_262, %c0_263, %c0_264] : memref<4x16x4x256xf32, #tpu.memory_space<vmem>>, vector<1x1x4x256xf32>
    %337 = vector.shape_cast %336 : vector<1x1x4x256xf32> to vector<4x256xf32>
    %338 = vector.broadcast %335 : vector<4x1xf32> to vector<4x256xf32>
    %339 = arith.mulf %338, %337 : vector<4x256xf32>
    %340 = arith.addf %323, %339 : vector<4x256xf32>
    %341 = vector.extract_strided_slice %334 {offsets = [0, 1], sizes = [4, 1], strides = [1, 1]} : vector<4x16xf32> to vector<4x1xf32>
    %c3_265 = arith.constant 3 : index
    %c1_266 = arith.constant 1 : index
    %c0_267 = arith.constant 0 : index
    %c0_268 = arith.constant 0 : index
    %342 = vector.load %arg3[%c3_265, %c1_266, %c0_267, %c0_268] : memref<4x16x4x256xf32, #tpu.memory_space<vmem>>, vector<1x1x4x256xf32>
    %343 = vector.shape_cast %342 : vector<1x1x4x256xf32> to vector<4x256xf32>
    %344 = vector.broadcast %341 : vector<4x1xf32> to vector<4x256xf32>
    %345 = arith.mulf %344, %343 : vector<4x256xf32>
    %346 = arith.addf %340, %345 : vector<4x256xf32>
    %347 = vector.extract_strided_slice %334 {offsets = [0, 2], sizes = [4, 1], strides = [1, 1]} : vector<4x16xf32> to vector<4x1xf32>
    %c3_269 = arith.constant 3 : index
    %c2_270 = arith.constant 2 : index
    %c0_271 = arith.constant 0 : index
    %c0_272 = arith.constant 0 : index
    %348 = vector.load %arg3[%c3_269, %c2_270, %c0_271, %c0_272] : memref<4x16x4x256xf32, #tpu.memory_space<vmem>>, vector<1x1x4x256xf32>
    %349 = vector.shape_cast %348 : vector<1x1x4x256xf32> to vector<4x256xf32>
    %350 = vector.broadcast %347 : vector<4x1xf32> to vector<4x256xf32>
    %351 = arith.mulf %350, %349 : vector<4x256xf32>
    %352 = arith.addf %346, %351 : vector<4x256xf32>
    %353 = vector.extract_strided_slice %334 {offsets = [0, 3], sizes = [4, 1], strides = [1, 1]} : vector<4x16xf32> to vector<4x1xf32>
    %c3_273 = arith.constant 3 : index
    %c3_274 = arith.constant 3 : index
    %c0_275 = arith.constant 0 : index
    %c0_276 = arith.constant 0 : index
    %354 = vector.load %arg3[%c3_273, %c3_274, %c0_275, %c0_276] : memref<4x16x4x256xf32, #tpu.memory_space<vmem>>, vector<1x1x4x256xf32>
    %355 = vector.shape_cast %354 : vector<1x1x4x256xf32> to vector<4x256xf32>
    %356 = vector.broadcast %353 : vector<4x1xf32> to vector<4x256xf32>
    %357 = arith.mulf %356, %355 : vector<4x256xf32>
    %358 = arith.addf %352, %357 : vector<4x256xf32>
    %359 = vector.extract_strided_slice %334 {offsets = [0, 4], sizes = [4, 1], strides = [1, 1]} : vector<4x16xf32> to vector<4x1xf32>
    %c3_277 = arith.constant 3 : index
    %c4_278 = arith.constant 4 : index
    %c0_279 = arith.constant 0 : index
    %c0_280 = arith.constant 0 : index
    %360 = vector.load %arg3[%c3_277, %c4_278, %c0_279, %c0_280] : memref<4x16x4x256xf32, #tpu.memory_space<vmem>>, vector<1x1x4x256xf32>
    %361 = vector.shape_cast %360 : vector<1x1x4x256xf32> to vector<4x256xf32>
    %362 = vector.broadcast %359 : vector<4x1xf32> to vector<4x256xf32>
    %363 = arith.mulf %362, %361 : vector<4x256xf32>
    %364 = arith.addf %358, %363 : vector<4x256xf32>
    %365 = vector.extract_strided_slice %334 {offsets = [0, 5], sizes = [4, 1], strides = [1, 1]} : vector<4x16xf32> to vector<4x1xf32>
    %c3_281 = arith.constant 3 : index
    %c5_282 = arith.constant 5 : index
    %c0_283 = arith.constant 0 : index
    %c0_284 = arith.constant 0 : index
    %366 = vector.load %arg3[%c3_281, %c5_282, %c0_283, %c0_284] : memref<4x16x4x256xf32, #tpu.memory_space<vmem>>, vector<1x1x4x256xf32>
    %367 = vector.shape_cast %366 : vector<1x1x4x256xf32> to vector<4x256xf32>
    %368 = vector.broadcast %365 : vector<4x1xf32> to vector<4x256xf32>
    %369 = arith.mulf %368, %367 : vector<4x256xf32>
    %370 = arith.addf %364, %369 : vector<4x256xf32>
    %371 = vector.extract_strided_slice %334 {offsets = [0, 6], sizes = [4, 1], strides = [1, 1]} : vector<4x16xf32> to vector<4x1xf32>
    %c3_285 = arith.constant 3 : index
    %c6_286 = arith.constant 6 : index
    %c0_287 = arith.constant 0 : index
    %c0_288 = arith.constant 0 : index
    %372 = vector.load %arg3[%c3_285, %c6_286, %c0_287, %c0_288] : memref<4x16x4x256xf32, #tpu.memory_space<vmem>>, vector<1x1x4x256xf32>
    %373 = vector.shape_cast %372 : vector<1x1x4x256xf32> to vector<4x256xf32>
    %374 = vector.broadcast %371 : vector<4x1xf32> to vector<4x256xf32>
    %375 = arith.mulf %374, %373 : vector<4x256xf32>
    %376 = arith.addf %370, %375 : vector<4x256xf32>
    %377 = vector.extract_strided_slice %334 {offsets = [0, 7], sizes = [4, 1], strides = [1, 1]} : vector<4x16xf32> to vector<4x1xf32>
    %c3_289 = arith.constant 3 : index
    %c7_290 = arith.constant 7 : index
    %c0_291 = arith.constant 0 : index
    %c0_292 = arith.constant 0 : index
    %378 = vector.load %arg3[%c3_289, %c7_290, %c0_291, %c0_292] : memref<4x16x4x256xf32, #tpu.memory_space<vmem>>, vector<1x1x4x256xf32>
    %379 = vector.shape_cast %378 : vector<1x1x4x256xf32> to vector<4x256xf32>
    %380 = vector.broadcast %377 : vector<4x1xf32> to vector<4x256xf32>
    %381 = arith.mulf %380, %379 : vector<4x256xf32>
    %382 = arith.addf %376, %381 : vector<4x256xf32>
    %383 = vector.extract_strided_slice %334 {offsets = [0, 8], sizes = [4, 1], strides = [1, 1]} : vector<4x16xf32> to vector<4x1xf32>
    %c3_293 = arith.constant 3 : index
    %c8_294 = arith.constant 8 : index
    %c0_295 = arith.constant 0 : index
    %c0_296 = arith.constant 0 : index
    %384 = vector.load %arg3[%c3_293, %c8_294, %c0_295, %c0_296] : memref<4x16x4x256xf32, #tpu.memory_space<vmem>>, vector<1x1x4x256xf32>
    %385 = vector.shape_cast %384 : vector<1x1x4x256xf32> to vector<4x256xf32>
    %386 = vector.broadcast %383 : vector<4x1xf32> to vector<4x256xf32>
    %387 = arith.mulf %386, %385 : vector<4x256xf32>
    %388 = arith.addf %382, %387 : vector<4x256xf32>
    %389 = vector.extract_strided_slice %334 {offsets = [0, 9], sizes = [4, 1], strides = [1, 1]} : vector<4x16xf32> to vector<4x1xf32>
    %c3_297 = arith.constant 3 : index
    %c9_298 = arith.constant 9 : index
    %c0_299 = arith.constant 0 : index
    %c0_300 = arith.constant 0 : index
    %390 = vector.load %arg3[%c3_297, %c9_298, %c0_299, %c0_300] : memref<4x16x4x256xf32, #tpu.memory_space<vmem>>, vector<1x1x4x256xf32>
    %391 = vector.shape_cast %390 : vector<1x1x4x256xf32> to vector<4x256xf32>
    %392 = vector.broadcast %389 : vector<4x1xf32> to vector<4x256xf32>
    %393 = arith.mulf %392, %391 : vector<4x256xf32>
    %394 = arith.addf %388, %393 : vector<4x256xf32>
    %395 = vector.extract_strided_slice %334 {offsets = [0, 10], sizes = [4, 1], strides = [1, 1]} : vector<4x16xf32> to vector<4x1xf32>
    %c3_301 = arith.constant 3 : index
    %c10_302 = arith.constant 10 : index
    %c0_303 = arith.constant 0 : index
    %c0_304 = arith.constant 0 : index
    %396 = vector.load %arg3[%c3_301, %c10_302, %c0_303, %c0_304] : memref<4x16x4x256xf32, #tpu.memory_space<vmem>>, vector<1x1x4x256xf32>
    %397 = vector.shape_cast %396 : vector<1x1x4x256xf32> to vector<4x256xf32>
    %398 = vector.broadcast %395 : vector<4x1xf32> to vector<4x256xf32>
    %399 = arith.mulf %398, %397 : vector<4x256xf32>
    %400 = arith.addf %394, %399 : vector<4x256xf32>
    %401 = vector.extract_strided_slice %334 {offsets = [0, 11], sizes = [4, 1], strides = [1, 1]} : vector<4x16xf32> to vector<4x1xf32>
    %c3_305 = arith.constant 3 : index
    %c11_306 = arith.constant 11 : index
    %c0_307 = arith.constant 0 : index
    %c0_308 = arith.constant 0 : index
    %402 = vector.load %arg3[%c3_305, %c11_306, %c0_307, %c0_308] : memref<4x16x4x256xf32, #tpu.memory_space<vmem>>, vector<1x1x4x256xf32>
    %403 = vector.shape_cast %402 : vector<1x1x4x256xf32> to vector<4x256xf32>
    %404 = vector.broadcast %401 : vector<4x1xf32> to vector<4x256xf32>
    %405 = arith.mulf %404, %403 : vector<4x256xf32>
    %406 = arith.addf %400, %405 : vector<4x256xf32>
    %407 = vector.extract_strided_slice %334 {offsets = [0, 12], sizes = [4, 1], strides = [1, 1]} : vector<4x16xf32> to vector<4x1xf32>
    %c3_309 = arith.constant 3 : index
    %c12_310 = arith.constant 12 : index
    %c0_311 = arith.constant 0 : index
    %c0_312 = arith.constant 0 : index
    %408 = vector.load %arg3[%c3_309, %c12_310, %c0_311, %c0_312] : memref<4x16x4x256xf32, #tpu.memory_space<vmem>>, vector<1x1x4x256xf32>
    %409 = vector.shape_cast %408 : vector<1x1x4x256xf32> to vector<4x256xf32>
    %410 = vector.broadcast %407 : vector<4x1xf32> to vector<4x256xf32>
    %411 = arith.mulf %410, %409 : vector<4x256xf32>
    %412 = arith.addf %406, %411 : vector<4x256xf32>
    %413 = vector.extract_strided_slice %334 {offsets = [0, 13], sizes = [4, 1], strides = [1, 1]} : vector<4x16xf32> to vector<4x1xf32>
    %c3_313 = arith.constant 3 : index
    %c13_314 = arith.constant 13 : index
    %c0_315 = arith.constant 0 : index
    %c0_316 = arith.constant 0 : index
    %414 = vector.load %arg3[%c3_313, %c13_314, %c0_315, %c0_316] : memref<4x16x4x256xf32, #tpu.memory_space<vmem>>, vector<1x1x4x256xf32>
    %415 = vector.shape_cast %414 : vector<1x1x4x256xf32> to vector<4x256xf32>
    %416 = vector.broadcast %413 : vector<4x1xf32> to vector<4x256xf32>
    %417 = arith.mulf %416, %415 : vector<4x256xf32>
    %418 = arith.addf %412, %417 : vector<4x256xf32>
    %419 = vector.extract_strided_slice %334 {offsets = [0, 14], sizes = [4, 1], strides = [1, 1]} : vector<4x16xf32> to vector<4x1xf32>
    %c3_317 = arith.constant 3 : index
    %c14_318 = arith.constant 14 : index
    %c0_319 = arith.constant 0 : index
    %c0_320 = arith.constant 0 : index
    %420 = vector.load %arg3[%c3_317, %c14_318, %c0_319, %c0_320] : memref<4x16x4x256xf32, #tpu.memory_space<vmem>>, vector<1x1x4x256xf32>
    %421 = vector.shape_cast %420 : vector<1x1x4x256xf32> to vector<4x256xf32>
    %422 = vector.broadcast %419 : vector<4x1xf32> to vector<4x256xf32>
    %423 = arith.mulf %422, %421 : vector<4x256xf32>
    %424 = arith.addf %418, %423 : vector<4x256xf32>
    %425 = vector.extract_strided_slice %334 {offsets = [0, 15], sizes = [4, 1], strides = [1, 1]} : vector<4x16xf32> to vector<4x1xf32>
    %c3_321 = arith.constant 3 : index
    %c15_322 = arith.constant 15 : index
    %c0_323 = arith.constant 0 : index
    %c0_324 = arith.constant 0 : index
    %426 = vector.load %arg3[%c3_321, %c15_322, %c0_323, %c0_324] : memref<4x16x4x256xf32, #tpu.memory_space<vmem>>, vector<1x1x4x256xf32>
    %427 = vector.shape_cast %426 : vector<1x1x4x256xf32> to vector<4x256xf32>
    %428 = vector.broadcast %425 : vector<4x1xf32> to vector<4x256xf32>
    %429 = arith.mulf %428, %427 : vector<4x256xf32>
    %430 = arith.addf %424, %429 : vector<4x256xf32>
    %431 = arith.addf %430, %1 : vector<4x256xf32>
    %c0_325 = arith.constant 0 : index
    %c0_326 = arith.constant 0 : index
    %432 = vector.load %arg5[%c0_325, %c0_326] : memref<4x4xf32, #tpu.memory_space<vmem>>, vector<4x4xf32>
    %c0_327 = arith.constant 0 : index
    %c0_328 = arith.constant 0 : index
    %433 = vector.load %arg6[%c0_327, %c0_328] : memref<4x1xf32, #tpu.memory_space<vmem>>, vector<4x1xf32>
    %434 = vector.extract_strided_slice %432 {offsets = [0, 0], sizes = [4, 1], strides = [1, 1]} : vector<4x4xf32> to vector<4x1xf32>
    %435 = vector.extract_strided_slice %431 {offsets = [0, 0], sizes = [1, 256], strides = [1, 1]} : vector<4x256xf32> to vector<1x256xf32>
    %436 = vector.broadcast %434 : vector<4x1xf32> to vector<4x256xf32>
    %437 = vector.broadcast %435 : vector<1x256xf32> to vector<4x256xf32>
    %438 = arith.mulf %436, %437 : vector<4x256xf32>
    %439 = vector.extract_strided_slice %432 {offsets = [0, 1], sizes = [4, 1], strides = [1, 1]} : vector<4x4xf32> to vector<4x1xf32>
    %440 = vector.extract_strided_slice %431 {offsets = [1, 0], sizes = [1, 256], strides = [1, 1]} : vector<4x256xf32> to vector<1x256xf32>
    %441 = vector.broadcast %439 : vector<4x1xf32> to vector<4x256xf32>
    %442 = vector.broadcast %440 : vector<1x256xf32> to vector<4x256xf32>
    %443 = arith.mulf %441, %442 : vector<4x256xf32>
    %444 = arith.addf %438, %443 : vector<4x256xf32>
    %445 = vector.extract_strided_slice %432 {offsets = [0, 2], sizes = [4, 1], strides = [1, 1]} : vector<4x4xf32> to vector<4x1xf32>
    %446 = vector.extract_strided_slice %431 {offsets = [2, 0], sizes = [1, 256], strides = [1, 1]} : vector<4x256xf32> to vector<1x256xf32>
    %447 = vector.broadcast %445 : vector<4x1xf32> to vector<4x256xf32>
    %448 = vector.broadcast %446 : vector<1x256xf32> to vector<4x256xf32>
    %449 = arith.mulf %447, %448 : vector<4x256xf32>
    %450 = arith.addf %444, %449 : vector<4x256xf32>
    %451 = vector.extract_strided_slice %432 {offsets = [0, 3], sizes = [4, 1], strides = [1, 1]} : vector<4x4xf32> to vector<4x1xf32>
    %452 = vector.extract_strided_slice %431 {offsets = [3, 0], sizes = [1, 256], strides = [1, 1]} : vector<4x256xf32> to vector<1x256xf32>
    %453 = vector.broadcast %451 : vector<4x1xf32> to vector<4x256xf32>
    %454 = vector.broadcast %452 : vector<1x256xf32> to vector<4x256xf32>
    %455 = arith.mulf %453, %454 : vector<4x256xf32>
    %456 = arith.addf %450, %455 : vector<4x256xf32>
    %457 = vector.broadcast %433 : vector<4x1xf32> to vector<4x256xf32>
    %458 = arith.addf %456, %457 : vector<4x256xf32>
    %cst = arith.constant 0.000000e+00 : f32
    %459 = vector.broadcast %cst : f32 to vector<4x256xf32>
    %460 = arith.maximumf %458, %459 : vector<4x256xf32>
    %c0_329 = arith.constant 0 : index
    %c0_330 = arith.constant 0 : index
    %461 = vector.load %arg7[%c0_329, %c0_330] : memref<4x9xf32, #tpu.memory_space<vmem>>, vector<4x9xf32>
    %c0_331 = arith.constant 0 : index
    %c0_332 = arith.constant 0 : index
    %462 = vector.load %arg8[%c0_331, %c0_332] : memref<4x1xf32, #tpu.memory_space<vmem>>, vector<4x1xf32>
    %c17_i32 = arith.constant 17 : i32
    %463 = tpu.dynamic_rotate %460 by %c17_i32 dim 1 : vector<4x256xf32>, i32 -> vector<4x256xf32>
    %464 = vector.extract_strided_slice %461 {offsets = [0, 0], sizes = [4, 1], strides = [1, 1]} : vector<4x9xf32> to vector<4x1xf32>
    %c0_333 = arith.constant 0 : index
    %c0_334 = arith.constant 0 : index
    %c0_335 = arith.constant 0 : index
    %465 = vector.load %arg15[%c0_333, %c0_334, %c0_335] : memref<9x1x256xf32, #tpu.memory_space<vmem>>, vector<1x1x256xf32>
    %466 = vector.shape_cast %465 : vector<1x1x256xf32> to vector<1x256xf32>
    %467 = vector.broadcast %466 : vector<1x256xf32> to vector<4x256xf32>
    %468 = arith.mulf %463, %467 : vector<4x256xf32>
    %469 = vector.broadcast %464 : vector<4x1xf32> to vector<4x256xf32>
    %470 = arith.mulf %469, %468 : vector<4x256xf32>
    %c16_i32 = arith.constant 16 : i32
    %471 = tpu.dynamic_rotate %460 by %c16_i32 dim 1 : vector<4x256xf32>, i32 -> vector<4x256xf32>
    %472 = vector.extract_strided_slice %461 {offsets = [0, 1], sizes = [4, 1], strides = [1, 1]} : vector<4x9xf32> to vector<4x1xf32>
    %c1_336 = arith.constant 1 : index
    %c0_337 = arith.constant 0 : index
    %c0_338 = arith.constant 0 : index
    %473 = vector.load %arg15[%c1_336, %c0_337, %c0_338] : memref<9x1x256xf32, #tpu.memory_space<vmem>>, vector<1x1x256xf32>
    %474 = vector.shape_cast %473 : vector<1x1x256xf32> to vector<1x256xf32>
    %475 = vector.broadcast %474 : vector<1x256xf32> to vector<4x256xf32>
    %476 = arith.mulf %471, %475 : vector<4x256xf32>
    %477 = vector.broadcast %472 : vector<4x1xf32> to vector<4x256xf32>
    %478 = arith.mulf %477, %476 : vector<4x256xf32>
    %479 = arith.addf %470, %478 : vector<4x256xf32>
    %c15_i32 = arith.constant 15 : i32
    %480 = tpu.dynamic_rotate %460 by %c15_i32 dim 1 : vector<4x256xf32>, i32 -> vector<4x256xf32>
    %481 = vector.extract_strided_slice %461 {offsets = [0, 2], sizes = [4, 1], strides = [1, 1]} : vector<4x9xf32> to vector<4x1xf32>
    %c2_339 = arith.constant 2 : index
    %c0_340 = arith.constant 0 : index
    %c0_341 = arith.constant 0 : index
    %482 = vector.load %arg15[%c2_339, %c0_340, %c0_341] : memref<9x1x256xf32, #tpu.memory_space<vmem>>, vector<1x1x256xf32>
    %483 = vector.shape_cast %482 : vector<1x1x256xf32> to vector<1x256xf32>
    %484 = vector.broadcast %483 : vector<1x256xf32> to vector<4x256xf32>
    %485 = arith.mulf %480, %484 : vector<4x256xf32>
    %486 = vector.broadcast %481 : vector<4x1xf32> to vector<4x256xf32>
    %487 = arith.mulf %486, %485 : vector<4x256xf32>
    %488 = arith.addf %479, %487 : vector<4x256xf32>
    %c1_i32 = arith.constant 1 : i32
    %489 = tpu.dynamic_rotate %460 by %c1_i32 dim 1 : vector<4x256xf32>, i32 -> vector<4x256xf32>
    %490 = vector.extract_strided_slice %461 {offsets = [0, 3], sizes = [4, 1], strides = [1, 1]} : vector<4x9xf32> to vector<4x1xf32>
    %c3_342 = arith.constant 3 : index
    %c0_343 = arith.constant 0 : index
    %c0_344 = arith.constant 0 : index
    %491 = vector.load %arg15[%c3_342, %c0_343, %c0_344] : memref<9x1x256xf32, #tpu.memory_space<vmem>>, vector<1x1x256xf32>
    %492 = vector.shape_cast %491 : vector<1x1x256xf32> to vector<1x256xf32>
    %493 = vector.broadcast %492 : vector<1x256xf32> to vector<4x256xf32>
    %494 = arith.mulf %489, %493 : vector<4x256xf32>
    %495 = vector.broadcast %490 : vector<4x1xf32> to vector<4x256xf32>
    %496 = arith.mulf %495, %494 : vector<4x256xf32>
    %497 = arith.addf %488, %496 : vector<4x256xf32>
    %498 = vector.extract_strided_slice %461 {offsets = [0, 4], sizes = [4, 1], strides = [1, 1]} : vector<4x9xf32> to vector<4x1xf32>
    %c4_345 = arith.constant 4 : index
    %c0_346 = arith.constant 0 : index
    %c0_347 = arith.constant 0 : index
    %499 = vector.load %arg15[%c4_345, %c0_346, %c0_347] : memref<9x1x256xf32, #tpu.memory_space<vmem>>, vector<1x1x256xf32>
    %500 = vector.shape_cast %499 : vector<1x1x256xf32> to vector<1x256xf32>
    %501 = vector.broadcast %500 : vector<1x256xf32> to vector<4x256xf32>
    %502 = arith.mulf %460, %501 : vector<4x256xf32>
    %503 = vector.broadcast %498 : vector<4x1xf32> to vector<4x256xf32>
    %504 = arith.mulf %503, %502 : vector<4x256xf32>
    %505 = arith.addf %497, %504 : vector<4x256xf32>
    %c255_i32 = arith.constant 255 : i32
    %506 = tpu.dynamic_rotate %460 by %c255_i32 dim 1 : vector<4x256xf32>, i32 -> vector<4x256xf32>
    %507 = vector.extract_strided_slice %461 {offsets = [0, 5], sizes = [4, 1], strides = [1, 1]} : vector<4x9xf32> to vector<4x1xf32>
    %c5_348 = arith.constant 5 : index
    %c0_349 = arith.constant 0 : index
    %c0_350 = arith.constant 0 : index
    %508 = vector.load %arg15[%c5_348, %c0_349, %c0_350] : memref<9x1x256xf32, #tpu.memory_space<vmem>>, vector<1x1x256xf32>
    %509 = vector.shape_cast %508 : vector<1x1x256xf32> to vector<1x256xf32>
    %510 = vector.broadcast %509 : vector<1x256xf32> to vector<4x256xf32>
    %511 = arith.mulf %506, %510 : vector<4x256xf32>
    %512 = vector.broadcast %507 : vector<4x1xf32> to vector<4x256xf32>
    %513 = arith.mulf %512, %511 : vector<4x256xf32>
    %514 = arith.addf %505, %513 : vector<4x256xf32>
    %c241_i32 = arith.constant 241 : i32
    %515 = tpu.dynamic_rotate %460 by %c241_i32 dim 1 : vector<4x256xf32>, i32 -> vector<4x256xf32>
    %516 = vector.extract_strided_slice %461 {offsets = [0, 6], sizes = [4, 1], strides = [1, 1]} : vector<4x9xf32> to vector<4x1xf32>
    %c6_351 = arith.constant 6 : index
    %c0_352 = arith.constant 0 : index
    %c0_353 = arith.constant 0 : index
    %517 = vector.load %arg15[%c6_351, %c0_352, %c0_353] : memref<9x1x256xf32, #tpu.memory_space<vmem>>, vector<1x1x256xf32>
    %518 = vector.shape_cast %517 : vector<1x1x256xf32> to vector<1x256xf32>
    %519 = vector.broadcast %518 : vector<1x256xf32> to vector<4x256xf32>
    %520 = arith.mulf %515, %519 : vector<4x256xf32>
    %521 = vector.broadcast %516 : vector<4x1xf32> to vector<4x256xf32>
    %522 = arith.mulf %521, %520 : vector<4x256xf32>
    %523 = arith.addf %514, %522 : vector<4x256xf32>
    %c240_i32 = arith.constant 240 : i32
    %524 = tpu.dynamic_rotate %460 by %c240_i32 dim 1 : vector<4x256xf32>, i32 -> vector<4x256xf32>
    %525 = vector.extract_strided_slice %461 {offsets = [0, 7], sizes = [4, 1], strides = [1, 1]} : vector<4x9xf32> to vector<4x1xf32>
    %c7_354 = arith.constant 7 : index
    %c0_355 = arith.constant 0 : index
    %c0_356 = arith.constant 0 : index
    %526 = vector.load %arg15[%c7_354, %c0_355, %c0_356] : memref<9x1x256xf32, #tpu.memory_space<vmem>>, vector<1x1x256xf32>
    %527 = vector.shape_cast %526 : vector<1x1x256xf32> to vector<1x256xf32>
    %528 = vector.broadcast %527 : vector<1x256xf32> to vector<4x256xf32>
    %529 = arith.mulf %524, %528 : vector<4x256xf32>
    %530 = vector.broadcast %525 : vector<4x1xf32> to vector<4x256xf32>
    %531 = arith.mulf %530, %529 : vector<4x256xf32>
    %532 = arith.addf %523, %531 : vector<4x256xf32>
    %c239_i32 = arith.constant 239 : i32
    %533 = tpu.dynamic_rotate %460 by %c239_i32 dim 1 : vector<4x256xf32>, i32 -> vector<4x256xf32>
    %534 = vector.extract_strided_slice %461 {offsets = [0, 8], sizes = [4, 1], strides = [1, 1]} : vector<4x9xf32> to vector<4x1xf32>
    %c8_357 = arith.constant 8 : index
    %c0_358 = arith.constant 0 : index
    %c0_359 = arith.constant 0 : index
    %535 = vector.load %arg15[%c8_357, %c0_358, %c0_359] : memref<9x1x256xf32, #tpu.memory_space<vmem>>, vector<1x1x256xf32>
    %536 = vector.shape_cast %535 : vector<1x1x256xf32> to vector<1x256xf32>
    %537 = vector.broadcast %536 : vector<1x256xf32> to vector<4x256xf32>
    %538 = arith.mulf %533, %537 : vector<4x256xf32>
    %539 = vector.broadcast %534 : vector<4x1xf32> to vector<4x256xf32>
    %540 = arith.mulf %539, %538 : vector<4x256xf32>
    %541 = arith.addf %532, %540 : vector<4x256xf32>
    %542 = vector.broadcast %462 : vector<4x1xf32> to vector<4x256xf32>
    %543 = arith.addf %541, %542 : vector<4x256xf32>
    %544 = arith.addf %460, %543 : vector<4x256xf32>
    %c0_360 = arith.constant 0 : index
    %c0_361 = arith.constant 0 : index
    %545 = vector.load %arg9[%c0_360, %c0_361] : memref<4x4xf32, #tpu.memory_space<vmem>>, vector<4x4xf32>
    %c0_362 = arith.constant 0 : index
    %c0_363 = arith.constant 0 : index
    %546 = vector.load %arg10[%c0_362, %c0_363] : memref<4x1xf32, #tpu.memory_space<vmem>>, vector<4x1xf32>
    %547 = vector.extract_strided_slice %545 {offsets = [0, 0], sizes = [4, 1], strides = [1, 1]} : vector<4x4xf32> to vector<4x1xf32>
    %548 = vector.extract_strided_slice %544 {offsets = [0, 0], sizes = [1, 256], strides = [1, 1]} : vector<4x256xf32> to vector<1x256xf32>
    %549 = vector.broadcast %547 : vector<4x1xf32> to vector<4x256xf32>
    %550 = vector.broadcast %548 : vector<1x256xf32> to vector<4x256xf32>
    %551 = arith.mulf %549, %550 : vector<4x256xf32>
    %552 = vector.extract_strided_slice %545 {offsets = [0, 1], sizes = [4, 1], strides = [1, 1]} : vector<4x4xf32> to vector<4x1xf32>
    %553 = vector.extract_strided_slice %544 {offsets = [1, 0], sizes = [1, 256], strides = [1, 1]} : vector<4x256xf32> to vector<1x256xf32>
    %554 = vector.broadcast %552 : vector<4x1xf32> to vector<4x256xf32>
    %555 = vector.broadcast %553 : vector<1x256xf32> to vector<4x256xf32>
    %556 = arith.mulf %554, %555 : vector<4x256xf32>
    %557 = arith.addf %551, %556 : vector<4x256xf32>
    %558 = vector.extract_strided_slice %545 {offsets = [0, 2], sizes = [4, 1], strides = [1, 1]} : vector<4x4xf32> to vector<4x1xf32>
    %559 = vector.extract_strided_slice %544 {offsets = [2, 0], sizes = [1, 256], strides = [1, 1]} : vector<4x256xf32> to vector<1x256xf32>
    %560 = vector.broadcast %558 : vector<4x1xf32> to vector<4x256xf32>
    %561 = vector.broadcast %559 : vector<1x256xf32> to vector<4x256xf32>
    %562 = arith.mulf %560, %561 : vector<4x256xf32>
    %563 = arith.addf %557, %562 : vector<4x256xf32>
    %564 = vector.extract_strided_slice %545 {offsets = [0, 3], sizes = [4, 1], strides = [1, 1]} : vector<4x4xf32> to vector<4x1xf32>
    %565 = vector.extract_strided_slice %544 {offsets = [3, 0], sizes = [1, 256], strides = [1, 1]} : vector<4x256xf32> to vector<1x256xf32>
    %566 = vector.broadcast %564 : vector<4x1xf32> to vector<4x256xf32>
    %567 = vector.broadcast %565 : vector<1x256xf32> to vector<4x256xf32>
    %568 = arith.mulf %566, %567 : vector<4x256xf32>
    %569 = arith.addf %563, %568 : vector<4x256xf32>
    %570 = vector.broadcast %546 : vector<4x1xf32> to vector<4x256xf32>
    %571 = arith.addf %569, %570 : vector<4x256xf32>
    %cst_364 = arith.constant 0.000000e+00 : f32
    %572 = vector.broadcast %cst_364 : f32 to vector<4x256xf32>
    %573 = arith.maximumf %571, %572 : vector<4x256xf32>
    %c0_365 = arith.constant 0 : index
    %c0_366 = arith.constant 0 : index
    %574 = vector.load %arg11[%c0_365, %c0_366] : memref<4x9xf32, #tpu.memory_space<vmem>>, vector<4x9xf32>
    %c0_367 = arith.constant 0 : index
    %c0_368 = arith.constant 0 : index
    %575 = vector.load %arg12[%c0_367, %c0_368] : memref<4x1xf32, #tpu.memory_space<vmem>>, vector<4x1xf32>
    %c17_i32_369 = arith.constant 17 : i32
    %576 = tpu.dynamic_rotate %573 by %c17_i32_369 dim 1 : vector<4x256xf32>, i32 -> vector<4x256xf32>
    %577 = vector.extract_strided_slice %574 {offsets = [0, 0], sizes = [4, 1], strides = [1, 1]} : vector<4x9xf32> to vector<4x1xf32>
    %c0_370 = arith.constant 0 : index
    %c0_371 = arith.constant 0 : index
    %c0_372 = arith.constant 0 : index
    %578 = vector.load %arg15[%c0_370, %c0_371, %c0_372] : memref<9x1x256xf32, #tpu.memory_space<vmem>>, vector<1x1x256xf32>
    %579 = vector.shape_cast %578 : vector<1x1x256xf32> to vector<1x256xf32>
    %580 = vector.broadcast %579 : vector<1x256xf32> to vector<4x256xf32>
    %581 = arith.mulf %576, %580 : vector<4x256xf32>
    %582 = vector.broadcast %577 : vector<4x1xf32> to vector<4x256xf32>
    %583 = arith.mulf %582, %581 : vector<4x256xf32>
    %c16_i32_373 = arith.constant 16 : i32
    %584 = tpu.dynamic_rotate %573 by %c16_i32_373 dim 1 : vector<4x256xf32>, i32 -> vector<4x256xf32>
    %585 = vector.extract_strided_slice %574 {offsets = [0, 1], sizes = [4, 1], strides = [1, 1]} : vector<4x9xf32> to vector<4x1xf32>
    %c1_374 = arith.constant 1 : index
    %c0_375 = arith.constant 0 : index
    %c0_376 = arith.constant 0 : index
    %586 = vector.load %arg15[%c1_374, %c0_375, %c0_376] : memref<9x1x256xf32, #tpu.memory_space<vmem>>, vector<1x1x256xf32>
    %587 = vector.shape_cast %586 : vector<1x1x256xf32> to vector<1x256xf32>
    %588 = vector.broadcast %587 : vector<1x256xf32> to vector<4x256xf32>
    %589 = arith.mulf %584, %588 : vector<4x256xf32>
    %590 = vector.broadcast %585 : vector<4x1xf32> to vector<4x256xf32>
    %591 = arith.mulf %590, %589 : vector<4x256xf32>
    %592 = arith.addf %583, %591 : vector<4x256xf32>
    %c15_i32_377 = arith.constant 15 : i32
    %593 = tpu.dynamic_rotate %573 by %c15_i32_377 dim 1 : vector<4x256xf32>, i32 -> vector<4x256xf32>
    %594 = vector.extract_strided_slice %574 {offsets = [0, 2], sizes = [4, 1], strides = [1, 1]} : vector<4x9xf32> to vector<4x1xf32>
    %c2_378 = arith.constant 2 : index
    %c0_379 = arith.constant 0 : index
    %c0_380 = arith.constant 0 : index
    %595 = vector.load %arg15[%c2_378, %c0_379, %c0_380] : memref<9x1x256xf32, #tpu.memory_space<vmem>>, vector<1x1x256xf32>
    %596 = vector.shape_cast %595 : vector<1x1x256xf32> to vector<1x256xf32>
    %597 = vector.broadcast %596 : vector<1x256xf32> to vector<4x256xf32>
    %598 = arith.mulf %593, %597 : vector<4x256xf32>
    %599 = vector.broadcast %594 : vector<4x1xf32> to vector<4x256xf32>
    %600 = arith.mulf %599, %598 : vector<4x256xf32>
    %601 = arith.addf %592, %600 : vector<4x256xf32>
    %c1_i32_381 = arith.constant 1 : i32
    %602 = tpu.dynamic_rotate %573 by %c1_i32_381 dim 1 : vector<4x256xf32>, i32 -> vector<4x256xf32>
    %603 = vector.extract_strided_slice %574 {offsets = [0, 3], sizes = [4, 1], strides = [1, 1]} : vector<4x9xf32> to vector<4x1xf32>
    %c3_382 = arith.constant 3 : index
    %c0_383 = arith.constant 0 : index
    %c0_384 = arith.constant 0 : index
    %604 = vector.load %arg15[%c3_382, %c0_383, %c0_384] : memref<9x1x256xf32, #tpu.memory_space<vmem>>, vector<1x1x256xf32>
    %605 = vector.shape_cast %604 : vector<1x1x256xf32> to vector<1x256xf32>
    %606 = vector.broadcast %605 : vector<1x256xf32> to vector<4x256xf32>
    %607 = arith.mulf %602, %606 : vector<4x256xf32>
    %608 = vector.broadcast %603 : vector<4x1xf32> to vector<4x256xf32>
    %609 = arith.mulf %608, %607 : vector<4x256xf32>
    %610 = arith.addf %601, %609 : vector<4x256xf32>
    %611 = vector.extract_strided_slice %574 {offsets = [0, 4], sizes = [4, 1], strides = [1, 1]} : vector<4x9xf32> to vector<4x1xf32>
    %c4_385 = arith.constant 4 : index
    %c0_386 = arith.constant 0 : index
    %c0_387 = arith.constant 0 : index
    %612 = vector.load %arg15[%c4_385, %c0_386, %c0_387] : memref<9x1x256xf32, #tpu.memory_space<vmem>>, vector<1x1x256xf32>
    %613 = vector.shape_cast %612 : vector<1x1x256xf32> to vector<1x256xf32>
    %614 = vector.broadcast %613 : vector<1x256xf32> to vector<4x256xf32>
    %615 = arith.mulf %573, %614 : vector<4x256xf32>
    %616 = vector.broadcast %611 : vector<4x1xf32> to vector<4x256xf32>
    %617 = arith.mulf %616, %615 : vector<4x256xf32>
    %618 = arith.addf %610, %617 : vector<4x256xf32>
    %c255_i32_388 = arith.constant 255 : i32
    %619 = tpu.dynamic_rotate %573 by %c255_i32_388 dim 1 : vector<4x256xf32>, i32 -> vector<4x256xf32>
    %620 = vector.extract_strided_slice %574 {offsets = [0, 5], sizes = [4, 1], strides = [1, 1]} : vector<4x9xf32> to vector<4x1xf32>
    %c5_389 = arith.constant 5 : index
    %c0_390 = arith.constant 0 : index
    %c0_391 = arith.constant 0 : index
    %621 = vector.load %arg15[%c5_389, %c0_390, %c0_391] : memref<9x1x256xf32, #tpu.memory_space<vmem>>, vector<1x1x256xf32>
    %622 = vector.shape_cast %621 : vector<1x1x256xf32> to vector<1x256xf32>
    %623 = vector.broadcast %622 : vector<1x256xf32> to vector<4x256xf32>
    %624 = arith.mulf %619, %623 : vector<4x256xf32>
    %625 = vector.broadcast %620 : vector<4x1xf32> to vector<4x256xf32>
    %626 = arith.mulf %625, %624 : vector<4x256xf32>
    %627 = arith.addf %618, %626 : vector<4x256xf32>
    %c241_i32_392 = arith.constant 241 : i32
    %628 = tpu.dynamic_rotate %573 by %c241_i32_392 dim 1 : vector<4x256xf32>, i32 -> vector<4x256xf32>
    %629 = vector.extract_strided_slice %574 {offsets = [0, 6], sizes = [4, 1], strides = [1, 1]} : vector<4x9xf32> to vector<4x1xf32>
    %c6_393 = arith.constant 6 : index
    %c0_394 = arith.constant 0 : index
    %c0_395 = arith.constant 0 : index
    %630 = vector.load %arg15[%c6_393, %c0_394, %c0_395] : memref<9x1x256xf32, #tpu.memory_space<vmem>>, vector<1x1x256xf32>
    %631 = vector.shape_cast %630 : vector<1x1x256xf32> to vector<1x256xf32>
    %632 = vector.broadcast %631 : vector<1x256xf32> to vector<4x256xf32>
    %633 = arith.mulf %628, %632 : vector<4x256xf32>
    %634 = vector.broadcast %629 : vector<4x1xf32> to vector<4x256xf32>
    %635 = arith.mulf %634, %633 : vector<4x256xf32>
    %636 = arith.addf %627, %635 : vector<4x256xf32>
    %c240_i32_396 = arith.constant 240 : i32
    %637 = tpu.dynamic_rotate %573 by %c240_i32_396 dim 1 : vector<4x256xf32>, i32 -> vector<4x256xf32>
    %638 = vector.extract_strided_slice %574 {offsets = [0, 7], sizes = [4, 1], strides = [1, 1]} : vector<4x9xf32> to vector<4x1xf32>
    %c7_397 = arith.constant 7 : index
    %c0_398 = arith.constant 0 : index
    %c0_399 = arith.constant 0 : index
    %639 = vector.load %arg15[%c7_397, %c0_398, %c0_399] : memref<9x1x256xf32, #tpu.memory_space<vmem>>, vector<1x1x256xf32>
    %640 = vector.shape_cast %639 : vector<1x1x256xf32> to vector<1x256xf32>
    %641 = vector.broadcast %640 : vector<1x256xf32> to vector<4x256xf32>
    %642 = arith.mulf %637, %641 : vector<4x256xf32>
    %643 = vector.broadcast %638 : vector<4x1xf32> to vector<4x256xf32>
    %644 = arith.mulf %643, %642 : vector<4x256xf32>
    %645 = arith.addf %636, %644 : vector<4x256xf32>
    %c239_i32_400 = arith.constant 239 : i32
    %646 = tpu.dynamic_rotate %573 by %c239_i32_400 dim 1 : vector<4x256xf32>, i32 -> vector<4x256xf32>
    %647 = vector.extract_strided_slice %574 {offsets = [0, 8], sizes = [4, 1], strides = [1, 1]} : vector<4x9xf32> to vector<4x1xf32>
    %c8_401 = arith.constant 8 : index
    %c0_402 = arith.constant 0 : index
    %c0_403 = arith.constant 0 : index
    %648 = vector.load %arg15[%c8_401, %c0_402, %c0_403] : memref<9x1x256xf32, #tpu.memory_space<vmem>>, vector<1x1x256xf32>
    %649 = vector.shape_cast %648 : vector<1x1x256xf32> to vector<1x256xf32>
    %650 = vector.broadcast %649 : vector<1x256xf32> to vector<4x256xf32>
    %651 = arith.mulf %646, %650 : vector<4x256xf32>
    %652 = vector.broadcast %647 : vector<4x1xf32> to vector<4x256xf32>
    %653 = arith.mulf %652, %651 : vector<4x256xf32>
    %654 = arith.addf %645, %653 : vector<4x256xf32>
    %655 = vector.broadcast %575 : vector<4x1xf32> to vector<4x256xf32>
    %656 = arith.addf %654, %655 : vector<4x256xf32>
    %657 = arith.addf %573, %656 : vector<4x256xf32>
    %c0_404 = arith.constant 0 : index
    %c0_405 = arith.constant 0 : index
    %658 = vector.load %arg13[%c0_404, %c0_405] : memref<4x4xf32, #tpu.memory_space<vmem>>, vector<4x4xf32>
    %c0_406 = arith.constant 0 : index
    %c0_407 = arith.constant 0 : index
    %659 = vector.load %arg14[%c0_406, %c0_407] : memref<4x1xf32, #tpu.memory_space<vmem>>, vector<4x1xf32>
    %660 = vector.extract_strided_slice %658 {offsets = [0, 0], sizes = [4, 1], strides = [1, 1]} : vector<4x4xf32> to vector<4x1xf32>
    %661 = vector.extract_strided_slice %657 {offsets = [0, 0], sizes = [1, 256], strides = [1, 1]} : vector<4x256xf32> to vector<1x256xf32>
    %662 = vector.broadcast %660 : vector<4x1xf32> to vector<4x256xf32>
    %663 = vector.broadcast %661 : vector<1x256xf32> to vector<4x256xf32>
    %664 = arith.mulf %662, %663 : vector<4x256xf32>
    %665 = vector.extract_strided_slice %658 {offsets = [0, 1], sizes = [4, 1], strides = [1, 1]} : vector<4x4xf32> to vector<4x1xf32>
    %666 = vector.extract_strided_slice %657 {offsets = [1, 0], sizes = [1, 256], strides = [1, 1]} : vector<4x256xf32> to vector<1x256xf32>
    %667 = vector.broadcast %665 : vector<4x1xf32> to vector<4x256xf32>
    %668 = vector.broadcast %666 : vector<1x256xf32> to vector<4x256xf32>
    %669 = arith.mulf %667, %668 : vector<4x256xf32>
    %670 = arith.addf %664, %669 : vector<4x256xf32>
    %671 = vector.extract_strided_slice %658 {offsets = [0, 2], sizes = [4, 1], strides = [1, 1]} : vector<4x4xf32> to vector<4x1xf32>
    %672 = vector.extract_strided_slice %657 {offsets = [2, 0], sizes = [1, 256], strides = [1, 1]} : vector<4x256xf32> to vector<1x256xf32>
    %673 = vector.broadcast %671 : vector<4x1xf32> to vector<4x256xf32>
    %674 = vector.broadcast %672 : vector<1x256xf32> to vector<4x256xf32>
    %675 = arith.mulf %673, %674 : vector<4x256xf32>
    %676 = arith.addf %670, %675 : vector<4x256xf32>
    %677 = vector.extract_strided_slice %658 {offsets = [0, 3], sizes = [4, 1], strides = [1, 1]} : vector<4x4xf32> to vector<4x1xf32>
    %678 = vector.extract_strided_slice %657 {offsets = [3, 0], sizes = [1, 256], strides = [1, 1]} : vector<4x256xf32> to vector<1x256xf32>
    %679 = vector.broadcast %677 : vector<4x1xf32> to vector<4x256xf32>
    %680 = vector.broadcast %678 : vector<1x256xf32> to vector<4x256xf32>
    %681 = arith.mulf %679, %680 : vector<4x256xf32>
    %682 = arith.addf %676, %681 : vector<4x256xf32>
    %683 = vector.broadcast %659 : vector<4x1xf32> to vector<4x256xf32>
    %684 = arith.addf %682, %683 : vector<4x256xf32>
    %685 = arith.addf %460, %684 : vector<4x256xf32>
    %686 = arith.addf %685, %1 : vector<4x256xf32>
    %c0_408 = arith.constant 0 : index
    %c0_409 = arith.constant 0 : index
    %c0_410 = arith.constant 0 : index
    %687 = vector.load %arg16[%c0_408, %c0_409, %c0_410] : memref<1x4x256xf32, #tpu.memory_space<vmem>>, vector<1x4x256xf32>
    %688 = vector.shape_cast %687 : vector<1x4x256xf32> to vector<4x256xf32>
    %689 = vector.shape_cast %686 : vector<4x256xf32> to vector<1x4x256xf32>
    tpu.vector_store %arg16[%c0_408, %c0_409, %c0_410], %689 {strides = array<i32>} : memref<1x4x256xf32, #tpu.memory_space<vmem>>, vector<1x4x256xf32>,
    return
  }
  func.func @transform_0(%arg0: i32) -> (i32, i32, i32, i32, i32) {
    %c0_i32 = arith.constant 0 : i32
    %c0_i32_0 = arith.constant 0 : i32
    %c0_i32_1 = arith.constant 0 : i32
    %c0_i32_2 = arith.constant 0 : i32
    %c0_i32_3 = arith.constant 0 : i32
    return %arg0, %c0_i32, %c0_i32_0, %c0_i32_1, %c0_i32_2 : i32, i32, i32, i32, i32
  }
  func.func @transform_1(%arg0: i32) -> (i32, i32, i32) {
    %c0_i32 = arith.constant 0 : i32
    %c0_i32_0 = arith.constant 0 : i32
    %c0_i32_1 = arith.constant 0 : i32
    return %arg0, %c0_i32, %c0_i32_0 : i32, i32, i32
  }
  func.func @transform_2(%arg0: i32) -> (i32, i32, i32, i32) {
    %c0_i32 = arith.constant 0 : i32
    %c0_i32_0 = arith.constant 0 : i32
    %c0_i32_1 = arith.constant 0 : i32
    %c0_i32_2 = arith.constant 0 : i32
    %c0_i32_3 = arith.constant 0 : i32
    return %c0_i32, %c0_i32_0, %c0_i32_1, %c0_i32_2 : i32, i32, i32, i32
  }
  func.func @transform_3(%arg0: i32) -> (i32, i32) {
    %c0_i32 = arith.constant 0 : i32
    %c0_i32_0 = arith.constant 0 : i32
    %c0_i32_1 = arith.constant 0 : i32
    return %c0_i32, %c0_i32_0 : i32, i32
  }
  func.func @transform_4(%arg0: i32) -> (i32, i32) {
    %c0_i32 = arith.constant 0 : i32
    %c0_i32_0 = arith.constant 0 : i32
    %c0_i32_1 = arith.constant 0 : i32
    return %c0_i32, %c0_i32_0 : i32, i32
  }
  func.func @transform_5(%arg0: i32) -> (i32, i32) {
    %c0_i32 = arith.constant 0 : i32
    %c0_i32_0 = arith.constant 0 : i32
    %c0_i32_1 = arith.constant 0 : i32
    return %c0_i32, %c0_i32_0 : i32, i32
  }
  func.func @transform_6(%arg0: i32) -> (i32, i32) {
    %c0_i32 = arith.constant 0 : i32
    %c0_i32_0 = arith.constant 0 : i32
    %c0_i32_1 = arith.constant 0 : i32
    return %c0_i32, %c0_i32_0 : i32, i32
  }
  func.func @transform_7(%arg0: i32) -> (i32, i32) {
    %c0_i32 = arith.constant 0 : i32
    %c0_i32_0 = arith.constant 0 : i32
    %c0_i32_1 = arith.constant 0 : i32
    return %c0_i32, %c0_i32_0 : i32, i32
  }
  func.func @transform_8(%arg0: i32) -> (i32, i32) {
    %c0_i32 = arith.constant 0 : i32
    %c0_i32_0 = arith.constant 0 : i32
    %c0_i32_1 = arith.constant 0 : i32
    return %c0_i32, %c0_i32_0 : i32, i32
  }
  func.func @transform_9(%arg0: i32) -> (i32, i32) {
    %c0_i32 = arith.constant 0 : i32
    %c0_i32_0 = arith.constant 0 : i32
    %c0_i32_1 = arith.constant 0 : i32
    return %c0_i32, %c0_i32_0 : i32, i32
  }
  func.func @transform_10(%arg0: i32) -> (i32, i32) {
    %c0_i32 = arith.constant 0 : i32
    %c0_i32_0 = arith.constant 0 : i32
    %c0_i32_1 = arith.constant 0 : i32
    return %c0_i32, %c0_i32_0 : i32, i32
  }
  func.func @transform_11(%arg0: i32) -> (i32, i32) {
    %c0_i32 = arith.constant 0 : i32
    %c0_i32_0 = arith.constant 0 : i32
    %c0_i32_1 = arith.constant 0 : i32
    return %c0_i32, %c0_i32_0 : i32, i32
  }
  func.func @transform_12(%arg0: i32) -> (i32, i32) {
    %c0_i32 = arith.constant 0 : i32
    %c0_i32_0 = arith.constant 0 : i32
    %c0_i32_1 = arith.constant 0 : i32
    return %c0_i32, %c0_i32_0 : i32, i32
  }
  func.func @transform_13(%arg0: i32) -> (i32, i32) {
    %c0_i32 = arith.constant 0 : i32
    %c0_i32_0 = arith.constant 0 : i32
    %c0_i32_1 = arith.constant 0 : i32
    return %c0_i32, %c0_i32_0 : i32, i32
  }
  func.func @transform_14(%arg0: i32) -> (i32, i32, i32) {
    %c0_i32 = arith.constant 0 : i32
    %c0_i32_0 = arith.constant 0 : i32
    %c0_i32_1 = arith.constant 0 : i32
    %c0_i32_2 = arith.constant 0 : i32
    return %c0_i32, %c0_i32_0, %c0_i32_1 : i32, i32, i32
  }
  func.func @transform_15(%arg0: i32) -> (i32, i32, i32) {
    %c0_i32 = arith.constant 0 : i32
    %c0_i32_0 = arith.constant 0 : i32
    %c0_i32_1 = arith.constant 0 : i32
    return %arg0, %c0_i32, %c0_i32_0 : i32, i32, i32
  }
}

</mosaic_0001>

<llo_original>
// kernel: pixel_unshuffled_block_forward.1
$region0: #{pixel_unshuffled_block_forward.1}
  #allocation0 [shape = 'u32[]', space=smem, size = 0x4, offset = 0x4, fixed_abs, tag = 'smem constant byte address 0x4 - core index']
  #allocation1 [shape = 'u32[144,128]{1,0:T(1,128)}', space=vmem, size = 0x12000, scoped, tag = 'internal scratch']
  %s0 = inlined_call_operand.vmem [shape: f32[2,4,4,4,16], index: 0, kind: input, shape index: {}]
  %s1 = inlined_call_operand.vmem [shape: f32[2,4,256], index: 1, kind: input, shape index: {}]
  %s2 = inlined_call_operand.vmem [shape: f32[4,16,4,256], index: 2, kind: input, shape index: {}]
  %s3 = inlined_call_operand.vmem [shape: f32[4,256], index: 3, kind: input, shape index: {}]
  %s4 = inlined_call_operand.vmem [shape: f32[4,4], index: 4, kind: input, shape index: {}]
  %s5 = inlined_call_operand.vmem [shape: f32[4,1], index: 5, kind: input, shape index: {}]
  %s6 = inlined_call_operand.vmem [shape: f32[4,9], index: 6, kind: input, shape index: {}]
  %s7 = inlined_call_operand.vmem [shape: f32[4,1], index: 7, kind: input, shape index: {}]
  %s8 = inlined_call_operand.vmem [shape: f32[4,4], index: 8, kind: input, shape index: {}]
  %s9 = inlined_call_operand.vmem [shape: f32[4,1], index: 9, kind: input, shape index: {}]
  %s10 = inlined_call_operand.vmem [shape: f32[4,9], index: 10, kind: input, shape index: {}]
  %s11 = inlined_call_operand.vmem [shape: f32[4,1], index: 11, kind: input, shape index: {}]
  %s12 = inlined_call_operand.vmem [shape: f32[4,4], index: 12, kind: input, shape index: {}]
  %s13 = inlined_call_operand.vmem [shape: f32[4,1], index: 13, kind: input, shape index: {}]
  %s14 = inlined_call_operand.vmem [shape: f32[9,1,256], index: 14, kind: input, shape index: {}]
  %s15 = inlined_call_operand.vmem [shape: f32[2,4,256], index: 15, kind: output, shape index: {}]
  %s16 = sld [smem:[#allocation0]]
  $region93: #{pixel_unshuffled_block_forward.1} parent=0
    _
  %s18 = ssub.s32 1, %s16
  %s19 = scalar_select 0, %s18, %s16
  loop: start=0, step=1, limit=4
  $region2: #{pixel_unshuffled_block_forward.1} parent=0 // loop_pre_header
    _
  $region3: #{pixel_unshuffled_block_forward.1} parent=0 // loop_header
    %s21 = sphi 0, %s25
    %p22 = scmp.ge.s32.totalorder %s21, 4
    %s31 = sphi 0, %s33
    %s34 = sphi 0, %s31
    %s35 = sphi 0, %s34
    %s51 = sphi 0, %s35
    %s57 = sphi 0, %s59
    %s60 = sphi 0, %s57
    %s61 = sphi 0, %s60
    %s77 = sphi 0, %s61
    %s81 = sphi 0, %s81
    %s83 = sphi 0, %s81
    %s84 = sphi 0, %s83
    %s98 = sphi 0, %s84
    %s102 = sphi 0, %s102
    %s104 = sphi 0, %s102
    %s105 = sphi 0, %s104
    %s119 = sphi 0, %s105
    %s123 = sphi 0, %s123
    %s125 = sphi 0, %s123
    %s126 = sphi 0, %s125
    %s140 = sphi 0, %s126
    %s144 = sphi 0, %s144
    %s146 = sphi 0, %s144
    %s147 = sphi 0, %s146
    %s161 = sphi 0, %s147
    %s165 = sphi 0, %s165
    %s167 = sphi 0, %s165
    %s168 = sphi 0, %s167
    %s182 = sphi 0, %s168
    %s186 = sphi 0, %s186
    %s188 = sphi 0, %s186
    %s189 = sphi 0, %s188
    %s203 = sphi 0, %s189
    %s207 = sphi 0, %s207
    %s209 = sphi 0, %s207
    %s210 = sphi 0, %s209
    %s224 = sphi 0, %s210
    %s228 = sphi 0, %s228
    %s230 = sphi 0, %s228
    %s231 = sphi 0, %s230
    %s245 = sphi 0, %s231
    %s249 = sphi 0, %s249
    %s251 = sphi 0, %s249
    %s252 = sphi 0, %s251
    %s266 = sphi 0, %s252
    %s270 = sphi 0, %s270
    %s272 = sphi 0, %s270
    %s273 = sphi 0, %s272
    %s287 = sphi 0, %s273
    %s291 = sphi 0, %s291
    %s293 = sphi 0, %s291
    %s294 = sphi 0, %s293
    %s308 = sphi 0, %s294
    %s312 = sphi 0, %s312
    %s314 = sphi 0, %s312
    %s315 = sphi 0, %s314
    %s329 = sphi 0, %s315
    %s333 = sphi 0, %s333
    %s335 = sphi 0, %s333
    %s336 = sphi 0, %s335
    %s350 = sphi 0, %s336
    %s356 = sphi 0, %s358
    %s359 = sphi 0, %s356
    %s360 = sphi 0, %s359
    %s376 = sphi 0, %s360
  $region4: #{pixel_unshuffled_block_forward.1} parent=0 // loop_header_branch
    %24 = sbr.rel (%p22) target = $region8
  $region5: #{pixel_unshuffled_block_forward.1} parent=0 // loop_body
    %s26 = ssub.s32 %s21, 1
    %s27 = ssub.s32 %s21, 2
    %s28 = sadd.s32 %s21, 1
    %s29 = ssub.s32 %s21, %s28
    %p30 = scmp.eq.s32.totalorder %s29, 0
    %s32 = sadd.s32 %s31, 1
    %s33 = scalar_select %p30, %s31, %s32
    %p36 = pneg %p30
    %p37 = scmp.eq.s32.totalorder %s21, 1
    %p38 = por %p36, %p37
    %p39 = scmp.ne.s32.totalorder %s31, %s34
    %p40 = scmp.eq.s32.totalorder %s21, 0
    %p41 = por %p39, %p40
    %p42 = scmp.ne.s32.totalorder %s31, %s34
    %p43 = scmp.eq.s32.totalorder %s26, 1
    %p44 = por %p42, %p43
    %p45 = scmp.ne.s32.totalorder %s34, %s35
    %p46 = scmp.eq.s32.totalorder %s26, 0
    %p47 = por %p45, %p46
    %p48 = scmp.ne.s32.totalorder %s34, %s35
    %p49 = scmp.eq.s32.totalorder %s27, 1
    %p50 = por %p48, %p49
    %p52 = scmp.ne.s32.totalorder %s35, %s51
    %p53 = scmp.eq.s32.totalorder %s27, 0
    %p54 = por %p52, %p53
    %s55 = ssub.s32 %s21, %s28
    %p56 = scmp.eq.s32.totalorder %s55, 0
    %s58 = sadd.s32 %s57, 1
    %s59 = scalar_select %p56, %s57, %s58
    %p62 = pneg %p56
    %p63 = scmp.eq.s32.totalorder %s21, 1
    %p64 = por %p62, %p63
    %p65 = scmp.ne.s32.totalorder %s57, %s60
    %p66 = scmp.eq.s32.totalorder %s21, 0
    %p67 = por %p65, %p66
    %p68 = scmp.ne.s32.totalorder %s57, %s60
    %p69 = scmp.eq.s32.totalorder %s26, 1
    %p70 = por %p68, %p69
    %p71 = scmp.ne.s32.totalorder %s60, %s61
    %p72 = scmp.eq.s32.totalorder %s26, 0
    %p73 = por %p71, %p72
    %p74 = scmp.ne.s32.totalorder %s60, %s61
    %p75 = scmp.eq.s32.totalorder %s27, 1
    %p76 = por %p74, %p75
    %p78 = scmp.ne.s32.totalorder %s61, %s77
    %p79 = scmp.eq.s32.totalorder %s27, 0
    %p80 = por %p78, %p79
    %s82 = sadd.s32 %s81, 1
    %p85 = scmp.eq.s32.totalorder %s21, 1
    %p86 = scmp.ne.s32.totalorder %s81, %s83
    %p87 = scmp.eq.s32.totalorder %s21, 0
    %p88 = por %p86, %p87
    %p89 = scmp.ne.s32.totalorder %s81, %s83
    %p90 = scmp.eq.s32.totalorder %s26, 1
    %p91 = por %p89, %p90
    %p92 = scmp.ne.s32.totalorder %s83, %s84
    %p93 = scmp.eq.s32.totalorder %s26, 0
    %p94 = por %p92, %p93
    %p95 = scmp.ne.s32.totalorder %s83, %s84
    %p96 = scmp.eq.s32.totalorder %s27, 1
    %p97 = por %p95, %p96
    %p99 = scmp.ne.s32.totalorder %s84, %s98
    %p100 = scmp.eq.s32.totalorder %s27, 0
    %p101 = por %p99, %p100
    %s103 = sadd.s32 %s102, 1
    %p106 = scmp.eq.s32.totalorder %s21, 1
    %p107 = scmp.ne.s32.totalorder %s102, %s104
    %p108 = scmp.eq.s32.totalorder %s21, 0
    %p109 = por %p107, %p108
    %p110 = scmp.ne.s32.totalorder %s102, %s104
    %p111 = scmp.eq.s32.totalorder %s26, 1
    %p112 = por %p110, %p111
    %p113 = scmp.ne.s32.totalorder %s104, %s105
    %p114 = scmp.eq.s32.totalorder %s26, 0
    %p115 = por %p113, %p114
    %p116 = scmp.ne.s32.totalorder %s104, %s105
    %p117 = scmp.eq.s32.totalorder %s27, 1
    %p118 = por %p116, %p117
    %p120 = scmp.ne.s32.totalorder %s105, %s119
    %p121 = scmp.eq.s32.totalorder %s27, 0
    %p122 = por %p120, %p121
    %s124 = sadd.s32 %s123, 1
    %p127 = scmp.eq.s32.totalorder %s21, 1
    %p128 = scmp.ne.s32.totalorder %s123, %s125
    %p129 = scmp.eq.s32.totalorder %s21, 0
    %p130 = por %p128, %p129
    %p131 = scmp.ne.s32.totalorder %s123, %s125
    %p132 = scmp.eq.s32.totalorder %s26, 1
    %p133 = por %p131, %p132
    %p134 = scmp.ne.s32.totalorder %s125, %s126
    %p135 = scmp.eq.s32.totalorder %s26, 0
    %p136 = por %p134, %p135
    %p137 = scmp.ne.s32.totalorder %s125, %s126
    %p138 = scmp.eq.s32.totalorder %s27, 1
    %p139 = por %p137, %p138
    %p141 = scmp.ne.s32.totalorder %s126, %s140
    %p142 = scmp.eq.s32.totalorder %s27, 0
    %p143 = por %p141, %p142
    %s145 = sadd.s32 %s144, 1
    %p148 = scmp.eq.s32.totalorder %s21, 1
    %p149 = scmp.ne.s32.totalorder %s144, %s146
    %p150 = scmp.eq.s32.totalorder %s21, 0
    %p151 = por %p149, %p150
    %p152 = scmp.ne.s32.totalorder %s144, %s146
    %p153 = scmp.eq.s32.totalorder %s26, 1
    %p154 = por %p152, %p153
    %p155 = scmp.ne.s32.totalorder %s146, %s147
    %p156 = scmp.eq.s32.totalorder %s26, 0
    %p157 = por %p155, %p156
    %p158 = scmp.ne.s32.totalorder %s146, %s147
    %p159 = scmp.eq.s32.totalorder %s27, 1
    %p160 = por %p158, %p159
    %p162 = scmp.ne.s32.totalorder %s147, %s161
    %p163 = scmp.eq.s32.totalorder %s27, 0
    %p164 = por %p162, %p163
    %s166 = sadd.s32 %s165, 1
    %p169 = scmp.eq.s32.totalorder %s21, 1
    %p170 = scmp.ne.s32.totalorder %s165, %s167
    %p171 = scmp.eq.s32.totalorder %s21, 0
    %p172 = por %p170, %p171
    %p173 = scmp.ne.s32.totalorder %s165, %s167
    %p174 = scmp.eq.s32.totalorder %s26, 1
    %p175 = por %p173, %p174
    %p176 = scmp.ne.s32.totalorder %s167, %s168
    %p177 = scmp.eq.s32.totalorder %s26, 0
    %p178 = por %p176, %p177
    %p179 = scmp.ne.s32.totalorder %s167, %s168
    %p180 = scmp.eq.s32.totalorder %s27, 1
    %p181 = por %p179, %p180
    %p183 = scmp.ne.s32.totalorder %s168, %s182
    %p184 = scmp.eq.s32.totalorder %s27, 0
    %p185 = por %p183, %p184
    %s187 = sadd.s32 %s186, 1
    %p190 = scmp.eq.s32.totalorder %s21, 1
    %p191 = scmp.ne.s32.totalorder %s186, %s188
    %p192 = scmp.eq.s32.totalorder %s21, 0
    %p193 = por %p191, %p192
    %p194 = scmp.ne.s32.totalorder %s186, %s188
    %p195 = scmp.eq.s32.totalorder %s26, 1
    %p196 = por %p194, %p195
    %p197 = scmp.ne.s32.totalorder %s188, %s189
    %p198 = scmp.eq.s32.totalorder %s26, 0
    %p199 = por %p197, %p198
    %p200 = scmp.ne.s32.totalorder %s188, %s189
    %p201 = scmp.eq.s32.totalorder %s27, 1
    %p202 = por %p200, %p201
    %p204 = scmp.ne.s32.totalorder %s189, %s203
    %p205 = scmp.eq.s32.totalorder %s27, 0
    %p206 = por %p204, %p205
    %s208 = sadd.s32 %s207, 1
    %p211 = scmp.eq.s32.totalorder %s21, 1
    %p212 = scmp.ne.s32.totalorder %s207, %s209
    %p213 = scmp.eq.s32.totalorder %s21, 0
    %p214 = por %p212, %p213
    %p215 = scmp.ne.s32.totalorder %s207, %s209
    %p216 = scmp.eq.s32.totalorder %s26, 1
    %p217 = por %p215, %p216
    %p218 = scmp.ne.s32.totalorder %s209, %s210
    %p219 = scmp.eq.s32.totalorder %s26, 0
    %p220 = por %p218, %p219
    %p221 = scmp.ne.s32.totalorder %s209, %s210
    %p222 = scmp.eq.s32.totalorder %s27, 1
    %p223 = por %p221, %p222
    %p225 = scmp.ne.s32.totalorder %s210, %s224
    %p226 = scmp.eq.s32.totalorder %s27, 0
    %p227 = por %p225, %p226
    %s229 = sadd.s32 %s228, 1
    %p232 = scmp.eq.s32.totalorder %s21, 1
    %p233 = scmp.ne.s32.totalorder %s228, %s230
    %p234 = scmp.eq.s32.totalorder %s21, 0
    %p235 = por %p233, %p234
    %p236 = scmp.ne.s32.totalorder %s228, %s230
    %p237 = scmp.eq.s32.totalorder %s26, 1
    %p238 = por %p236, %p237
    %p239 = scmp.ne.s32.totalorder %s230, %s231
    %p240 = scmp.eq.s32.totalorder %s26, 0
    %p241 = por %p239, %p240
    %p242 = scmp.ne.s32.totalorder %s230, %s231
    %p243 = scmp.eq.s32.totalorder %s27, 1
    %p244 = por %p242, %p243
    %p246 = scmp.ne.s32.totalorder %s231, %s245
    %p247 = scmp.eq.s32.totalorder %s27, 0
    %p248 = por %p246, %p247
    %s250 = sadd.s32 %s249, 1
    %p253 = scmp.eq.s32.totalorder %s21, 1
    %p254 = scmp.ne.s32.totalorder %s249, %s251
    %p255 = scmp.eq.s32.totalorder %s21, 0
    %p256 = por %p254, %p255
    %p257 = scmp.ne.s32.totalorder %s249, %s251
    %p258 = scmp.eq.s32.totalorder %s26, 1
    %p259 = por %p257, %p258
    %p260 = scmp.ne.s32.totalorder %s251, %s252
    %p261 = scmp.eq.s32.totalorder %s26, 0
    %p262 = por %p260, %p261
    %p263 = scmp.ne.s32.totalorder %s251, %s252
    %p264 = scmp.eq.s32.totalorder %s27, 1
    %p265 = por %p263, %p264
    %p267 = scmp.ne.s32.totalorder %s252, %s266
    %p268 = scmp.eq.s32.totalorder %s27, 0
    %p269 = por %p267, %p268
    %s271 = sadd.s32 %s270, 1
    %p274 = scmp.eq.s32.totalorder %s21, 1
    %p275 = scmp.ne.s32.totalorder %s270, %s272
    %p276 = scmp.eq.s32.totalorder %s21, 0
    %p277 = por %p275, %p276
    %p278 = scmp.ne.s32.totalorder %s270, %s272
    %p279 = scmp.eq.s32.totalorder %s26, 1
    %p280 = por %p278, %p279
    %p281 = scmp.ne.s32.totalorder %s272, %s273
    %p282 = scmp.eq.s32.totalorder %s26, 0
    %p283 = por %p281, %p282
    %p284 = scmp.ne.s32.totalorder %s272, %s273
    %p285 = scmp.eq.s32.totalorder %s27, 1
    %p286 = por %p284, %p285
    %p288 = scmp.ne.s32.totalorder %s273, %s287
    %p289 = scmp.eq.s32.totalorder %s27, 0
    %p290 = por %p288, %p289
    %s292 = sadd.s32 %s291, 1
    %p295 = scmp.eq.s32.totalorder %s21, 1
    %p296 = scmp.ne.s32.totalorder %s291, %s293
    %p297 = scmp.eq.s32.totalorder %s21, 0
    %p298 = por %p296, %p297
    %p299 = scmp.ne.s32.totalorder %s291, %s293
    %p300 = scmp.eq.s32.totalorder %s26, 1
    %p301 = por %p299, %p300
    %p302 = scmp.ne.s32.totalorder %s293, %s294
    %p303 = scmp.eq.s32.totalorder %s26, 0
    %p304 = por %p302, %p303
    %p305 = scmp.ne.s32.totalorder %s293, %s294
    %p306 = scmp.eq.s32.totalorder %s27, 1
    %p307 = por %p305, %p306
    %p309 = scmp.ne.s32.totalorder %s294, %s308
    %p310 = scmp.eq.s32.totalorder %s27, 0
    %p311 = por %p309, %p310
    %s313 = sadd.s32 %s312, 1
    %p316 = scmp.eq.s32.totalorder %s21, 1
    %p317 = scmp.ne.s32.totalorder %s312, %s314
    %p318 = scmp.eq.s32.totalorder %s21, 0
    %p319 = por %p317, %p318
    %p320 = scmp.ne.s32.totalorder %s312, %s314
    %p321 = scmp.eq.s32.totalorder %s26, 1
    %p322 = por %p320, %p321
    %p323 = scmp.ne.s32.totalorder %s314, %s315
    %p324 = scmp.eq.s32.totalorder %s26, 0
    %p325 = por %p323, %p324
    %p326 = scmp.ne.s32.totalorder %s314, %s315
    %p327 = scmp.eq.s32.totalorder %s27, 1
    %p328 = por %p326, %p327
    %p330 = scmp.ne.s32.totalorder %s315, %s329
    %p331 = scmp.eq.s32.totalorder %s27, 0
    %p332 = por %p330, %p331
    %s334 = sadd.s32 %s333, 1
    %p337 = scmp.eq.s32.totalorder %s21, 1
    %p338 = scmp.ne.s32.totalorder %s333, %s335
    %p339 = scmp.eq.s32.totalorder %s21, 0
    %p340 = por %p338, %p339
    %p341 = scmp.ne.s32.totalorder %s333, %s335
    %p342 = scmp.eq.s32.totalorder %s26, 1
    %p343 = por %p341, %p342
    %p344 = scmp.ne.s32.totalorder %s335, %s336
    %p345 = scmp.eq.s32.totalorder %s26, 0
    %p346 = por %p344, %p345
    %p347 = scmp.ne.s32.totalorder %s335, %s336
    %p348 = scmp.eq.s32.totalorder %s27, 1
    %p349 = por %p347, %p348
    %p351 = scmp.ne.s32.totalorder %s336, %s350
    %p352 = scmp.eq.s32.totalorder %s27, 0
    %p353 = por %p351, %p352
    %s354 = ssub.s32 %s21, %s28
    %p355 = scmp.eq.s32.totalorder %s354, 0
    %s357 = sadd.s32 %s356, 1
    %s358 = scalar_select %p355, %s356, %s357
    %p361 = pneg %p355
    %p362 = scmp.eq.s32.totalorder %s21, 1
    %p363 = por %p361, %p362
    %p364 = scmp.ne.s32.totalorder %s356, %s359
    %p365 = scmp.eq.s32.totalorder %s21, 0
    %p366 = por %p364, %p365
    %p367 = scmp.ne.s32.totalorder %s356, %s359
    %p368 = scmp.eq.s32.totalorder %s26, 1
    %p369 = por %p367, %p368
    %p370 = scmp.ne.s32.totalorder %s359, %s360
    %p371 = scmp.eq.s32.totalorder %s26, 0
    %p372 = por %p370, %p371
    %p373 = scmp.ne.s32.totalorder %s359, %s360
    %p374 = scmp.eq.s32.totalorder %s27, 1
    %p375 = por %p373, %p374
    %p377 = scmp.ne.s32.totalorder %s360, %s376
    %p378 = scmp.eq.s32.totalorder %s27, 0
    %p379 = por %p377, %p378
    %p380 = scmp.le.s32.totalorder 1, %s21
    %p381 = scmp.lt.s32.totalorder %s21, 3
    %p382 = pnand %p380, %p381
    %p383 = pneg %p382
    // Predicated region
    $region9: #{pixel_unshuffled_block_forward.1} parent=5 // pred_check
      _
    $region10: #{pixel_unshuffled_block_forward.1} parent=5 // pred_check_branch
      %385 = sbr.rel (%p382) target = $region12
    $region11: #{pixel_unshuffled_block_forward.1} parent=5 // pred_region
      %s386 = ssub.s32 %s21, 1
      // Predicated region
      $region13: #{pixel_unshuffled_block_forward.1} parent=11 // pred_check
        %p387 = pneg %p94
      $region14: #{pixel_unshuffled_block_forward.1} parent=11 // pred_check_branch
        %389 = sbr.rel (%p387) target = $region16
      $region15: #{pixel_unshuffled_block_forward.1} parent=11 // pred_region
        _
      $region16: #{pixel_unshuffled_block_forward.1} parent=11 // pred_fallthru
        _
      // Predicated region
      $region17: #{pixel_unshuffled_block_forward.1} parent=11 // pred_check
        %p390 = pneg %p115
      $region18: #{pixel_unshuffled_block_forward.1} parent=11 // pred_check_branch
        %392 = sbr.rel (%p390) target = $region20
      $region19: #{pixel_unshuffled_block_forward.1} parent=11 // pred_region
        _
      $region20: #{pixel_unshuffled_block_forward.1} parent=11 // pred_fallthru
        _
      // Predicated region
      $region21: #{pixel_unshuffled_block_forward.1} parent=11 // pred_check
        %p393 = pneg %p136
      $region22: #{pixel_unshuffled_block_forward.1} parent=11 // pred_check_branch
        %395 = sbr.rel (%p393) target = $region24
      $region23: #{pixel_unshuffled_block_forward.1} parent=11 // pred_region
        _
      $region24: #{pixel_unshuffled_block_forward.1} parent=11 // pred_fallthru
        _
      // Predicated region
      $region25: #{pixel_unshuffled_block_forward.1} parent=11 // pred_check
        %p396 = pneg %p157
      $region26: #{pixel_unshuffled_block_forward.1} parent=11 // pred_check_branch
        %398 = sbr.rel (%p396) target = $region28
      $region27: #{pixel_unshuffled_block_forward.1} parent=11 // pred_region
        _
      $region28: #{pixel_unshuffled_block_forward.1} parent=11 // pred_fallthru
        _
      // Predicated region
      $region29: #{pixel_unshuffled_block_forward.1} parent=11 // pred_check
        %p399 = pneg %p178
      $region30: #{pixel_unshuffled_block_forward.1} parent=11 // pred_check_branch
        %401 = sbr.rel (%p399) target = $region32
      $region31: #{pixel_unshuffled_block_forward.1} parent=11 // pred_region
        _
      $region32: #{pixel_unshuffled_block_forward.1} parent=11 // pred_fallthru
        _
      // Predicated region
      $region33: #{pixel_unshuffled_block_forward.1} parent=11 // pred_check
        %p402 = pneg %p199
      $region34: #{pixel_unshuffled_block_forward.1} parent=11 // pred_check_branch
        %404 = sbr.rel (%p402) target = $region36
      $region35: #{pixel_unshuffled_block_forward.1} parent=11 // pred_region
        _
      $region36: #{pixel_unshuffled_block_forward.1} parent=11 // pred_fallthru
        _
      // Predicated region
      $region37: #{pixel_unshuffled_block_forward.1} parent=11 // pred_check
        %p405 = pneg %p220
      $region38: #{pixel_unshuffled_block_forward.1} parent=11 // pred_check_branch
        %407 = sbr.rel (%p405) target = $region40
      $region39: #{pixel_unshuffled_block_forward.1} parent=11 // pred_region
        _
      $region40: #{pixel_unshuffled_block_forward.1} parent=11 // pred_fallthru
        _
      // Predicated region
      $region41: #{pixel_unshuffled_block_forward.1} parent=11 // pred_check
        %p408 = pneg %p241
      $region42: #{pixel_unshuffled_block_forward.1} parent=11 // pred_check_branch
        %410 = sbr.rel (%p408) target = $region44
      $region43: #{pixel_unshuffled_block_forward.1} parent=11 // pred_region
        _
      $region44: #{pixel_unshuffled_block_forward.1} parent=11 // pred_fallthru
        _
      // Predicated region
      $region45: #{pixel_unshuffled_block_forward.1} parent=11 // pred_check
        %p411 = pneg %p262
      $region46: #{pixel_unshuffled_block_forward.1} parent=11 // pred_check_branch
        %413 = sbr.rel (%p411) target = $region48
      $region47: #{pixel_unshuffled_block_forward.1} parent=11 // pred_region
        _
      $region48: #{pixel_unshuffled_block_forward.1} parent=11 // pred_fallthru
        _
      // Predicated region
      $region49: #{pixel_unshuffled_block_forward.1} parent=11 // pred_check
        %p414 = pneg %p283
      $region50: #{pixel_unshuffled_block_forward.1} parent=11 // pred_check_branch
        %416 = sbr.rel (%p414) target = $region52
      $region51: #{pixel_unshuffled_block_forward.1} parent=11 // pred_region
        _
      $region52: #{pixel_unshuffled_block_forward.1} parent=11 // pred_fallthru
        _
      // Predicated region
      $region53: #{pixel_unshuffled_block_forward.1} parent=11 // pred_check
        %p417 = pneg %p304
      $region54: #{pixel_unshuffled_block_forward.1} parent=11 // pred_check_branch
        %419 = sbr.rel (%p417) target = $region56
      $region55: #{pixel_unshuffled_block_forward.1} parent=11 // pred_region
        _
      $region56: #{pixel_unshuffled_block_forward.1} parent=11 // pred_fallthru
        _
      // Predicated region
      $region57: #{pixel_unshuffled_block_forward.1} parent=11 // pred_check
        %p420 = pneg %p325
      $region58: #{pixel_unshuffled_block_forward.1} parent=11 // pred_check_branch
        %422 = sbr.rel (%p420) target = $region60
      $region59: #{pixel_unshuffled_block_forward.1} parent=11 // pred_region
        _
      $region60: #{pixel_unshuffled_block_forward.1} parent=11 // pred_fallthru
        _
      // Predicated region
      $region61: #{pixel_unshuffled_block_forward.1} parent=11 // pred_check
        %p423 = pneg %p346
      $region62: #{pixel_unshuffled_block_forward.1} parent=11 // pred_check_branch
        %425 = sbr.rel (%p423) target = $region64
      $region63: #{pixel_unshuffled_block_forward.1} parent=11 // pred_region
        _
      $region64: #{pixel_unshuffled_block_forward.1} parent=11 // pred_fallthru
        _
    $region12: #{pixel_unshuffled_block_forward.1} parent=5 // pred_fallthru
      _
    %p426 = scmp.lt.s32.totalorder %s21, 2
    // Predicated region
    $region65: #{pixel_unshuffled_block_forward.1} parent=5 // pred_check
      %p427 = pneg %p426
    $region66: #{pixel_unshuffled_block_forward.1} parent=5 // pred_check_branch
      %429 = sbr.rel (%p427) target = $region68
    $region67: #{pixel_unshuffled_block_forward.1} parent=5 // pred_region
      // Predicated region
      $region69: #{pixel_unshuffled_block_forward.1} parent=67 // pred_check
        %p430 = pneg %p41
      $region70: #{pixel_unshuffled_block_forward.1} parent=67 // pred_check_branch
        %432 = sbr.rel (%p430) target = $region72
      $region71: #{pixel_unshuffled_block_forward.1} parent=67 // pred_region
        %p433 = scmp.lt.s32.totalorder %s21, 1
        %s434 = scalar_select %p433, %s21, 1
        %s435 = smul.addr %s434, 16
        %s436 = smul.addr %s435, 4
        %s437 = scalar_lea.vmem %s0, %s436
      $region72: #{pixel_unshuffled_block_forward.1} parent=67 // pred_fallthru
        _
      // Predicated region
      $region73: #{pixel_unshuffled_block_forward.1} parent=67 // pred_check
        %p438 = pneg %p67
      $region74: #{pixel_unshuffled_block_forward.1} parent=67 // pred_check_branch
        %440 = sbr.rel (%p438) target = $region76
      $region75: #{pixel_unshuffled_block_forward.1} parent=67 // pred_region
        %p441 = scmp.lt.s32.totalorder %s21, 1
        %s442 = scalar_select %p441, %s21, 1
        %s443 = smul.addr %s442, 2
        %s444 = smul.addr %s443, 4
        %s445 = scalar_lea.vmem %s1, %s444
      $region76: #{pixel_unshuffled_block_forward.1} parent=67 // pred_fallthru
        _
    $region68: #{pixel_unshuffled_block_forward.1} parent=5 // pred_fallthru
      _
    %p446 = scmp.le.s32.totalorder 1, %s21
    %p447 = scmp.lt.s32.totalorder %s21, 3
    %p448 = pnand %p446, %p447
    %p449 = pneg %p448
    // Predicated region
    $region77: #{pixel_unshuffled_block_forward.1} parent=5 // pred_check
      _
    $region78: #{pixel_unshuffled_block_forward.1} parent=5 // pred_check_branch
      %451 = sbr.rel (%p448) target = $region80
    $region79: #{pixel_unshuffled_block_forward.1} parent=5 // pred_region
      %s452 = ssub.s32 %s21, 1
      %p453 = scmp.lt.s32.totalorder %s26, 1
      %s454 = scalar_select %p453, %s26, 1
      %s455 = smul.addr %s454, 16
      %s456 = smul.addr %s455, 4
      %s457 = scalar_lea.vmem %s0, %s456
      %p458 = pneg %p47
      %p459 = pneg %p44
      %p460 = scmp.lt.s32.totalorder %s26, 1
      %s461 = scalar_select %p460, %s26, 1
      %s462 = smul.addr %s461, 2
      %s463 = smul.addr %s462, 4
      %s464 = scalar_lea.vmem %s1, %s463
      %p465 = pneg %p73
      %p466 = pneg %p70
      %p467 = pneg %p94
      %p468 = pneg %p91
      %p469 = pneg %p115
      %p470 = pneg %p112
      %p471 = pneg %p136
      %p472 = pneg %p133
      %p473 = pneg %p157
      %p474 = pneg %p154
      %p475 = pneg %p178
      %p476 = pneg %p175
      %p477 = pneg %p199
      %p478 = pneg %p196
      %p479 = pneg %p220
      %p480 = pneg %p217
      %p481 = pneg %p241
      %p482 = pneg %p238
      %p483 = pneg %p262
      %p484 = pneg %p259
      %p485 = pneg %p283
      %p486 = pneg %p280
      %p487 = pneg %p304
      %p488 = pneg %p301
      %p489 = pneg %p325
      %p490 = pneg %p322
      %p491 = pneg %p346
      %p492 = pneg %p343
      %p493 = pneg %p372
      %p494 = pneg %p369
      %p495 = scmp.lt.s32.totalorder %s26, 1
      %s496 = scalar_select %p495, %s26, 1
      %s497 = smul.addr %s496, 2
      %s498 = smul.addr %s497, 4
      %s499 = scalar_lea.vmem %s15, %s498
      %p500 = scmp.lt.s32.totalorder %s26, 1
      %s501 = scalar_select %p500, %s26, 1
      %s502 = smul.addr %s501, 16
      %s503 = smul.addr %s502, 4
      %s504 = scalar_lea.vmem %s0, %s503
      %p505 = scmp.lt.s32.totalorder %s26, 1
      %s506 = scalar_select %p505, %s26, 1
      %s507 = smul.addr %s506, 2
      %s508 = smul.addr %s507, 4
      %s509 = scalar_lea.vmem %s1, %s508
      %p510 = scmp.lt.s32.totalorder %s26, 1
      %s511 = scalar_select %p510, %s26, 1
      %s512 = smul.addr %s511, 2
      %s513 = smul.addr %s512, 4
      %s514 = scalar_lea.vmem %s15, %s513
      %v515 = vld [vmem:[%s509] sm:$0xff]
      %v516 = vld [vmem:[%s3] sm:$0xff]
      %v517 = vld [vmem:[%s504] sm:$0xf]
      %s518 = scalar_lea.vmem %s504, 16
      %v519 = vld [vmem:[%s518] sm:$0xf]
      %v520 = vmax.f32 %v517, %v519
      %s521 = scalar_lea.vmem %s504, 32
      %v522 = vld [vmem:[%s521] sm:$0xf]
      %s523 = scalar_lea.vmem %s504, 48
      %v524 = vld [vmem:[%s523] sm:$0xf]
      %v525 = vmax.f32 %v522, %v524
      %v526 = vmax.f32 %v520, %v525
      %v527 = vld [vmem:[%s2] sm:$0xff]
      %529 = vset.pattern.permute.xlu0 0
      %530 = vperm.xlu0 %529, %v526
      %v531 = vpop.permute.xlu0 %530
      %v534 = vcombine.high %v527, %v527
      %v536 = vmul.f32 %v531, %v527
      %v537 = vmul.f32 %v531, %v534
      %v540 = vcombine.low %v536, %v537
      %v542 = vadd.f32 %v516, %v540
      %s543 = scalar_lea.vmem %s2, 8
      %v544 = vld [vmem:[%s543] sm:$0xff]
      %545 = vset.pattern.permute.xlu0 1
      %546 = vperm.xlu0 %545, %v526
      %v547 = vpop.permute.xlu0 %546
      %v550 = vcombine.high %v544, %v544
      %v552 = vmul.f32 %v547, %v544
      %v553 = vmul.f32 %v547, %v550
      %v556 = vcombine.low %v552, %v553
      %v558 = vadd.f32 %v542, %v556
      %s559 = scalar_lea.vmem %s2, 16
      %v560 = vld [vmem:[%s559] sm:$0xff]
      %561 = vset.pattern.permute.xlu0 2
      %562 = vperm.xlu0 %561, %v526
      %v563 = vpop.permute.xlu0 %562
      %v566 = vcombine.high %v560, %v560
      %v568 = vmul.f32 %v563, %v560
      %v569 = vmul.f32 %v563, %v566
      %v572 = vcombine.low %v568, %v569
      %v574 = vadd.f32 %v558, %v572
      %s575 = scalar_lea.vmem %s2, 24
      %v576 = vld [vmem:[%s575] sm:$0xff]
      %577 = vset.pattern.permute.xlu0 3
      %578 = vperm.xlu0 %577, %v526
      %v579 = vpop.permute.xlu0 %578
      %v582 = vcombine.high %v576, %v576
      %v584 = vmul.f32 %v579, %v576
      %v585 = vmul.f32 %v579, %v582
      %v588 = vcombine.low %v584, %v585
      %v590 = vadd.f32 %v574, %v588
      %s591 = scalar_lea.vmem %s2, 32
      %v592 = vld [vmem:[%s591] sm:$0xff]
      %593 = vset.pattern.permute.xlu0 4
      %594 = vperm.xlu0 %593, %v526
      %v595 = vpop.permute.xlu0 %594
      %v598 = vcombine.high %v592, %v592
      %v600 = vmul.f32 %v595, %v592
      %v601 = vmul.f32 %v595, %v598
      %v604 = vcombine.low %v600, %v601
      %v606 = vadd.f32 %v590, %v604
      %s607 = scalar_lea.vmem %s2, 40
      %v608 = vld [vmem:[%s607] sm:$0xff]
      %609 = vset.pattern.permute.xlu0 5
      %610 = vperm.xlu0 %609, %v526
      %v611 = vpop.permute.xlu0 %610
      %v614 = vcombine.high %v608, %v608
      %v616 = vmul.f32 %v611, %v608
      %v617 = vmul.f32 %v611, %v614
      %v620 = vcombine.low %v616, %v617
      %v622 = vadd.f32 %v606, %v620
      %s623 = scalar_lea.vmem %s2, 48
      %v624 = vld [vmem:[%s623] sm:$0xff]
      %625 = vset.pattern.permute.xlu0 6
      %626 = vperm.xlu0 %625, %v526
      %v627 = vpop.permute.xlu0 %626
      %v630 = vcombine.high %v624, %v624
      %v632 = vmul.f32 %v627, %v624
      %v633 = vmul.f32 %v627, %v630
      %v636 = vcombine.low %v632, %v633
      %v638 = vadd.f32 %v622, %v636
      %s639 = scalar_lea.vmem %s2, 56
      %v640 = vld [vmem:[%s639] sm:$0xff]
      %641 = vset.pattern.permute.xlu0 7
      %642 = vperm.xlu0 %641, %v526
      %v643 = vpop.permute.xlu0 %642
      %v646 = vcombine.high %v640, %v640
      %v648 = vmul.f32 %v643, %v640
      %v649 = vmul.f32 %v643, %v646
      %v652 = vcombine.low %v648, %v649
      %v654 = vadd.f32 %v638, %v652
      %s655 = scalar_lea.vmem %s2, 64
      %v656 = vld [vmem:[%s655] sm:$0xff]
      %657 = vset.pattern.permute.xlu0 8
      %658 = vperm.xlu0 %657, %v526
      %v659 = vpop.permute.xlu0 %658
      %v662 = vcombine.high %v656, %v656
      %v664 = vmul.f32 %v659, %v656
      %v665 = vmul.f32 %v659, %v662
      %v668 = vcombine.low %v664, %v665
      %v670 = vadd.f32 %v654, %v668
      %s671 = scalar_lea.vmem %s2, 72
      %v672 = vld [vmem:[%s671] sm:$0xff]
      %673 = vset.pattern.permute.xlu0 9
      %674 = vperm.xlu0 %673, %v526
      %v675 = vpop.permute.xlu0 %674
      %v678 = vcombine.high %v672, %v672
      %v680 = vmul.f32 %v675, %v672
      %v681 = vmul.f32 %v675, %v678
      %v684 = vcombine.low %v680, %v681
      %v686 = vadd.f32 %v670, %v684
      %s687 = scalar_lea.vmem %s2, 80
      %v688 = vld [vmem:[%s687] sm:$0xff]
      %689 = vset.pattern.permute.xlu0 10
      %690 = vperm.xlu0 %689, %v526
      %v691 = vpop.permute.xlu0 %690
      %v694 = vcombine.high %v688, %v688
      %v696 = vmul.f32 %v691, %v688
      %v697 = vmul.f32 %v691, %v694
      %v700 = vcombine.low %v696, %v697
      %v702 = vadd.f32 %v686, %v700
      %s703 = scalar_lea.vmem %s2, 88
      %v704 = vld [vmem:[%s703] sm:$0xff]
      %705 = vset.pattern.permute.xlu0 11
      %706 = vperm.xlu0 %705, %v526
      %v707 = vpop.permute.xlu0 %706
      %v710 = vcombine.high %v704, %v704
      %v712 = vmul.f32 %v707, %v704
      %v713 = vmul.f32 %v707, %v710
      %v716 = vcombine.low %v712, %v713
      %v718 = vadd.f32 %v702, %v716
      %s719 = scalar_lea.vmem %s2, 96
      %v720 = vld [vmem:[%s719] sm:$0xff]
      %721 = vset.pattern.permute.xlu0 12
      %722 = vperm.xlu0 %721, %v526
      %v723 = vpop.permute.xlu0 %722
      %v726 = vcombine.high %v720, %v720
      %v728 = vmul.f32 %v723, %v720
      %v729 = vmul.f32 %v723, %v726
      %v732 = vcombine.low %v728, %v729
      %v734 = vadd.f32 %v718, %v732
      %s735 = scalar_lea.vmem %s2, 104
      %v736 = vld [vmem:[%s735] sm:$0xff]
      %737 = vset.pattern.permute.xlu0 13
      %738 = vperm.xlu0 %737, %v526
      %v739 = vpop.permute.xlu0 %738
      %v742 = vcombine.high %v736, %v736
      %v744 = vmul.f32 %v739, %v736
      %v745 = vmul.f32 %v739, %v742
      %v748 = vcombine.low %v744, %v745
      %v750 = vadd.f32 %v734, %v748
      %s751 = scalar_lea.vmem %s2, 112
      %v752 = vld [vmem:[%s751] sm:$0xff]
      %753 = vset.pattern.permute.xlu0 14
      %754 = vperm.xlu0 %753, %v526
      %v755 = vpop.permute.xlu0 %754
      %v758 = vcombine.high %v752, %v752
      %v760 = vmul.f32 %v755, %v752
      %v761 = vmul.f32 %v755, %v758
      %v764 = vcombine.low %v760, %v761
      %v766 = vadd.f32 %v750, %v764
      %s767 = scalar_lea.vmem %s2, 120
      %v768 = vld [vmem:[%s767] sm:$0xff]
      %769 = vset.pattern.permute.xlu0 15
      %770 = vperm.xlu0 %769, %v526
      %v771 = vpop.permute.xlu0 %770
      %v774 = vcombine.high %v768, %v768
      %v776 = vmul.f32 %v771, %v768
      %v777 = vmul.f32 %v771, %v774
      %v780 = vcombine.low %v776, %v777
      %v782 = vadd.f32 %v766, %v780
      %s783 = scalar_lea.vmem %s504, 4
      %v784 = vld [vmem:[%s783] sm:$0xf]
      %s785 = scalar_lea.vmem %s504, 20
      %v786 = vld [vmem:[%s785] sm:$0xf]
      %v787 = vmax.f32 %v784, %v786
      %s788 = scalar_lea.vmem %s504, 36
      %v789 = vld [vmem:[%s788] sm:$0xf]
      %s790 = scalar_lea.vmem %s504, 52
      %v791 = vld [vmem:[%s790] sm:$0xf]
      %v792 = vmax.f32 %v789, %v791
      %v793 = vmax.f32 %v787, %v792
      %s794 = scalar_lea.vmem %s2, 128
      %v795 = vld [vmem:[%s794] sm:$0xff]
      %797 = vset.pattern.permute.xlu0 0
      %798 = vperm.xlu0 %797, %v793
      %v799 = vpop.permute.xlu0 %798
      %v802 = vcombine.high %v795, %v795
      %v804 = vmul.f32 %v799, %v795
      %v805 = vmul.f32 %v799, %v802
      %v808 = vcombine.low %v804, %v805
      %v810 = vadd.f32 %v782, %v808
      %s811 = scalar_lea.vmem %s2, 136
      %v812 = vld [vmem:[%s811] sm:$0xff]
      %813 = vset.pattern.permute.xlu0 1
      %814 = vperm.xlu0 %813, %v793
      %v815 = vpop.permute.xlu0 %814
      %v818 = vcombine.high %v812, %v812
      %v820 = vmul.f32 %v815, %v812
      %v821 = vmul.f32 %v815, %v818
      %v824 = vcombine.low %v820, %v821
      %v826 = vadd.f32 %v810, %v824
      %s827 = scalar_lea.vmem %s2, 144
      %v828 = vld [vmem:[%s827] sm:$0xff]
      %829 = vset.pattern.permute.xlu0 2
      %830 = vperm.xlu0 %829, %v793
      %v831 = vpop.permute.xlu0 %830
      %v834 = vcombine.high %v828, %v828
      %v836 = vmul.f32 %v831, %v828
      %v837 = vmul.f32 %v831, %v834
      %v840 = vcombine.low %v836, %v837
      %v842 = vadd.f32 %v826, %v840
      %s843 = scalar_lea.vmem %s2, 152
      %v844 = vld [vmem:[%s843] sm:$0xff]
      %845 = vset.pattern.permute.xlu0 3
      %846 = vperm.xlu0 %845, %v793
      %v847 = vpop.permute.xlu0 %846
      %v850 = vcombine.high %v844, %v844
      %v852 = vmul.f32 %v847, %v844
      %v853 = vmul.f32 %v847, %v850
      %v856 = vcombine.low %v852, %v853
      %v858 = vadd.f32 %v842, %v856
      %s859 = scalar_lea.vmem %s2, 160
      %v860 = vld [vmem:[%s859] sm:$0xff]
      %861 = vset.pattern.permute.xlu0 4
      %862 = vperm.xlu0 %861, %v793
      %v863 = vpop.permute.xlu0 %862
      %v866 = vcombine.high %v860, %v860
      %v868 = vmul.f32 %v863, %v860
      %v869 = vmul.f32 %v863, %v866
      %v872 = vcombine.low %v868, %v869
      %v874 = vadd.f32 %v858, %v872
      %s875 = scalar_lea.vmem %s2, 168
      %v876 = vld [vmem:[%s875] sm:$0xff]
      %877 = vset.pattern.permute.xlu0 5
      %878 = vperm.xlu0 %877, %v793
      %v879 = vpop.permute.xlu0 %878
      %v882 = vcombine.high %v876, %v876
      %v884 = vmul.f32 %v879, %v876
      %v885 = vmul.f32 %v879, %v882
      %v888 = vcombine.low %v884, %v885
      %v890 = vadd.f32 %v874, %v888
      %s891 = scalar_lea.vmem %s2, 176
      %v892 = vld [vmem:[%s891] sm:$0xff]
      %893 = vset.pattern.permute.xlu0 6
      %894 = vperm.xlu0 %893, %v793
      %v895 = vpop.permute.xlu0 %894
      %v898 = vcombine.high %v892, %v892
      %v900 = vmul.f32 %v895, %v892
      %v901 = vmul.f32 %v895, %v898
      %v904 = vcombine.low %v900, %v901
      %v906 = vadd.f32 %v890, %v904
      %s907 = scalar_lea.vmem %s2, 184
      %v908 = vld [vmem:[%s907] sm:$0xff]
      %909 = vset.pattern.permute.xlu0 7
      %910 = vperm.xlu0 %909, %v793
      %v911 = vpop.permute.xlu0 %910
      %v914 = vcombine.high %v908, %v908
      %v916 = vmul.f32 %v911, %v908
      %v917 = vmul.f32 %v911, %v914
      %v920 = vcombine.low %v916, %v917
      %v922 = vadd.f32 %v906, %v920
      %s923 = scalar_lea.vmem %s2, 192
      %v924 = vld [vmem:[%s923] sm:$0xff]
      %925 = vset.pattern.permute.xlu0 8
      %926 = vperm.xlu0 %925, %v793
      %v927 = vpop.permute.xlu0 %926
      %v930 = vcombine.high %v924, %v924
      %v932 = vmul.f32 %v927, %v924
      %v933 = vmul.f32 %v927, %v930
      %v936 = vcombine.low %v932, %v933
      %v938 = vadd.f32 %v922, %v936
      %s939 = scalar_lea.vmem %s2, 200
      %v940 = vld [vmem:[%s939] sm:$0xff]
      %941 = vset.pattern.permute.xlu0 9
      %942 = vperm.xlu0 %941, %v793
      %v943 = vpop.permute.xlu0 %942
      %v946 = vcombine.high %v940, %v940
      %v948 = vmul.f32 %v943, %v940
      %v949 = vmul.f32 %v943, %v946
      %v952 = vcombine.low %v948, %v949
      %v954 = vadd.f32 %v938, %v952
      %s955 = scalar_lea.vmem %s2, 208
      %v956 = vld [vmem:[%s955] sm:$0xff]
      %957 = vset.pattern.permute.xlu0 10
      %958 = vperm.xlu0 %957, %v793
      %v959 = vpop.permute.xlu0 %958
      %v962 = vcombine.high %v956, %v956
      %v964 = vmul.f32 %v959, %v956
      %v965 = vmul.f32 %v959, %v962
      %v968 = vcombine.low %v964, %v965
      %v970 = vadd.f32 %v954, %v968
      %s971 = scalar_lea.vmem %s2, 216
      %v972 = vld [vmem:[%s971] sm:$0xff]
      %973 = vset.pattern.permute.xlu0 11
      %974 = vperm.xlu0 %973, %v793
      %v975 = vpop.permute.xlu0 %974
      %v978 = vcombine.high %v972, %v972
      %v980 = vmul.f32 %v975, %v972
      %v981 = vmul.f32 %v975, %v978
      %v984 = vcombine.low %v980, %v981
      %v986 = vadd.f32 %v970, %v984
      %s987 = scalar_lea.vmem %s2, 224
      %v988 = vld [vmem:[%s987] sm:$0xff]
      %989 = vset.pattern.permute.xlu0 12
      %990 = vperm.xlu0 %989, %v793
      %v991 = vpop.permute.xlu0 %990
      %v994 = vcombine.high %v988, %v988
      %v996 = vmul.f32 %v991, %v988
      %v997 = vmul.f32 %v991, %v994
      %v1000 = vcombine.low %v996, %v997
      %v1002 = vadd.f32 %v986, %v1000
      %s1003 = scalar_lea.vmem %s2, 232
      %v1004 = vld [vmem:[%s1003] sm:$0xff]
      %1005 = vset.pattern.permute.xlu0 13
      %1006 = vperm.xlu0 %1005, %v793
      %v1007 = vpop.permute.xlu0 %1006
      %v1010 = vcombine.high %v1004, %v1004
      %v1012 = vmul.f32 %v1007, %v1004
      %v1013 = vmul.f32 %v1007, %v1010
      %v1016 = vcombine.low %v1012, %v1013
      %v1018 = vadd.f32 %v1002, %v1016
      %s1019 = scalar_lea.vmem %s2, 240
      %v1020 = vld [vmem:[%s1019] sm:$0xff]
      %1021 = vset.pattern.permute.xlu0 14
      %1022 = vperm.xlu0 %1021, %v793
      %v1023 = vpop.permute.xlu0 %1022
      %v1026 = vcombine.high %v1020, %v1020
      %v1028 = vmul.f32 %v1023, %v1020
      %v1029 = vmul.f32 %v1023, %v1026
      %v1032 = vcombine.low %v1028, %v1029
      %v1034 = vadd.f32 %v1018, %v1032
      %s1035 = scalar_lea.vmem %s2, 248
      %v1036 = vld [vmem:[%s1035] sm:$0xff]
      %1037 = vset.pattern.permute.xlu0 15
      %1038 = vperm.xlu0 %1037, %v793
      %v1039 = vpop.permute.xlu0 %1038
      %v1042 = vcombine.high %v1036, %v1036
      %v1044 = vmul.f32 %v1039, %v1036
      %v1045 = vmul.f32 %v1039, %v1042
      %v1048 = vcombine.low %v1044, %v1045
      %v1050 = vadd.f32 %v1034, %v1048
      %s1051 = scalar_lea.vmem %s504, 8
      %v1052 = vld [vmem:[%s1051] sm:$0xf]
      %s1053 = scalar_lea.vmem %s504, 24
      %v1054 = vld [vmem:[%s1053] sm:$0xf]
      %v1055 = vmax.f32 %v1052, %v1054
      %s1056 = scalar_lea.vmem %s504, 40
      %v1057 = vld [vmem:[%s1056] sm:$0xf]
      %s1058 = scalar_lea.vmem %s504, 56
      %v1059 = vld [vmem:[%s1058] sm:$0xf]
      %v1060 = vmax.f32 %v1057, %v1059
      %v1061 = vmax.f32 %v1055, %v1060
      %s1062 = scalar_lea.vmem %s2, 256
      %v1063 = vld [vmem:[%s1062] sm:$0xff]
      %1065 = vset.pattern.permute.xlu0 0
      %1066 = vperm.xlu0 %1065, %v1061
      %v1067 = vpop.permute.xlu0 %1066
      %v1070 = vcombine.high %v1063, %v1063
      %v1072 = vmul.f32 %v1067, %v1063
      %v1073 = vmul.f32 %v1067, %v1070
      %v1076 = vcombine.low %v1072, %v1073
      %v1078 = vadd.f32 %v1050, %v1076
      %s1079 = scalar_lea.vmem %s2, 264
      %v1080 = vld [vmem:[%s1079] sm:$0xff]
      %1081 = vset.pattern.permute.xlu0 1
      %1082 = vperm.xlu0 %1081, %v1061
      %v1083 = vpop.permute.xlu0 %1082
      %v1086 = vcombine.high %v1080, %v1080
      %v1088 = vmul.f32 %v1083, %v1080
      %v1089 = vmul.f32 %v1083, %v1086
      %v1092 = vcombine.low %v1088, %v1089
      %v1094 = vadd.f32 %v1078, %v1092
      %s1095 = scalar_lea.vmem %s2, 272
      %v1096 = vld [vmem:[%s1095] sm:$0xff]
      %1097 = vset.pattern.permute.xlu0 2
      %1098 = vperm.xlu0 %1097, %v1061
      %v1099 = vpop.permute.xlu0 %1098
      %v1102 = vcombine.high %v1096, %v1096
      %v1104 = vmul.f32 %v1099, %v1096
      %v1105 = vmul.f32 %v1099, %v1102
      %v1108 = vcombine.low %v1104, %v1105
      %v1110 = vadd.f32 %v1094, %v1108
      %s1111 = scalar_lea.vmem %s2, 280
      %v1112 = vld [vmem:[%s1111] sm:$0xff]
      %1113 = vset.pattern.permute.xlu0 3
      %1114 = vperm.xlu0 %1113, %v1061
      %v1115 = vpop.permute.xlu0 %1114
      %v1118 = vcombine.high %v1112, %v1112
      %v1120 = vmul.f32 %v1115, %v1112
      %v1121 = vmul.f32 %v1115, %v1118
      %v1124 = vcombine.low %v1120, %v1121
      %v1126 = vadd.f32 %v1110, %v1124
      %s1127 = scalar_lea.vmem %s2, 288
      %v1128 = vld [vmem:[%s1127] sm:$0xff]
      %1129 = vset.pattern.permute.xlu0 4
      %1130 = vperm.xlu0 %1129, %v1061
      %v1131 = vpop.permute.xlu0 %1130
      %v1134 = vcombine.high %v1128, %v1128
      %v1136 = vmul.f32 %v1131, %v1128
      %v1137 = vmul.f32 %v1131, %v1134
      %v1140 = vcombine.low %v1136, %v1137
      %v1142 = vadd.f32 %v1126, %v1140
      %s1143 = scalar_lea.vmem %s2, 296
      %v1144 = vld [vmem:[%s1143] sm:$0xff]
      %1145 = vset.pattern.permute.xlu0 5
      %1146 = vperm.xlu0 %1145, %v1061
      %v1147 = vpop.permute.xlu0 %1146
      %v1150 = vcombine.high %v1144, %v1144
      %v1152 = vmul.f32 %v1147, %v1144
      %v1153 = vmul.f32 %v1147, %v1150
      %v1156 = vcombine.low %v1152, %v1153
      %v1158 = vadd.f32 %v1142, %v1156
      %s1159 = scalar_lea.vmem %s2, 304
      %v1160 = vld [vmem:[%s1159] sm:$0xff]
      %1161 = vset.pattern.permute.xlu0 6
      %1162 = vperm.xlu0 %1161, %v1061
      %v1163 = vpop.permute.xlu0 %1162
      %v1166 = vcombine.high %v1160, %v1160
      %v1168 = vmul.f32 %v1163, %v1160
      %v1169 = vmul.f32 %v1163, %v1166
      %v1172 = vcombine.low %v1168, %v1169
      %v1174 = vadd.f32 %v1158, %v1172
      %s1175 = scalar_lea.vmem %s2, 312
      %v1176 = vld [vmem:[%s1175] sm:$0xff]
      %1177 = vset.pattern.permute.xlu0 7
      %1178 = vperm.xlu0 %1177, %v1061
      %v1179 = vpop.permute.xlu0 %1178
      %v1182 = vcombine.high %v1176, %v1176
      %v1184 = vmul.f32 %v1179, %v1176
      %v1185 = vmul.f32 %v1179, %v1182
      %v1188 = vcombine.low %v1184, %v1185
      %v1190 = vadd.f32 %v1174, %v1188
      %s1191 = scalar_lea.vmem %s2, 320
      %v1192 = vld [vmem:[%s1191] sm:$0xff]
      %1193 = vset.pattern.permute.xlu0 8
      %1194 = vperm.xlu0 %1193, %v1061
      %v1195 = vpop.permute.xlu0 %1194
      %v1198 = vcombine.high %v1192, %v1192
      %v1200 = vmul.f32 %v1195, %v1192
      %v1201 = vmul.f32 %v1195, %v1198
      %v1204 = vcombine.low %v1200, %v1201
      %v1206 = vadd.f32 %v1190, %v1204
      %s1207 = scalar_lea.vmem %s2, 328
      %v1208 = vld [vmem:[%s1207] sm:$0xff]
      %1209 = vset.pattern.permute.xlu0 9
      %1210 = vperm.xlu0 %1209, %v1061
      %v1211 = vpop.permute.xlu0 %1210
      %v1214 = vcombine.high %v1208, %v1208
      %v1216 = vmul.f32 %v1211, %v1208
      %v1217 = vmul.f32 %v1211, %v1214
      %v1220 = vcombine.low %v1216, %v1217
      %v1222 = vadd.f32 %v1206, %v1220
      %s1223 = scalar_lea.vmem %s2, 336
      %v1224 = vld [vmem:[%s1223] sm:$0xff]
      %1225 = vset.pattern.permute.xlu0 10
      %1226 = vperm.xlu0 %1225, %v1061
      %v1227 = vpop.permute.xlu0 %1226
      %v1230 = vcombine.high %v1224, %v1224
      %v1232 = vmul.f32 %v1227, %v1224
      %v1233 = vmul.f32 %v1227, %v1230
      %v1236 = vcombine.low %v1232, %v1233
      %v1238 = vadd.f32 %v1222, %v1236
      %s1239 = scalar_lea.vmem %s2, 344
      %v1240 = vld [vmem:[%s1239] sm:$0xff]
      %1241 = vset.pattern.permute.xlu0 11
      %1242 = vperm.xlu0 %1241, %v1061
      %v1243 = vpop.permute.xlu0 %1242
      %v1246 = vcombine.high %v1240, %v1240
      %v1248 = vmul.f32 %v1243, %v1240
      %v1249 = vmul.f32 %v1243, %v1246
      %v1252 = vcombine.low %v1248, %v1249
      %v1254 = vadd.f32 %v1238, %v1252
      %s1255 = scalar_lea.vmem %s2, 352
      %v1256 = vld [vmem:[%s1255] sm:$0xff]
      %1257 = vset.pattern.permute.xlu0 12
      %1258 = vperm.xlu0 %1257, %v1061
      %v1259 = vpop.permute.xlu0 %1258
      %v1262 = vcombine.high %v1256, %v1256
      %v1264 = vmul.f32 %v1259, %v1256
      %v1265 = vmul.f32 %v1259, %v1262
      %v1268 = vcombine.low %v1264, %v1265
      %v1270 = vadd.f32 %v1254, %v1268
      %s1271 = scalar_lea.vmem %s2, 360
      %v1272 = vld [vmem:[%s1271] sm:$0xff]
      %1273 = vset.pattern.permute.xlu0 13
      %1274 = vperm.xlu0 %1273, %v1061
      %v1275 = vpop.permute.xlu0 %1274
      %v1278 = vcombine.high %v1272, %v1272
      %v1280 = vmul.f32 %v1275, %v1272
      %v1281 = vmul.f32 %v1275, %v1278
      %v1284 = vcombine.low %v1280, %v1281
      %v1286 = vadd.f32 %v1270, %v1284
      %s1287 = scalar_lea.vmem %s2, 368
      %v1288 = vld [vmem:[%s1287] sm:$0xff]
      %1289 = vset.pattern.permute.xlu0 14
      %1290 = vperm.xlu0 %1289, %v1061
      %v1291 = vpop.permute.xlu0 %1290
      %v1294 = vcombine.high %v1288, %v1288
      %v1296 = vmul.f32 %v1291, %v1288
      %v1297 = vmul.f32 %v1291, %v1294
      %v1300 = vcombine.low %v1296, %v1297
      %v1302 = vadd.f32 %v1286, %v1300
      %s1303 = scalar_lea.vmem %s2, 376
      %v1304 = vld [vmem:[%s1303] sm:$0xff]
      %1305 = vset.pattern.permute.xlu0 15
      %1306 = vperm.xlu0 %1305, %v1061
      %v1307 = vpop.permute.xlu0 %1306
      %v1310 = vcombine.high %v1304, %v1304
      %v1312 = vmul.f32 %v1307, %v1304
      %v1313 = vmul.f32 %v1307, %v1310
      %v1316 = vcombine.low %v1312, %v1313
      %v1318 = vadd.f32 %v1302, %v1316
      %s1319 = scalar_lea.vmem %s504, 12
      %v1320 = vld [vmem:[%s1319] sm:$0xf]
      %s1321 = scalar_lea.vmem %s504, 28
      %v1322 = vld [vmem:[%s1321] sm:$0xf]
      %v1323 = vmax.f32 %v1320, %v1322
      %s1324 = scalar_lea.vmem %s504, 44
      %v1325 = vld [vmem:[%s1324] sm:$0xf]
      %s1326 = scalar_lea.vmem %s504, 60
      %v1327 = vld [vmem:[%s1326] sm:$0xf]
      %v1328 = vmax.f32 %v1325, %v1327
      %v1329 = vmax.f32 %v1323, %v1328
      %s1330 = scalar_lea.vmem %s2, 384
      %v1331 = vld [vmem:[%s1330] sm:$0xff]
      %1333 = vset.pattern.permute.xlu0 0
      %1334 = vperm.xlu0 %1333, %v1329
      %v1335 = vpop.permute.xlu0 %1334
      %v1338 = vcombine.high %v1331, %v1331
      %v1340 = vmul.f32 %v1335, %v1331
      %v1341 = vmul.f32 %v1335, %v1338
      %v1344 = vcombine.low %v1340, %v1341
      %v1346 = vadd.f32 %v1318, %v1344
      %s1347 = scalar_lea.vmem %s2, 392
      %v1348 = vld [vmem:[%s1347] sm:$0xff]
      %1349 = vset.pattern.permute.xlu0 1
      %1350 = vperm.xlu0 %1349, %v1329
      %v1351 = vpop.permute.xlu0 %1350
      %v1354 = vcombine.high %v1348, %v1348
      %v1356 = vmul.f32 %v1351, %v1348
      %v1357 = vmul.f32 %v1351, %v1354
      %v1360 = vcombine.low %v1356, %v1357
      %v1362 = vadd.f32 %v1346, %v1360
      %s1363 = scalar_lea.vmem %s2, 400
      %v1364 = vld [vmem:[%s1363] sm:$0xff]
      %1365 = vset.pattern.permute.xlu0 2
      %1366 = vperm.xlu0 %1365, %v1329
      %v1367 = vpop.permute.xlu0 %1366
      %v1370 = vcombine.high %v1364, %v1364
      %v1372 = vmul.f32 %v1367, %v1364
      %v1373 = vmul.f32 %v1367, %v1370
      %v1376 = vcombine.low %v1372, %v1373
      %v1378 = vadd.f32 %v1362, %v1376
      %s1379 = scalar_lea.vmem %s2, 408
      %v1380 = vld [vmem:[%s1379] sm:$0xff]
      %1381 = vset.pattern.permute.xlu0 3
      %1382 = vperm.xlu0 %1381, %v1329
      %v1383 = vpop.permute.xlu0 %1382
      %v1386 = vcombine.high %v1380, %v1380
      %v1388 = vmul.f32 %v1383, %v1380
      %v1389 = vmul.f32 %v1383, %v1386
      %v1392 = vcombine.low %v1388, %v1389
      %v1394 = vadd.f32 %v1378, %v1392
      %s1395 = scalar_lea.vmem %s2, 416
      %v1396 = vld [vmem:[%s1395] sm:$0xff]
      %1397 = vset.pattern.permute.xlu0 4
      %1398 = vperm.xlu0 %1397, %v1329
      %v1399 = vpop.permute.xlu0 %1398
      %v1402 = vcombine.high %v1396, %v1396
      %v1404 = vmul.f32 %v1399, %v1396
      %v1405 = vmul.f32 %v1399, %v1402
      %v1408 = vcombine.low %v1404, %v1405
      %v1410 = vadd.f32 %v1394, %v1408
      %s1411 = scalar_lea.vmem %s2, 424
      %v1412 = vld [vmem:[%s1411] sm:$0xff]
      %1413 = vset.pattern.permute.xlu0 5
      %1414 = vperm.xlu0 %1413, %v1329
      %v1415 = vpop.permute.xlu0 %1414
      %v1418 = vcombine.high %v1412, %v1412
      %v1420 = vmul.f32 %v1415, %v1412
      %v1421 = vmul.f32 %v1415, %v1418
      %v1424 = vcombine.low %v1420, %v1421
      %v1426 = vadd.f32 %v1410, %v1424
      %s1427 = scalar_lea.vmem %s2, 432
      %v1428 = vld [vmem:[%s1427] sm:$0xff]
      %1429 = vset.pattern.permute.xlu0 6
      %1430 = vperm.xlu0 %1429, %v1329
      %v1431 = vpop.permute.xlu0 %1430
      %v1434 = vcombine.high %v1428, %v1428
      %v1436 = vmul.f32 %v1431, %v1428
      %v1437 = vmul.f32 %v1431, %v1434
      %v1440 = vcombine.low %v1436, %v1437
      %v1442 = vadd.f32 %v1426, %v1440
      %s1443 = scalar_lea.vmem %s2, 440
      %v1444 = vld [vmem:[%s1443] sm:$0xff]
      %1445 = vset.pattern.permute.xlu0 7
      %1446 = vperm.xlu0 %1445, %v1329
      %v1447 = vpop.permute.xlu0 %1446
      %v1450 = vcombine.high %v1444, %v1444
      %v1452 = vmul.f32 %v1447, %v1444
      %v1453 = vmul.f32 %v1447, %v1450
      %v1456 = vcombine.low %v1452, %v1453
      %v1458 = vadd.f32 %v1442, %v1456
      %s1459 = scalar_lea.vmem %s2, 448
      %v1460 = vld [vmem:[%s1459] sm:$0xff]
      %1461 = vset.pattern.permute.xlu0 8
      %1462 = vperm.xlu0 %1461, %v1329
      %v1463 = vpop.permute.xlu0 %1462
      %v1466 = vcombine.high %v1460, %v1460
      %v1468 = vmul.f32 %v1463, %v1460
      %v1469 = vmul.f32 %v1463, %v1466
      %v1472 = vcombine.low %v1468, %v1469
      %v1474 = vadd.f32 %v1458, %v1472
      %s1475 = scalar_lea.vmem %s2, 456
      %v1476 = vld [vmem:[%s1475] sm:$0xff]
      %1477 = vset.pattern.permute.xlu0 9
      %1478 = vperm.xlu0 %1477, %v1329
      %v1479 = vpop.permute.xlu0 %1478
      %v1482 = vcombine.high %v1476, %v1476
      %v1484 = vmul.f32 %v1479, %v1476
      %v1485 = vmul.f32 %v1479, %v1482
      %v1488 = vcombine.low %v1484, %v1485
      %v1490 = vadd.f32 %v1474, %v1488
      %s1491 = scalar_lea.vmem %s2, 464
      %v1492 = vld [vmem:[%s1491] sm:$0xff]
      %1493 = vset.pattern.permute.xlu0 10
      %1494 = vperm.xlu0 %1493, %v1329
      %v1495 = vpop.permute.xlu0 %1494
      %v1498 = vcombine.high %v1492, %v1492
      %v1500 = vmul.f32 %v1495, %v1492
      %v1501 = vmul.f32 %v1495, %v1498
      %v1504 = vcombine.low %v1500, %v1501
      %v1506 = vadd.f32 %v1490, %v1504
      %s1507 = scalar_lea.vmem %s2, 472
      %v1508 = vld [vmem:[%s1507] sm:$0xff]
      %1509 = vset.pattern.permute.xlu0 11
      %1510 = vperm.xlu0 %1509, %v1329
      %v1511 = vpop.permute.xlu0 %1510
      %v1514 = vcombine.high %v1508, %v1508
      %v1516 = vmul.f32 %v1511, %v1508
      %v1517 = vmul.f32 %v1511, %v1514
      %v1520 = vcombine.low %v1516, %v1517
      %v1522 = vadd.f32 %v1506, %v1520
      %s1523 = scalar_lea.vmem %s2, 480
      %v1524 = vld [vmem:[%s1523] sm:$0xff]
      %1525 = vset.pattern.permute.xlu0 12
      %1526 = vperm.xlu0 %1525, %v1329
      %v1527 = vpop.permute.xlu0 %1526
      %v1530 = vcombine.high %v1524, %v1524
      %v1532 = vmul.f32 %v1527, %v1524
      %v1533 = vmul.f32 %v1527, %v1530
      %v1536 = vcombine.low %v1532, %v1533
      %v1538 = vadd.f32 %v1522, %v1536
      %s1539 = scalar_lea.vmem %s2, 488
      %v1540 = vld [vmem:[%s1539] sm:$0xff]
      %1541 = vset.pattern.permute.xlu0 13
      %1542 = vperm.xlu0 %1541, %v1329
      %v1543 = vpop.permute.xlu0 %1542
      %v1546 = vcombine.high %v1540, %v1540
      %v1548 = vmul.f32 %v1543, %v1540
      %v1549 = vmul.f32 %v1543, %v1546
      %v1552 = vcombine.low %v1548, %v1549
      %v1554 = vadd.f32 %v1538, %v1552
      %s1555 = scalar_lea.vmem %s2, 496
      %v1556 = vld [vmem:[%s1555] sm:$0xff]
      %1557 = vset.pattern.permute.xlu0 14
      %1558 = vperm.xlu0 %1557, %v1329
      %v1559 = vpop.permute.xlu0 %1558
      %v1562 = vcombine.high %v1556, %v1556
      %v1564 = vmul.f32 %v1559, %v1556
      %v1565 = vmul.f32 %v1559, %v1562
      %v1568 = vcombine.low %v1564, %v1565
      %v1570 = vadd.f32 %v1554, %v1568
      %s1571 = scalar_lea.vmem %s2, 504
      %v1572 = vld [vmem:[%s1571] sm:$0xff]
      %1573 = vset.pattern.permute.xlu0 15
      %1574 = vperm.xlu0 %1573, %v1329
      %v1575 = vpop.permute.xlu0 %1574
      %v1578 = vcombine.high %v1572, %v1572
      %v1580 = vmul.f32 %v1575, %v1572
      %v1581 = vmul.f32 %v1575, %v1578
      %v1584 = vcombine.low %v1580, %v1581
      %v1586 = vadd.f32 %v1570, %v1584
      %v1587 = vadd.f32 %v1586, %v515
      %v1588 = vld [vmem:[%s4] sm:$0xf]
      %v1589 = vld [vmem:[%s5] sm:$0xf]
      %1591 = vset.pattern.permute.xlu0 0
      %1592 = vperm.xlu0 %1591, %v1588
      %v1593 = vpop.permute.xlu0 %1592
      %v1596 = vlaneseq
      %v1597 = vshrl.u32 %v1596, 7
      %v1598 = vsub.s32 0, %v1597
      %v1599 = vrot.slane %v1587, %v1598
      %v1600 = vlaneseq
      %v1601 = vshrl.u32 %v1600, 7
      %v1602 = vsub.s32 4, %v1601
      %v1603 = vrot.slane %v1587, %v1602
      %v1606 = vlaneseq
      %v1607 = vshrl.u32 %v1606, 7
      %v1608 = vsub.s32 0, %v1607
      %v1609 = vrot.slane %v1599, %v1608
      %v1610 = vlaneseq
      %v1611 = vshrl.u32 %v1610, 7
      %v1612 = vsub.s32 0, %v1611
      %v1613 = vrot.slane %v1603, %v1612
      %v1614 = vmul.f32 %v1593, %v1609
      %v1615 = vmul.f32 %v1593, %v1613
      %1616 = vset.pattern.permute.xlu0 1
      %1617 = vperm.xlu0 %1616, %v1588
      %v1618 = vpop.permute.xlu0 %1617
      %v1620 = vlaneseq
      %v1621 = vshrl.u32 %v1620, 7
      %v1622 = vsub.s32 1, %v1621
      %v1623 = vrot.slane %v1587, %v1622
      %v1624 = vlaneseq
      %v1625 = vshrl.u32 %v1624, 7
      %v1626 = vsub.s32 5, %v1625
      %v1627 = vrot.slane %v1587, %v1626
      %v1630 = vlaneseq
      %v1631 = vshrl.u32 %v1630, 7
      %v1632 = vsub.s32 1, %v1631
      %v1633 = vrot.slane %v1623, %v1632
      %v1634 = vlaneseq
      %v1635 = vshrl.u32 %v1634, 7
      %v1636 = vsub.s32 1, %v1635
      %v1637 = vrot.slane %v1627, %v1636
      %v1638 = vmul.f32 %v1618, %v1633
      %v1639 = vmul.f32 %v1618, %v1637
      %v1640 = vadd.f32 %v1614, %v1638
      %v1641 = vadd.f32 %v1615, %v1639
      %1642 = vset.pattern.permute.xlu0 2
      %1643 = vperm.xlu0 %1642, %v1588
      %v1644 = vpop.permute.xlu0 %1643
      %v1646 = vlaneseq
      %v1647 = vshrl.u32 %v1646, 7
      %v1648 = vsub.s32 2, %v1647
      %v1649 = vrot.slane %v1587, %v1648
      %v1650 = vlaneseq
      %v1651 = vshrl.u32 %v1650, 7
      %v1652 = vsub.s32 6, %v1651
      %v1653 = vrot.slane %v1587, %v1652
      %v1656 = vlaneseq
      %v1657 = vshrl.u32 %v1656, 7
      %v1658 = vsub.s32 2, %v1657
      %v1659 = vrot.slane %v1649, %v1658
      %v1660 = vlaneseq
      %v1661 = vshrl.u32 %v1660, 7
      %v1662 = vsub.s32 2, %v1661
      %v1663 = vrot.slane %v1653, %v1662
      %v1664 = vmul.f32 %v1644, %v1659
      %v1665 = vmul.f32 %v1644, %v1663
      %v1666 = vadd.f32 %v1640, %v1664
      %v1667 = vadd.f32 %v1641, %v1665
      %1668 = vset.pattern.permute.xlu0 3
      %1669 = vperm.xlu0 %1668, %v1588
      %v1670 = vpop.permute.xlu0 %1669
      %v1672 = vlaneseq
      %v1673 = vshrl.u32 %v1672, 7
      %v1674 = vsub.s32 3, %v1673
      %v1675 = vrot.slane %v1587, %v1674
      %v1676 = vlaneseq
      %v1677 = vshrl.u32 %v1676, 7
      %v1678 = vsub.s32 7, %v1677
      %v1679 = vrot.slane %v1587, %v1678
      %v1682 = vlaneseq
      %v1683 = vshrl.u32 %v1682, 7
      %v1684 = vsub.s32 3, %v1683
      %v1685 = vrot.slane %v1675, %v1684
      %v1686 = vlaneseq
      %v1687 = vshrl.u32 %v1686, 7
      %v1688 = vsub.s32 3, %v1687
      %v1689 = vrot.slane %v1679, %v1688
      %v1690 = vmul.f32 %v1670, %v1685
      %v1691 = vmul.f32 %v1670, %v1689
      %v1692 = vadd.f32 %v1666, %v1690
      %v1693 = vadd.f32 %v1667, %v1691
      %1695 = vset.pattern.permute.xlu0 0
      %1696 = vperm.xlu0 %1695, %v1589
      %v1697 = vpop.permute.xlu0 %1696
      %v1699 = vadd.f32 %v1692, %v1697
      %v1700 = vadd.f32 %v1693, %v1697
      %v1701 = vmax.f32 %v1699, 0.0
      %v1702 = vmax.f32 %v1700, 0.0
      %v1703 = vld [vmem:[%s6] sm:$0xf]
      %v1704 = vld [vmem:[%s7] sm:$0xf]
      %1705 = vrot.lane.b32.xlu0 %v1701, 17
      %v1706 = vpop.permute.xlu0 %1705
      %1707 = vrot.lane.b32.xlu0 %v1702, 17
      %v1708 = vpop.permute.xlu0 %1707
      %v1709 = vlaneseq
      %v1710 = vand.u32 %v1709, 127
      %vm1711 = vcmp.lt.s32.totalorder %v1710, 17
      %v1712 = vsel %vm1711, %v1706, %v1708
      %v1713 = vsel %vm1711, %v1708, %v1706
      %v1714 = vld [vmem:[%s14] sm:$0x3]
      %v1716 = vlaneseq
      %v1717 = vshrl.u32 %v1716, 7
      %v1718 = vsub.s32 0, %v1717
      %v1719 = vrot.slane %v1714, %v1718
      %v1720 = vlaneseq
      %v1721 = vshrl.u32 %v1720, 7
      %v1722 = vsub.s32 1, %v1721
      %v1723 = vrot.slane %v1714, %v1722
      %v1726 = vmul.f32 %v1713, %v1719
      %v1727 = vmul.f32 %v1712, %v1723
      %1729 = vset.pattern.permute.xlu0 0
      %1730 = vperm.xlu0 %1729, %v1703
      %v1731 = vpop.permute.xlu0 %1730
      %v1733 = vmul.f32 %v1731, %v1726
      %v1734 = vmul.f32 %v1731, %v1727
      %1735 = vrot.lane.b32.xlu0 %v1701, 16
      %v1736 = vpop.permute.xlu0 %1735
      %1737 = vrot.lane.b32.xlu0 %v1702, 16
      %v1738 = vpop.permute.xlu0 %1737
      %vm1739 = vcmp.lt.s32.totalorder %v1710, 16
      %v1740 = vsel %vm1739, %v1736, %v1738
      %v1741 = vsel %vm1739, %v1738, %v1736
      %s1742 = scalar_lea.vmem %s14, 2
      %v1743 = vld [vmem:[%s1742] sm:$0x3]
      %v1745 = vlaneseq
      %v1746 = vshrl.u32 %v1745, 7
      %v1747 = vsub.s32 0, %v1746
      %v1748 = vrot.slane %v1743, %v1747
      %v1749 = vlaneseq
      %v1750 = vshrl.u32 %v1749, 7
      %v1751 = vsub.s32 1, %v1750
      %v1752 = vrot.slane %v1743, %v1751
      %v1755 = vmul.f32 %v1741, %v1748
      %v1756 = vmul.f32 %v1740, %v1752
      %1757 = vset.pattern.permute.xlu0 1
      %1758 = vperm.xlu0 %1757, %v1703
      %v1759 = vpop.permute.xlu0 %1758
      %v1761 = vmul.f32 %v1759, %v1755
      %v1762 = vmul.f32 %v1759, %v1756
      %v1763 = vadd.f32 %v1733, %v1761
      %v1764 = vadd.f32 %v1734, %v1762
      %1765 = vrot.lane.b32.xlu0 %v1701, 15
      %v1766 = vpop.permute.xlu0 %1765
      %1767 = vrot.lane.b32.xlu0 %v1702, 15
      %v1768 = vpop.permute.xlu0 %1767
      %vm1769 = vcmp.lt.s32.totalorder %v1710, 15
      %v1770 = vsel %vm1769, %v1766, %v1768
      %v1771 = vsel %vm1769, %v1768, %v1766
      %s1772 = scalar_lea.vmem %s14, 4
      %v1773 = vld [vmem:[%s1772] sm:$0x3]
      %v1775 = vlaneseq
      %v1776 = vshrl.u32 %v1775, 7
      %v1777 = vsub.s32 0, %v1776
      %v1778 = vrot.slane %v1773, %v1777
      %v1779 = vlaneseq
      %v1780 = vshrl.u32 %v1779, 7
      %v1781 = vsub.s32 1, %v1780
      %v1782 = vrot.slane %v1773, %v1781
      %v1785 = vmul.f32 %v1771, %v1778
      %v1786 = vmul.f32 %v1770, %v1782
      %1787 = vset.pattern.permute.xlu0 2
      %1788 = vperm.xlu0 %1787, %v1703
      %v1789 = vpop.permute.xlu0 %1788
      %v1791 = vmul.f32 %v1789, %v1785
      %v1792 = vmul.f32 %v1789, %v1786
      %v1793 = vadd.f32 %v1763, %v1791
      %v1794 = vadd.f32 %v1764, %v1792
      %1795 = vrot.lane.b32.xlu0 %v1701, 1
      %v1796 = vpop.permute.xlu0 %1795
      %1797 = vrot.lane.b32.xlu0 %v1702, 1
      %v1798 = vpop.permute.xlu0 %1797
      %vm1799 = vcmp.lt.s32.totalorder %v1710, 1
      %v1800 = vsel %vm1799, %v1796, %v1798
      %v1801 = vsel %vm1799, %v1798, %v1796
      %s1802 = scalar_lea.vmem %s14, 6
      %v1803 = vld [vmem:[%s1802] sm:$0x3]
      %v1805 = vlaneseq
      %v1806 = vshrl.u32 %v1805, 7
      %v1807 = vsub.s32 0, %v1806
      %v1808 = vrot.slane %v1803, %v1807
      %v1809 = vlaneseq
      %v1810 = vshrl.u32 %v1809, 7
      %v1811 = vsub.s32 1, %v1810
      %v1812 = vrot.slane %v1803, %v1811
      %v1815 = vmul.f32 %v1801, %v1808
      %v1816 = vmul.f32 %v1800, %v1812
      %1817 = vset.pattern.permute.xlu0 3
      %1818 = vperm.xlu0 %1817, %v1703
      %v1819 = vpop.permute.xlu0 %1818
      %v1821 = vmul.f32 %v1819, %v1815
      %v1822 = vmul.f32 %v1819, %v1816
      %v1823 = vadd.f32 %v1793, %v1821
      %v1824 = vadd.f32 %v1794, %v1822
      %s1825 = scalar_lea.vmem %s14, 8
      %v1826 = vld [vmem:[%s1825] sm:$0x3]
      %v1828 = vlaneseq
      %v1829 = vshrl.u32 %v1828, 7
      %v1830 = vsub.s32 0, %v1829
      %v1831 = vrot.slane %v1826, %v1830
      %v1832 = vlaneseq
      %v1833 = vshrl.u32 %v1832, 7
      %v1834 = vsub.s32 1, %v1833
      %v1835 = vrot.slane %v1826, %v1834
      %v1838 = vmul.f32 %v1701, %v1831
      %v1839 = vmul.f32 %v1702, %v1835
      %1840 = vset.pattern.permute.xlu0 4
      %1841 = vperm.xlu0 %1840, %v1703
      %v1842 = vpop.permute.xlu0 %1841
      %v1844 = vmul.f32 %v1842, %v1838
      %v1845 = vmul.f32 %v1842, %v1839
      %v1846 = vadd.f32 %v1823, %v1844
      %v1847 = vadd.f32 %v1824, %v1845
      %1848 = vrot.lane.b32.xlu0 %v1701, 127
      %v1849 = vpop.permute.xlu0 %1848
      %1850 = vrot.lane.b32.xlu0 %v1702, 127
      %v1851 = vpop.permute.xlu0 %1850
      %vm1852 = vcmp.lt.s32.totalorder %v1710, 127
      %v1853 = vsel %vm1852, %v1849, %v1851
      %v1854 = vsel %vm1852, %v1851, %v1849
      %s1855 = scalar_lea.vmem %s14, 10
      %v1856 = vld [vmem:[%s1855] sm:$0x3]
      %v1858 = vlaneseq
      %v1859 = vshrl.u32 %v1858, 7
      %v1860 = vsub.s32 0, %v1859
      %v1861 = vrot.slane %v1856, %v1860
      %v1862 = vlaneseq
      %v1863 = vshrl.u32 %v1862, 7
      %v1864 = vsub.s32 1, %v1863
      %v1865 = vrot.slane %v1856, %v1864
      %v1868 = vmul.f32 %v1853, %v1861
      %v1869 = vmul.f32 %v1854, %v1865
      %1870 = vset.pattern.permute.xlu0 5
      %1871 = vperm.xlu0 %1870, %v1703
      %v1872 = vpop.permute.xlu0 %1871
      %v1874 = vmul.f32 %v1872, %v1868
      %v1875 = vmul.f32 %v1872, %v1869
      %v1876 = vadd.f32 %v1846, %v1874
      %v1877 = vadd.f32 %v1847, %v1875
      %1878 = vrot.lane.b32.xlu0 %v1701, 113
      %v1879 = vpop.permute.xlu0 %1878
      %1880 = vrot.lane.b32.xlu0 %v1702, 113
      %v1881 = vpop.permute.xlu0 %1880
      %vm1882 = vcmp.lt.s32.totalorder %v1710, 113
      %v1883 = vsel %vm1882, %v1879, %v1881
      %v1884 = vsel %vm1882, %v1881, %v1879
      %s1885 = scalar_lea.vmem %s14, 12
      %v1886 = vld [vmem:[%s1885] sm:$0x3]
      %v1888 = vlaneseq
      %v1889 = vshrl.u32 %v1888, 7
      %v1890 = vsub.s32 0, %v1889
      %v1891 = vrot.slane %v1886, %v1890
      %v1892 = vlaneseq
      %v1893 = vshrl.u32 %v1892, 7
      %v1894 = vsub.s32 1, %v1893
      %v1895 = vrot.slane %v1886, %v1894
      %v1898 = vmul.f32 %v1883, %v1891
      %v1899 = vmul.f32 %v1884, %v1895
      %1900 = vset.pattern.permute.xlu0 6
      %1901 = vperm.xlu0 %1900, %v1703
      %v1902 = vpop.permute.xlu0 %1901
      %v1904 = vmul.f32 %v1902, %v1898
      %v1905 = vmul.f32 %v1902, %v1899
      %v1906 = vadd.f32 %v1876, %v1904
      %v1907 = vadd.f32 %v1877, %v1905
      %1908 = vrot.lane.b32.xlu0 %v1701, 112
      %v1909 = vpop.permute.xlu0 %1908
      %1910 = vrot.lane.b32.xlu0 %v1702, 112
      %v1911 = vpop.permute.xlu0 %1910
      %vm1912 = vcmp.lt.s32.totalorder %v1710, 112
      %v1913 = vsel %vm1912, %v1909, %v1911
      %v1914 = vsel %vm1912, %v1911, %v1909
      %s1915 = scalar_lea.vmem %s14, 14
      %v1916 = vld [vmem:[%s1915] sm:$0x3]
      %v1918 = vlaneseq
      %v1919 = vshrl.u32 %v1918, 7
      %v1920 = vsub.s32 0, %v1919
      %v1921 = vrot.slane %v1916, %v1920
      %v1922 = vlaneseq
      %v1923 = vshrl.u32 %v1922, 7
      %v1924 = vsub.s32 1, %v1923
      %v1925 = vrot.slane %v1916, %v1924
      %v1928 = vmul.f32 %v1913, %v1921
      %v1929 = vmul.f32 %v1914, %v1925
      %1930 = vset.pattern.permute.xlu0 7
      %1931 = vperm.xlu0 %1930, %v1703
      %v1932 = vpop.permute.xlu0 %1931
      %v1934 = vmul.f32 %v1932, %v1928
      %v1935 = vmul.f32 %v1932, %v1929
      %v1936 = vadd.f32 %v1906, %v1934
      %v1937 = vadd.f32 %v1907, %v1935
      %1938 = vrot.lane.b32.xlu0 %v1701, 111
      %v1939 = vpop.permute.xlu0 %1938
      %1940 = vrot.lane.b32.xlu0 %v1702, 111
      %v1941 = vpop.permute.xlu0 %1940
      %vm1942 = vcmp.lt.s32.totalorder %v1710, 111
      %v1943 = vsel %vm1942, %v1939, %v1941
      %v1944 = vsel %vm1942, %v1941, %v1939
      %s1945 = scalar_lea.vmem %s14, 16
      %v1946 = vld [vmem:[%s1945] sm:$0x3]
      %v1948 = vlaneseq
      %v1949 = vshrl.u32 %v1948, 7
      %v1950 = vsub.s32 0, %v1949
      %v1951 = vrot.slane %v1946, %v1950
      %v1952 = vlaneseq
      %v1953 = vshrl.u32 %v1952, 7
      %v1954 = vsub.s32 1, %v1953
      %v1955 = vrot.slane %v1946, %v1954
      %v1958 = vmul.f32 %v1943, %v1951
      %v1959 = vmul.f32 %v1944, %v1955
      %1960 = vset.pattern.permute.xlu0 8
      %1961 = vperm.xlu0 %1960, %v1703
      %v1962 = vpop.permute.xlu0 %1961
      %v1964 = vmul.f32 %v1962, %v1958
      %v1965 = vmul.f32 %v1962, %v1959
      %v1966 = vadd.f32 %v1936, %v1964
      %v1967 = vadd.f32 %v1937, %v1965
      %1969 = vset.pattern.permute.xlu0 0
      %1970 = vperm.xlu0 %1969, %v1704
      %v1971 = vpop.permute.xlu0 %1970
      %v1973 = vadd.f32 %v1966, %v1971
      %v1974 = vadd.f32 %v1967, %v1971
      %v1975 = vadd.f32 %v1701, %v1973
      %v1976 = vadd.f32 %v1702, %v1974
      %v1977 = vld [vmem:[%s8] sm:$0xf]
      %v1978 = vld [vmem:[%s9] sm:$0xf]
      %1980 = vset.pattern.permute.xlu0 0
      %1981 = vperm.xlu0 %1980, %v1977
      %v1982 = vpop.permute.xlu0 %1981
      %v1984 = vlaneseq
      %v1985 = vshrl.u32 %v1984, 7
      %v1986 = vsub.s32 0, %v1985
      %v1987 = vrot.slane %v1975, %v1986
      %v1988 = vlaneseq
      %v1989 = vshrl.u32 %v1988, 7
      %v1990 = vsub.s32 0, %v1989
      %v1991 = vrot.slane %v1976, %v1990
      %v1992 = vmul.f32 %v1982, %v1987
      %v1993 = vmul.f32 %v1982, %v1991
      %1994 = vset.pattern.permute.xlu0 1
      %1995 = vperm.xlu0 %1994, %v1977
      %v1996 = vpop.permute.xlu0 %1995
      %v1998 = vlaneseq
      %v1999 = vshrl.u32 %v1998, 7
      %v2000 = vsub.s32 1, %v1999
      %v2001 = vrot.slane %v1975, %v2000
      %v2002 = vlaneseq
      %v2003 = vshrl.u32 %v2002, 7
      %v2004 = vsub.s32 1, %v2003
      %v2005 = vrot.slane %v1976, %v2004
      %v2006 = vmul.f32 %v1996, %v2001
      %v2007 = vmul.f32 %v1996, %v2005
      %v2008 = vadd.f32 %v1992, %v2006
      %v2009 = vadd.f32 %v1993, %v2007
      %2010 = vset.pattern.permute.xlu0 2
      %2011 = vperm.xlu0 %2010, %v1977
      %v2012 = vpop.permute.xlu0 %2011
      %v2014 = vlaneseq
      %v2015 = vshrl.u32 %v2014, 7
      %v2016 = vsub.s32 2, %v2015
      %v2017 = vrot.slane %v1975, %v2016
      %v2018 = vlaneseq
      %v2019 = vshrl.u32 %v2018, 7
      %v2020 = vsub.s32 2, %v2019
      %v2021 = vrot.slane %v1976, %v2020
      %v2022 = vmul.f32 %v2012, %v2017
      %v2023 = vmul.f32 %v2012, %v2021
      %v2024 = vadd.f32 %v2008, %v2022
      %v2025 = vadd.f32 %v2009, %v2023
      %2026 = vset.pattern.permute.xlu0 3
      %2027 = vperm.xlu0 %2026, %v1977
      %v2028 = vpop.permute.xlu0 %2027
      %v2030 = vlaneseq
      %v2031 = vshrl.u32 %v2030, 7
      %v2032 = vsub.s32 3, %v2031
      %v2033 = vrot.slane %v1975, %v2032
      %v2034 = vlaneseq
      %v2035 = vshrl.u32 %v2034, 7
      %v2036 = vsub.s32 3, %v2035
      %v2037 = vrot.slane %v1976, %v2036
      %v2038 = vmul.f32 %v2028, %v2033
      %v2039 = vmul.f32 %v2028, %v2037
      %v2040 = vadd.f32 %v2024, %v2038
      %v2041 = vadd.f32 %v2025, %v2039
      %2043 = vset.pattern.permute.xlu0 0
      %2044 = vperm.xlu0 %2043, %v1978
      %v2045 = vpop.permute.xlu0 %2044
      %v2047 = vadd.f32 %v2040, %v2045
      %v2048 = vadd.f32 %v2041, %v2045
      %v2049 = vmax.f32 %v2047, 0.0
      %v2050 = vmax.f32 %v2048, 0.0
      %v2051 = vld [vmem:[%s10] sm:$0xf]
      %v2052 = vld [vmem:[%s11] sm:$0xf]
      %2053 = vrot.lane.b32.xlu0 %v2049, 17
      %v2054 = vpop.permute.xlu0 %2053
      %2055 = vrot.lane.b32.xlu0 %v2050, 17
      %v2056 = vpop.permute.xlu0 %2055
      %v2057 = vsel %vm1711, %v2054, %v2056
      %v2058 = vsel %vm1711, %v2056, %v2054
      %v2059 = vmul.f32 %v2058, %v1719
      %v2060 = vmul.f32 %v2057, %v1723
      %2062 = vset.pattern.permute.xlu0 0
      %2063 = vperm.xlu0 %2062, %v2051
      %v2064 = vpop.permute.xlu0 %2063
      %v2066 = vmul.f32 %v2064, %v2059
      %v2067 = vmul.f32 %v2064, %v2060
      %2068 = vrot.lane.b32.xlu0 %v2049, 16
      %v2069 = vpop.permute.xlu0 %2068
      %2070 = vrot.lane.b32.xlu0 %v2050, 16
      %v2071 = vpop.permute.xlu0 %2070
      %v2072 = vsel %vm1739, %v2069, %v2071
      %v2073 = vsel %vm1739, %v2071, %v2069
      %v2074 = vmul.f32 %v2073, %v1748
      %v2075 = vmul.f32 %v2072, %v1752
      %2076 = vset.pattern.permute.xlu0 1
      %2077 = vperm.xlu0 %2076, %v2051
      %v2078 = vpop.permute.xlu0 %2077
      %v2080 = vmul.f32 %v2078, %v2074
      %v2081 = vmul.f32 %v2078, %v2075
      %v2082 = vadd.f32 %v2066, %v2080
      %v2083 = vadd.f32 %v2067, %v2081
      %2084 = vrot.lane.b32.xlu0 %v2049, 15
      %v2085 = vpop.permute.xlu0 %2084
      %2086 = vrot.lane.b32.xlu0 %v2050, 15
      %v2087 = vpop.permute.xlu0 %2086
      %v2088 = vsel %vm1769, %v2085, %v2087
      %v2089 = vsel %vm1769, %v2087, %v2085
      %v2090 = vmul.f32 %v2089, %v1778
      %v2091 = vmul.f32 %v2088, %v1782
      %2092 = vset.pattern.permute.xlu0 2
      %2093 = vperm.xlu0 %2092, %v2051
      %v2094 = vpop.permute.xlu0 %2093
      %v2096 = vmul.f32 %v2094, %v2090
      %v2097 = vmul.f32 %v2094, %v2091
      %v2098 = vadd.f32 %v2082, %v2096
      %v2099 = vadd.f32 %v2083, %v2097
      %2100 = vrot.lane.b32.xlu0 %v2049, 1
      %v2101 = vpop.permute.xlu0 %2100
      %2102 = vrot.lane.b32.xlu0 %v2050, 1
      %v2103 = vpop.permute.xlu0 %2102
      %v2104 = vsel %vm1799, %v2101, %v2103
      %v2105 = vsel %vm1799, %v2103, %v2101
      %v2106 = vmul.f32 %v2105, %v1808
      %v2107 = vmul.f32 %v2104, %v1812
      %2108 = vset.pattern.permute.xlu0 3
      %2109 = vperm.xlu0 %2108, %v2051
      %v2110 = vpop.permute.xlu0 %2109
      %v2112 = vmul.f32 %v2110, %v2106
      %v2113 = vmul.f32 %v2110, %v2107
      %v2114 = vadd.f32 %v2098, %v2112
      %v2115 = vadd.f32 %v2099, %v2113
      %v2116 = vmul.f32 %v2049, %v1831
      %v2117 = vmul.f32 %v2050, %v1835
      %2118 = vset.pattern.permute.xlu0 4
      %2119 = vperm.xlu0 %2118, %v2051
      %v2120 = vpop.permute.xlu0 %2119
      %v2122 = vmul.f32 %v2120, %v2116
      %v2123 = vmul.f32 %v2120, %v2117
      %v2124 = vadd.f32 %v2114, %v2122
      %v2125 = vadd.f32 %v2115, %v2123
      %2126 = vrot.lane.b32.xlu0 %v2049, 127
      %v2127 = vpop.permute.xlu0 %2126
      %2128 = vrot.lane.b32.xlu0 %v2050, 127
      %v2129 = vpop.permute.xlu0 %2128
      %v2130 = vsel %vm1852, %v2127, %v2129
      %v2131 = vsel %vm1852, %v2129, %v2127
      %v2132 = vmul.f32 %v2130, %v1861
      %v2133 = vmul.f32 %v2131, %v1865
      %2134 = vset.pattern.permute.xlu0 5
      %2135 = vperm.xlu0 %2134, %v2051
      %v2136 = vpop.permute.xlu0 %2135
      %v2138 = vmul.f32 %v2136, %v2132
      %v2139 = vmul.f32 %v2136, %v2133
      %v2140 = vadd.f32 %v2124, %v2138
      %v2141 = vadd.f32 %v2125, %v2139
      %2142 = vrot.lane.b32.xlu0 %v2049, 113
      %v2143 = vpop.permute.xlu0 %2142
      %2144 = vrot.lane.b32.xlu0 %v2050, 113
      %v2145 = vpop.permute.xlu0 %2144
      %v2146 = vsel %vm1882, %v2143, %v2145
      %v2147 = vsel %vm1882, %v2145, %v2143
      %v2148 = vmul.f32 %v2146, %v1891
      %v2149 = vmul.f32 %v2147, %v1895
      %2150 = vset.pattern.permute.xlu0 6
      %2151 = vperm.xlu0 %2150, %v2051
      %v2152 = vpop.permute.xlu0 %2151
      %v2154 = vmul.f32 %v2152, %v2148
      %v2155 = vmul.f32 %v2152, %v2149
      %v2156 = vadd.f32 %v2140, %v2154
      %v2157 = vadd.f32 %v2141, %v2155
      %2158 = vrot.lane.b32.xlu0 %v2049, 112
      %v2159 = vpop.permute.xlu0 %2158
      %2160 = vrot.lane.b32.xlu0 %v2050, 112
      %v2161 = vpop.permute.xlu0 %2160
      %v2162 = vsel %vm1912, %v2159, %v2161
      %v2163 = vsel %vm1912, %v2161, %v2159
      %v2164 = vmul.f32 %v2162, %v1921
      %v2165 = vmul.f32 %v2163, %v1925
      %2166 = vset.pattern.permute.xlu0 7
      %2167 = vperm.xlu0 %2166, %v2051
      %v2168 = vpop.permute.xlu0 %2167
      %v2170 = vmul.f32 %v2168, %v2164
      %v2171 = vmul.f32 %v2168, %v2165
      %v2172 = vadd.f32 %v2156, %v2170
      %v2173 = vadd.f32 %v2157, %v2171
      %2174 = vrot.lane.b32.xlu0 %v2049, 111
      %v2175 = vpop.permute.xlu0 %2174
      %2176 = vrot.lane.b32.xlu0 %v2050, 111
      %v2177 = vpop.permute.xlu0 %2176
      %v2178 = vsel %vm1942, %v2175, %v2177
      %v2179 = vsel %vm1942, %v2177, %v2175
      %v2180 = vmul.f32 %v2178, %v1951
      %v2181 = vmul.f32 %v2179, %v1955
      %2182 = vset.pattern.permute.xlu0 8
      %2183 = vperm.xlu0 %2182, %v2051
      %v2184 = vpop.permute.xlu0 %2183
      %v2186 = vmul.f32 %v2184, %v2180
      %v2187 = vmul.f32 %v2184, %v2181
      %v2188 = vadd.f32 %v2172, %v2186
      %v2189 = vadd.f32 %v2173, %v2187
      %2191 = vset.pattern.permute.xlu0 0
      %2192 = vperm.xlu0 %2191, %v2052
      %v2193 = vpop.permute.xlu0 %2192
      %v2195 = vadd.f32 %v2188, %v2193
      %v2196 = vadd.f32 %v2189, %v2193
      %v2197 = vadd.f32 %v2049, %v2195
      %v2198 = vadd.f32 %v2050, %v2196
      %v2199 = vld [vmem:[%s12] sm:$0xf]
      %v2200 = vld [vmem:[%s13] sm:$0xf]
      %2202 = vset.pattern.permute.xlu0 0
      %2203 = vperm.xlu0 %2202, %v2199
      %v2204 = vpop.permute.xlu0 %2203
      %v2206 = vlaneseq
      %v2207 = vshrl.u32 %v2206, 7
      %v2208 = vsub.s32 0, %v2207
      %v2209 = vrot.slane %v2197, %v2208
      %v2210 = vlaneseq
      %v2211 = vshrl.u32 %v2210, 7
      %v2212 = vsub.s32 0, %v2211
      %v2213 = vrot.slane %v2198, %v2212
      %v2214 = vmul.f32 %v2204, %v2209
      %v2215 = vmul.f32 %v2204, %v2213
      %2216 = vset.pattern.permute.xlu0 1
      %2217 = vperm.xlu0 %2216, %v2199
      %v2218 = vpop.permute.xlu0 %2217
      %v2220 = vlaneseq
      %v2221 = vshrl.u32 %v2220, 7
      %v2222 = vsub.s32 1, %v2221
      %v2223 = vrot.slane %v2197, %v2222
      %v2224 = vlaneseq
      %v2225 = vshrl.u32 %v2224, 7
      %v2226 = vsub.s32 1, %v2225
      %v2227 = vrot.slane %v2198, %v2226
      %v2228 = vmul.f32 %v2218, %v2223
      %v2229 = vmul.f32 %v2218, %v2227
      %v2230 = vadd.f32 %v2214, %v2228
      %v2231 = vadd.f32 %v2215, %v2229
      %2232 = vset.pattern.permute.xlu0 2
      %2233 = vperm.xlu0 %2232, %v2199
      %v2234 = vpop.permute.xlu0 %2233
      %v2236 = vlaneseq
      %v2237 = vshrl.u32 %v2236, 7
      %v2238 = vsub.s32 2, %v2237
      %v2239 = vrot.slane %v2197, %v2238
      %v2240 = vlaneseq
      %v2241 = vshrl.u32 %v2240, 7
      %v2242 = vsub.s32 2, %v2241
      %v2243 = vrot.slane %v2198, %v2242
      %v2244 = vmul.f32 %v2234, %v2239
      %v2245 = vmul.f32 %v2234, %v2243
      %v2246 = vadd.f32 %v2230, %v2244
      %v2247 = vadd.f32 %v2231, %v2245
      %2248 = vset.pattern.permute.xlu0 3
      %2249 = vperm.xlu0 %2248, %v2199
      %v2250 = vpop.permute.xlu0 %2249
      %v2252 = vlaneseq
      %v2253 = vshrl.u32 %v2252, 7
      %v2254 = vsub.s32 3, %v2253
      %v2255 = vrot.slane %v2197, %v2254
      %v2256 = vlaneseq
      %v2257 = vshrl.u32 %v2256, 7
      %v2258 = vsub.s32 3, %v2257
      %v2259 = vrot.slane %v2198, %v2258
      %v2260 = vmul.f32 %v2250, %v2255
      %v2261 = vmul.f32 %v2250, %v2259
      %v2262 = vadd.f32 %v2246, %v2260
      %v2263 = vadd.f32 %v2247, %v2261
      %2265 = vset.pattern.permute.xlu0 0
      %2266 = vperm.xlu0 %2265, %v2200
      %v2267 = vpop.permute.xlu0 %2266
      %v2269 = vadd.f32 %v2262, %v2267
      %v2270 = vadd.f32 %v2263, %v2267
      %v2271 = vadd.f32 %v1701, %v2269
      %v2272 = vadd.f32 %v1702, %v2270
      %v2274 = vcombine.high %v515, %v515
      %v2276 = vadd.f32 %v2271, %v515
      %v2277 = vadd.f32 %v2272, %v2274
      %v2280 = vcombine.low %v2276, %v2277
      %2282 = vst [vmem:[%s514] sm:$0xff] %v2280
      %p2283 = scmp.lt.s32.totalorder %s26, 1
      %s2284 = scalar_select %p2283, %s26, 1
      %s2285 = smul.addr %s2284, 2
      %s2286 = smul.addr %s2285, 4
      %s2287 = scalar_lea.vmem %s15, %s2286
      // Predicated region
      $region81: #{pixel_unshuffled_block_forward.1} parent=79 // pred_check
        %p2288 = pneg %p369
      $region82: #{pixel_unshuffled_block_forward.1} parent=79 // pred_check_branch
        %2290 = sbr.rel (%p2288) target = $region84
      $region83: #{pixel_unshuffled_block_forward.1} parent=79 // pred_region
        _
      $region84: #{pixel_unshuffled_block_forward.1} parent=79 // pred_fallthru
        _
    $region80: #{pixel_unshuffled_block_forward.1} parent=5 // pred_fallthru
      _
    %p2291 = scmp.le.s32.totalorder 2, %s21
    // Predicated region
    $region85: #{pixel_unshuffled_block_forward.1} parent=5 // pred_check
      %p2292 = pneg %p2291
    $region86: #{pixel_unshuffled_block_forward.1} parent=5 // pred_check_branch
      %2294 = sbr.rel (%p2292) target = $region88
    $region87: #{pixel_unshuffled_block_forward.1} parent=5 // pred_region
      %s2295 = ssub.s32 %s21, 2
      // Predicated region
      $region89: #{pixel_unshuffled_block_forward.1} parent=87 // pred_check
        %p2296 = pneg %p375
      $region90: #{pixel_unshuffled_block_forward.1} parent=87 // pred_check_branch
        %2298 = sbr.rel (%p2296) target = $region92
      $region91: #{pixel_unshuffled_block_forward.1} parent=87 // pred_region
        %p2299 = scmp.lt.s32.totalorder %s27, 1
        %s2300 = scalar_select %p2299, %s27, 1
        %s2301 = smul.addr %s2300, 2
        %s2302 = smul.addr %s2301, 4
        %s2303 = scalar_lea.vmem %s15, %s2302
      $region92: #{pixel_unshuffled_block_forward.1} parent=87 // pred_fallthru
        _
    $region88: #{pixel_unshuffled_block_forward.1} parent=5 // pred_fallthru
      _
  $region6: #{pixel_unshuffled_block_forward.1} parent=0 // loop_footer
    %s25 = sadd.s32 1, %s21
  $region7: #{pixel_unshuffled_block_forward.1} parent=0 // loop_footer_branch
    %20 = sbr.rel target = $region3
  $region8: #{pixel_unshuffled_block_forward.1} parent=0 // loop_exit
    _

</llo_original>
